<compile_context>
chip_gen: v7x
topology: tpu7x:2x2x1
jax: 0.10.0
libtpu: 0.0.40
codegen_flags: <defaults>
</compile_context>

<pallas_src>
import math
import functools

import numpy as np
import jax
import jax.numpy as jnp
from jax.experimental import pallas as pl
from jax.experimental.pallas import tpu as pltpu

BN_EPS = 1e-5
HIDDEN = 64                      # hidden_dim
NUM_FILTERS = 32
NUM_HEADS = 2
HEAD_DIM = HIDDEN // NUM_HEADS
REGION_CH = 16
COMBINED = NUM_FILTERS * 3 + REGION_CH * 2     # 128
MAX_SHIFT = 3                    # largest conv half-width (k=7 -> +/-3, k=6 -> -2..+3)
NUM_SHIFTS = 2 * MAX_SHIFT + 1   # 7
CHUNK = 128                      # lane chunk: attention block / MXU tile width
LANE_TARGET = 256                # lanes per grid step (2 x 128-lane MXU tiles)
NEG_INF = -1e30
MXU_DTYPE = jnp.bfloat16         # matmul operand dtype (accumulation stays f32)


def promoter_kernel(x_ref,
                    w_init_ref, b_init_ref, pe_ref,
                    wqkv_ref, bqkv_ref, wout_ref, bout_ref, attn_bias_ref,
                    w_ms_ref, b_ms_ref, shift_mask_ref,
                    m_first_ref, m_last_ref, scan_bias_ref,
                    seg_ref, sel_ref,
                    wa1_ref, ba1_ref, wa2_ref, ba2_ref,
                    wc1_ref, bc1_ref, wc2_ref, bc2_ref, wc3_ref, bc3_ref,
                    out_ref,
                    init_stack_ref, ms_stack_ref, comb_ref,
                    *, inv_len):
    f32 = jnp.float32
    x = x_ref[0]                                     # (Cin, N) channel-major
    cin, n_lanes = x.shape
    n_chunks = n_lanes // CHUNK

    def mm(a, b):                                    # a @ b on the MXU, f32 accumulate
        return jnp.dot(a.astype(MXU_DTYPE), b.astype(MXU_DTYPE),
                       preferred_element_type=f32)

    def mm_rt(a, b):                                 # a @ b.T (rhs transposed on the MXU)
        return jax.lax.dot_general(a.astype(MXU_DTYPE), b.astype(MXU_DTYPE),
                                   (((1,), (1,)), ((), ())),
                                   preferred_element_type=f32)

    def shifted(a, s):
        """a shifted by s lanes; zeroed where lane+s leaves the sample (host mask)."""
        rolled = a if s == 0 else pltpu.roll(a, (-s) % n_lanes, 1)
        return rolled * shift_mask_ref[s + MAX_SHIFT]          # (1, N) mask broadcast

    # ---- initial_conv: Conv1d(Cin,64,k=3,pad=1)+BN(folded)+ReLU as ONE K=3*Cin dot ----
    for k in range(3):
        init_stack_ref[k * cin:(k + 1) * cin, :] = shifted(x, k - 1).astype(MXU_DTYPE)
    h0 = jnp.maximum(mm(w_init_ref[...], init_stack_ref[...]) + b_init_ref[...], 0.0)

    # ---- positional encoding + 2-head self-attention, chunked per 128 lanes ----
    xa = h0 + pe_ref[...]                            # (64, N) channel-major
    qkv = mm(wqkv_ref[...], xa) + bqkv_ref[...]      # (192, N)
    inv_scale = 1.0 / math.sqrt(HEAD_DIM)
    bias = attn_bias_ref[...]                        # (128, 128), identical every chunk
    y_chunks = []
    for c in range(n_chunks):
        lo = c * CHUNK
        heads = []
        for h in range(NUM_HEADS):
            q = qkv[h * HEAD_DIM:(h + 1) * HEAD_DIM, lo:lo + CHUNK]
            k = qkv[HIDDEN + h * HEAD_DIM:HIDDEN + (h + 1) * HEAD_DIM, lo:lo + CHUNK]
            v = qkv[2 * HIDDEN + h * HEAD_DIM:2 * HIDDEN + (h + 1) * HEAD_DIM,
                    lo:lo + CHUNK]
            sc = mm(q.T, k) * inv_scale + bias       # (128,128) block-diag per sample
            sc = sc - jnp.max(sc, axis=-1, keepdims=True)
            p = jnp.exp(sc)
            p = p * pl.reciprocal(jnp.sum(p, axis=-1, keepdims=True), approx=True)
            heads.append(mm_rt(v, p))                # (32, 128) channel-major
        y_chunks.append(mm(wout_ref[...], jnp.concatenate(heads, axis=0)))
    xc = jnp.concatenate(y_chunks, axis=1) + bout_ref[...]      # (64, N)

    # ---- multi-scale (k=3,5,7) + region (k=6) convs as ONE K=448 matmul ----
    for idx in range(NUM_SHIFTS):
        ms_stack_ref[idx * HIDDEN:(idx + 1) * HIDDEN, :] = (
            shifted(xc, idx - MAX_SHIFT).astype(MXU_DTYPE))
    conv_all = jnp.maximum(mm(w_ms_ref[...], ms_stack_ref[...]) + b_ms_ref[...], 0.0)

    # AdaptiveMaxPool1d(L) over the (L-1)-long region-detector outputs:
    # pooled[i] = max(y[max(i-1,0)], y[min(i,L-2)]); selectors precomputed on host.
    r = conv_all[NUM_FILTERS * 3:COMBINED, :]        # (32, N)
    r_prev = pltpu.roll(r, 1, 1)                     # r_prev[:, j] = r[:, j-1]
    m_first = m_first_ref[...]
    m_last = m_last_ref[...]
    left = r_prev + (r - r_prev) * m_first
    right = r + (r_prev - r) * m_last
    comb_ref[0:NUM_FILTERS * 3, :] = conv_all[0:NUM_FILTERS * 3, :]
    comb_ref[NUM_FILTERS * 3:COMBINED, :] = jnp.maximum(left, right)

    # ---- SimpleFeatureAggregationModule: per-sample segmented reductions ----
    seg = seg_ref[...]                               # (N, bt) sample-membership one-hot
    sum_feat = jnp.dot(comb_ref[...], seg, preferred_element_type=f32)   # (128, bt)
    avg_feat = sum_feat * inv_len

    a1 = jnp.maximum(mm(wa1_ref[...], comb_ref[...]) + ba1_ref[...], 0.0)   # (64, N)
    attn_w = jax.nn.sigmoid(mm(wa2_ref[...], a1) + ba2_ref[...])            # (1, N)
    attn_feat = jnp.dot(comb_ref[...] * attn_w, seg, preferred_element_type=f32)

    # segmented max: log2(L) masked roll-doubling rounds, then select lane pos==0.
    v_max = comb_ref[...]
    for kstep in range(scan_bias_ref.shape[0]):
        step = 1 << kstep
        v_max = jnp.maximum(
            v_max, pltpu.roll(v_max, (-step) % n_lanes, 1) + scan_bias_ref[kstep])
    max_feat = jnp.dot(v_max, sel_ref[...], preferred_element_type=f32)     # (128, bt)

    # ---- classifier: Linear+BN+ReLU, Linear+BN+ReLU, Linear+Sigmoid (eval) ----
    feats = jnp.concatenate([max_feat, avg_feat, attn_feat], axis=0)        # (384, bt)
    h1 = jnp.maximum(jnp.dot(wc1_ref[...], feats, preferred_element_type=f32)
                     + bc1_ref[...], 0.0)
    h2 = jnp.maximum(jnp.dot(wc2_ref[...], h1, preferred_element_type=f32)
                     + bc2_ref[...], 0.0)
    logit = jnp.dot(wc3_ref[...], h2, preferred_element_type=f32) + bc3_ref[...]
    out_ref[0] = jax.nn.sigmoid(logit)               # lane-dense (1, bt) store


def _lane_layout(seq_len, n_chunks, spc):
    """Per-step lane -> (sample id, position) map; -1 marks dead padding lanes."""
    n_lanes = n_chunks * CHUNK
    samp = np.full(n_lanes, -1, dtype=np.int64)
    pos = np.full(n_lanes, -1, dtype=np.int64)
    for c in range(n_chunks):
        for i in range(spc):
            base = c * CHUNK + i * seq_len
            samp[base:base + seq_len] = c * spc + i
            pos[base:base + seq_len] = np.arange(seq_len)
    return samp, pos


def _build_masks(samp, pos, seq_len, bt):
    """All grid-invariant masks / one-hots, built once on the host."""
    n_lanes = samp.shape[0]
    valid = samp >= 0
    shift_mask = np.zeros((NUM_SHIFTS, 1, n_lanes), np.float32)
    for idx in range(NUM_SHIFTS):
        s = idx - MAX_SHIFT
        shift_mask[idx, 0] = (valid & (pos + s >= 0) & (pos + s < seq_len)
                              ).astype(np.float32)
    s0 = samp[:CHUNK]                                 # every chunk has identical layout
    attn_bias = np.where((s0[:, None] == s0[None, :]) & (s0[:, None] >= 0),
                         0.0, NEG_INF).astype(np.float32)
    m_first = (pos == 0).astype(np.float32)[None, :]
    m_last = (pos == seq_len - 1).astype(np.float32)[None, :]
    steps = []
    st = 1
    while st < seq_len:
        steps.append(st)
        st *= 2
    scan_bias = np.zeros((len(steps), 1, n_lanes), np.float32)
    for k, st in enumerate(steps):
        scan_bias[k, 0] = np.where(valid & (pos + st < seq_len), 0.0, NEG_INF)
    cols = np.arange(bt)[None, :]
    seg = (samp[:, None] == cols).astype(np.float32)
    sel = ((samp[:, None] == cols) & (pos[:, None] == 0)).astype(np.float32)
    return dict(shift_mask=shift_mask, attn_bias=attn_bias, m_first=m_first,
                m_last=m_last, scan_bias=scan_bias, seg=seg, sel=sel)


def init_params(key, input_channels, seq_len):
    """Deterministic kaiming-style init mirroring _initialize_weights (eval BN folded)."""
    bn = 1.0 / math.sqrt(1.0 + BN_EPS)
    ks = iter(jax.random.split(key, 16))

    def kconv(k, cout, cin, ksz):
        std = math.sqrt(2.0 / (cout * ksz))                # fan_out for Conv1d
        return jax.random.normal(k, (cout, cin, ksz), jnp.float32) * std

    def klin(k, cout, cin):
        std = math.sqrt(2.0 / cout)                        # fan_out for Linear
        return jax.random.normal(k, (cout, cin), jnp.float32) * std

    p = {}
    # initial conv (+BN folded), stacked taps: (64, 3*Cin); tap k <-> shift k-1.
    wi = kconv(next(ks), HIDDEN, input_channels, 3) * bn
    p['w_init'] = jnp.concatenate([wi[:, :, k] for k in range(3)], axis=1)
    p['b_init'] = jnp.zeros((HIDDEN, 1), jnp.float32)
    # positional encoding buffer (token-major, length = seq_len).
    pos = jnp.arange(seq_len, dtype=jnp.float32)[:, None]
    div = jnp.exp(jnp.arange(0, HIDDEN, 2, dtype=jnp.float32)
                  * (-math.log(10000.0) / HIDDEN))
    pe = jnp.zeros((seq_len, HIDDEN), jnp.float32)
    pe = pe.at[:, 0::2].set(jnp.sin(pos * div)).at[:, 1::2].set(jnp.cos(pos * div))
    p['pe'] = pe
    # self-attention (channel-major application: y = W @ x_cm + b).
    p['wqkv'] = klin(next(ks), 3 * HIDDEN, HIDDEN)         # (192, 64)
    p['bqkv'] = jnp.zeros((3 * HIDDEN, 1), jnp.float32)
    p['wout'] = klin(next(ks), HIDDEN, HIDDEN)             # (64, 64)
    p['bout'] = jnp.zeros((HIDDEN, 1), jnp.float32)
    # stacked multi-scale + region-detector conv weights (+BN folded): (128, 7*64).
    w_ms = jnp.zeros((COMBINED, NUM_SHIFTS * HIDDEN), jnp.float32)
    specs = [(NUM_FILTERS, 3, 1, 0), (NUM_FILTERS, 5, 2, 32), (NUM_FILTERS, 7, 3, 64),
             (REGION_CH, 6, 2, 96), (REGION_CH, 6, 2, 112)]
    for cout, ksz, pad, r0 in specs:
        w = kconv(next(ks), cout, HIDDEN, ksz) * bn        # (cout, 64, ksz)
        for k in range(ksz):
            idx = k - pad + MAX_SHIFT
            w_ms = w_ms.at[r0:r0 + cout, idx * HIDDEN:(idx + 1) * HIDDEN].set(w[:, :, k])
    p['w_ms'] = w_ms
    p['b_ms'] = jnp.zeros((COMBINED, 1), jnp.float32)
    # feature-aggregation attention pool (1x1 convs, first one +BN folded)
    p['wa1'] = kconv(next(ks), COMBINED // 2, COMBINED, 1)[:, :, 0] * bn
    p['ba1'] = jnp.zeros((COMBINED // 2, 1), jnp.float32)
    p['wa2'] = kconv(next(ks), 1, COMBINED // 2, 1)[:, :, 0]
    p['ba2'] = jnp.zeros((1, 1), jnp.float32)
    # classifier (+BN folded on first two linears)
    p['wc1'] = klin(next(ks), 64, COMBINED * 3) * bn
    p['bc1'] = jnp.zeros((64, 1), jnp.float32)
    p['wc2'] = klin(next(ks), 32, 64) * bn
    p['bc2'] = jnp.zeros((32, 1), jnp.float32)
    p['wc3'] = klin(next(ks), 1, 32)
    p['bc3'] = jnp.zeros((1, 1), jnp.float32)
    return p


@jax.jit
def promoter_forward(x, params):
    """x: (B, seq_len, input_channels), same layout as the PyTorch module input."""
    B, L, Cin = x.shape
    if not 2 <= L <= CHUNK:
        raise ValueError("seq_len must be in [2, 128]")
    if params['pe'].shape[0] != L:
        raise ValueError("positional-encoding length does not match input seq_len")

    spc = CHUNK // L                                  # samples per 128-lane chunk
    # Aim for LANE_TARGET lanes per step but keep the grid >= 2 steps when the
    # batch allows it (v7x has two TensorCores fed by the parallel grid axis).
    n_chunks = max(1, min(LANE_TARGET // CHUNK, -(-B // (2 * spc))))
    bt = n_chunks * spc                               # samples per grid step
    N = n_chunks * CHUNK                              # lanes per grid step (mult of 128)
    G = -(-B // bt)
    Bp = G * bt

    samp, pos = _lane_layout(L, n_chunks, spc)
    masks = _build_masks(samp, pos, L, bt)
    lane_valid = jnp.asarray((samp >= 0).astype(np.float32))

    xf = x.astype(jnp.float32)
    if Bp != B:                                       # pad batch; padding never leaks
        xf = jnp.concatenate([xf, jnp.zeros((Bp - B, L, Cin), jnp.float32)], axis=0)
    # (Bp, L, Cin) -> (G, Cin, bt*L): channel-major lane packing.
    xg = xf.reshape(G, bt, L, Cin).transpose(0, 3, 1, 2).reshape(G, Cin, bt * L)
    if N == bt * L:
        x_packed = xg
    else:                                             # scatter into 128-aligned chunks
        src = np.where(samp >= 0, samp * L + np.maximum(pos, 0), 0).astype(np.int32)
        x_packed = xg[:, :, src] * lane_valid[None, None, :]

    pe_src = np.maximum(pos, 0).astype(np.int32)
    pe_packed = params['pe'].T[:, pe_src] * lane_valid[None, :]       # (64, N)

    bf = MXU_DTYPE
    args = [
        params['w_init'].astype(bf), params['b_init'], pe_packed,
        params['wqkv'].astype(bf), params['bqkv'],
        params['wout'].astype(bf), params['bout'], jnp.asarray(masks['attn_bias']),
        params['w_ms'].astype(bf), params['b_ms'], jnp.asarray(masks['shift_mask']),
        jnp.asarray(masks['m_first']), jnp.asarray(masks['m_last']),
        jnp.asarray(masks['scan_bias']),
        jnp.asarray(masks['seg']), jnp.asarray(masks['sel']),
        params['wa1'].astype(bf), params['ba1'], params['wa2'].astype(bf), params['ba2'],
        params['wc1'], params['bc1'], params['wc2'], params['bc2'],
        params['wc3'], params['bc3'],
    ]

    def full_spec(a):
        nd = a.ndim
        return pl.BlockSpec(a.shape, lambda g, _nd=nd: (0,) * _nd)

    in_specs = [pl.BlockSpec((1, Cin, N), lambda g: (g, 0, 0))]
    in_specs += [full_spec(a) for a in args]

    out = pl.pallas_call(
        functools.partial(promoter_kernel, inv_len=1.0 / L),
        out_shape=jax.ShapeDtypeStruct((G, 1, bt), jnp.float32),
        grid_spec=pltpu.PrefetchScalarGridSpec(
            num_scalar_prefetch=0,
            grid=(G,),
            in_specs=in_specs,
            out_specs=pl.BlockSpec((1, 1, bt), lambda g: (g, 0, 0)),
            scratch_shapes=[
                pltpu.VMEM((3 * Cin, N), MXU_DTYPE),             # stacked init-conv input
                pltpu.VMEM((NUM_SHIFTS * HIDDEN, N), MXU_DTYPE),  # stacked K=448 input
                pltpu.VMEM((COMBINED, N), jnp.float32),           # combined feature map
            ]),
        compiler_params=pltpu.CompilerParams(
            dimension_semantics=("parallel",)),
    )(x_packed, *args)

    return out.reshape(Bp, 1)[:B]


if __name__ == "__main__":
    key = jax.random.PRNGKey(0)
    k_x, k_p = jax.random.split(key)
    # Small shapes consistent with the module: batch=2, seq_len=16, input_channels=32.
    B, L, CIN = 2, 16, 32
    x = jax.random.normal(k_x, (B, L, CIN), jnp.float32)
    params = init_params(k_p, CIN, L)
    out = jax.block_until_ready(promoter_forward(x, params))
    assert out.shape == (B, 1)
    assert bool(jnp.all(jnp.isfinite(out)))
    assert bool(jnp.all((out >= 0.0) & (out <= 1.0)))   # sigmoid output
    print("KERNEL_OK")
</pallas_src>

<mosaic_0001>
module attributes {stable_mosaic.version = 11 : i64} {
  func.func @promoter_kernel(%arg0: i32, %arg1: memref<1x32x128xf32, #tpu.memory_space<vmem>>, %arg2: memref<64x96xbf16, #tpu.memory_space<vmem>>, %arg3: memref<64x1xf32, #tpu.memory_space<vmem>>, %arg4: memref<64x128xf32, #tpu.memory_space<vmem>>, %arg5: memref<192x64xbf16, #tpu.memory_space<vmem>>, %arg6: memref<192x1xf32, #tpu.memory_space<vmem>>, %arg7: memref<64x64xbf16, #tpu.memory_space<vmem>>, %arg8: memref<64x1xf32, #tpu.memory_space<vmem>>, %arg9: memref<128x128xf32, #tpu.memory_space<vmem>>, %arg10: memref<128x448xbf16, #tpu.memory_space<vmem>>, %arg11: memref<128x1xf32, #tpu.memory_space<vmem>>, %arg12: memref<7x1x128xf32, #tpu.memory_space<vmem>>, %arg13: memref<1x128xf32, #tpu.memory_space<vmem>>, %arg14: memref<1x128xf32, #tpu.memory_space<vmem>>, %arg15: memref<4x1x128xf32, #tpu.memory_space<vmem>>, %arg16: memref<128x8xf32, #tpu.memory_space<vmem>>, %arg17: memref<128x8xf32, #tpu.memory_space<vmem>>, %arg18: memref<64x128xbf16, #tpu.memory_space<vmem>>, %arg19: memref<64x1xf32, #tpu.memory_space<vmem>>, %arg20: memref<1x64xbf16, #tpu.memory_space<vmem>>, %arg21: memref<1x1xf32, #tpu.memory_space<vmem>>, %arg22: memref<64x384xf32, #tpu.memory_space<vmem>>, %arg23: memref<64x1xf32, #tpu.memory_space<vmem>>, %arg24: memref<32x64xf32, #tpu.memory_space<vmem>>, %arg25: memref<32x1xf32, #tpu.memory_space<vmem>>, %arg26: memref<1x32xf32, #tpu.memory_space<vmem>>, %arg27: memref<1x1xf32, #tpu.memory_space<vmem>>, %arg28: memref<1x1x8xf32, #tpu.memory_space<vmem>>, %arg29: memref<96x128xbf16, #tpu.memory_space<vmem>>, %arg30: memref<448x128xbf16, #tpu.memory_space<vmem>>, %arg31: memref<128x128xf32, #tpu.memory_space<vmem>>) attributes {dimension_semantics = [#tpu.dimension_semantics<parallel>], iteration_bounds = array<i64: 1>, scalar_prefetch = 0 : i64, scratch_operands = 3 : i64, tpu.core_type = #tpu.core_type<tc>, window_params = [{transform_indices = @transform_0, window_bounds = array<i64: 1, 32, 128>}, {pipeline_mode = #tpu.pipeline_mode<synchronous>, transform_indices = @transform_1, window_bounds = array<i64: 64, 96>}, {pipeline_mode = #tpu.pipeline_mode<synchronous>, transform_indices = @transform_2, window_bounds = array<i64: 64, 1>}, {pipeline_mode = #tpu.pipeline_mode<synchronous>, transform_indices = @transform_3, window_bounds = array<i64: 64, 128>}, {pipeline_mode = #tpu.pipeline_mode<synchronous>, transform_indices = @transform_4, window_bounds = array<i64: 192, 64>}, {pipeline_mode = #tpu.pipeline_mode<synchronous>, transform_indices = @transform_5, window_bounds = array<i64: 192, 1>}, {pipeline_mode = #tpu.pipeline_mode<synchronous>, transform_indices = @transform_6, window_bounds = array<i64: 64, 64>}, {pipeline_mode = #tpu.pipeline_mode<synchronous>, transform_indices = @transform_7, window_bounds = array<i64: 64, 1>}, {pipeline_mode = #tpu.pipeline_mode<synchronous>, transform_indices = @transform_8, window_bounds = array<i64: 128, 128>}, {pipeline_mode = #tpu.pipeline_mode<synchronous>, transform_indices = @transform_9, window_bounds = array<i64: 128, 448>}, {pipeline_mode = #tpu.pipeline_mode<synchronous>, transform_indices = @transform_10, window_bounds = array<i64: 128, 1>}, {pipeline_mode = #tpu.pipeline_mode<synchronous>, transform_indices = @transform_11, window_bounds = array<i64: 7, 1, 128>}, {pipeline_mode = #tpu.pipeline_mode<synchronous>, transform_indices = @transform_12, window_bounds = array<i64: 1, 128>}, {pipeline_mode = #tpu.pipeline_mode<synchronous>, transform_indices = @transform_13, window_bounds = array<i64: 1, 128>}, {pipeline_mode = #tpu.pipeline_mode<synchronous>, transform_indices = @transform_14, window_bounds = array<i64: 4, 1, 128>}, {pipeline_mode = #tpu.pipeline_mode<synchronous>, transform_indices = @transform_15, window_bounds = array<i64: 128, 8>}, {pipeline_mode = #tpu.pipeline_mode<synchronous>, transform_indices = @transform_16, window_bounds = array<i64: 128, 8>}, {pipeline_mode = #tpu.pipeline_mode<synchronous>, transform_indices = @transform_17, window_bounds = array<i64: 64, 128>}, {pipeline_mode = #tpu.pipeline_mode<synchronous>, transform_indices = @transform_18, window_bounds = array<i64: 64, 1>}, {pipeline_mode = #tpu.pipeline_mode<synchronous>, transform_indices = @transform_19, window_bounds = array<i64: 1, 64>}, {pipeline_mode = #tpu.pipeline_mode<synchronous>, transform_indices = @transform_20, window_bounds = array<i64: 1, 1>}, {pipeline_mode = #tpu.pipeline_mode<synchronous>, transform_indices = @transform_21, window_bounds = array<i64: 64, 384>}, {pipeline_mode = #tpu.pipeline_mode<synchronous>, transform_indices = @transform_22, window_bounds = array<i64: 64, 1>}, {pipeline_mode = #tpu.pipeline_mode<synchronous>, transform_indices = @transform_23, window_bounds = array<i64: 32, 64>}, {pipeline_mode = #tpu.pipeline_mode<synchronous>, transform_indices = @transform_24, window_bounds = array<i64: 32, 1>}, {pipeline_mode = #tpu.pipeline_mode<synchronous>, transform_indices = @transform_25, window_bounds = array<i64: 1, 32>}, {pipeline_mode = #tpu.pipeline_mode<synchronous>, transform_indices = @transform_26, window_bounds = array<i64: 1, 1>}, {transform_indices = @transform_27, window_bounds = array<i64: 1, 1, 8>}]} {
    %c0 = arith.constant 0 : index
    %c0_0 = arith.constant 0 : index
    %c0_1 = arith.constant 0 : index
    %0 = vector.load %arg1[%c0, %c0_0, %c0_1] : memref<1x32x128xf32, #tpu.memory_space<vmem>>, vector<1x32x128xf32>
    %1 = vector.shape_cast %0 : vector<1x32x128xf32> to vector<32x128xf32>
    %c1_i32 = arith.constant 1 : i32
    %2 = tpu.dynamic_rotate %1 by %c1_i32 dim 1 : vector<32x128xf32>, i32 -> vector<32x128xf32>
    %c2 = arith.constant 2 : index
    %c0_2 = arith.constant 0 : index
    %c0_3 = arith.constant 0 : index
    %3 = vector.load %arg12[%c2, %c0_2, %c0_3] : memref<7x1x128xf32, #tpu.memory_space<vmem>>, vector<1x1x128xf32>
    %4 = vector.shape_cast %3 : vector<1x1x128xf32> to vector<1x128xf32>
    %5 = vector.broadcast %4 : vector<1x128xf32> to vector<32x128xf32>
    %6 = arith.mulf %2, %5 : vector<32x128xf32>
    %7 = arith.truncf %6 : vector<32x128xf32> to vector<32x128xbf16>
    %c0_4 = arith.constant 0 : index
    %c0_5 = arith.constant 0 : index
    %8 = vector.load %arg29[%c0_4, %c0_5] : memref<96x128xbf16, #tpu.memory_space<vmem>>, vector<32x128xbf16>
    tpu.vector_store %arg29[%c0_4, %c0_5], %7 {strides = array<i32>} : memref<96x128xbf16, #tpu.memory_space<vmem>>, vector<32x128xbf16>,
    %c3 = arith.constant 3 : index
    %c0_6 = arith.constant 0 : index
    %c0_7 = arith.constant 0 : index
    %9 = vector.load %arg12[%c3, %c0_6, %c0_7] : memref<7x1x128xf32, #tpu.memory_space<vmem>>, vector<1x1x128xf32>
    %10 = vector.shape_cast %9 : vector<1x1x128xf32> to vector<1x128xf32>
    %11 = vector.broadcast %10 : vector<1x128xf32> to vector<32x128xf32>
    %12 = arith.mulf %1, %11 : vector<32x128xf32>
    %13 = arith.truncf %12 : vector<32x128xf32> to vector<32x128xbf16>
    %c32 = arith.constant 32 : index
    %c0_8 = arith.constant 0 : index
    %14 = vector.load %arg29[%c32, %c0_8] : memref<96x128xbf16, #tpu.memory_space<vmem>>, vector<32x128xbf16>
    tpu.vector_store %arg29[%c32, %c0_8], %13 {strides = array<i32>} : memref<96x128xbf16, #tpu.memory_space<vmem>>, vector<32x128xbf16>,
    %c127_i32 = arith.constant 127 : i32
    %15 = tpu.dynamic_rotate %1 by %c127_i32 dim 1 : vector<32x128xf32>, i32 -> vector<32x128xf32>
    %c4 = arith.constant 4 : index
    %c0_9 = arith.constant 0 : index
    %c0_10 = arith.constant 0 : index
    %16 = vector.load %arg12[%c4, %c0_9, %c0_10] : memref<7x1x128xf32, #tpu.memory_space<vmem>>, vector<1x1x128xf32>
    %17 = vector.shape_cast %16 : vector<1x1x128xf32> to vector<1x128xf32>
    %18 = vector.broadcast %17 : vector<1x128xf32> to vector<32x128xf32>
    %19 = arith.mulf %15, %18 : vector<32x128xf32>
    %20 = arith.truncf %19 : vector<32x128xf32> to vector<32x128xbf16>
    %c64 = arith.constant 64 : index
    %c0_11 = arith.constant 0 : index
    %21 = vector.load %arg29[%c64, %c0_11] : memref<96x128xbf16, #tpu.memory_space<vmem>>, vector<32x128xbf16>
    tpu.vector_store %arg29[%c64, %c0_11], %20 {strides = array<i32>} : memref<96x128xbf16, #tpu.memory_space<vmem>>, vector<32x128xbf16>,
    %c0_12 = arith.constant 0 : index
    %c0_13 = arith.constant 0 : index
    %22 = vector.load %arg2[%c0_12, %c0_13] : memref<64x96xbf16, #tpu.memory_space<vmem>>, vector<64x96xbf16>
    %c0_14 = arith.constant 0 : index
    %c0_15 = arith.constant 0 : index
    %23 = vector.load %arg29[%c0_14, %c0_15] : memref<96x128xbf16, #tpu.memory_space<vmem>>, vector<96x128xbf16>
    %cst = arith.constant dense<0.000000e+00> : vector<64x128xf32>
    %24 = tpu.matmul %22, %23, %cst {dimension_numbers = #tpu.dot_dimension_numbers<[1], [0], [0], [1], [0, 0, 1, 1], [], []>} : vector<64x96xbf16>, vector<96x128xbf16>, vector<64x128xf32> -> vector<64x128xf32>
    %c0_16 = arith.constant 0 : index
    %c0_17 = arith.constant 0 : index
    %25 = vector.load %arg3[%c0_16, %c0_17] : memref<64x1xf32, #tpu.memory_space<vmem>>, vector<64x1xf32>
    %26 = vector.broadcast %25 : vector<64x1xf32> to vector<64x128xf32>
    %27 = arith.addf %24, %26 : vector<64x128xf32>
    %cst_18 = arith.constant 0.000000e+00 : f32
    %28 = vector.broadcast %cst_18 : f32 to vector<64x128xf32>
    %29 = arith.maximumf %27, %28 : vector<64x128xf32>
    %c0_19 = arith.constant 0 : index
    %c0_20 = arith.constant 0 : index
    %30 = vector.load %arg4[%c0_19, %c0_20] : memref<64x128xf32, #tpu.memory_space<vmem>>, vector<64x128xf32>
    %31 = arith.addf %29, %30 : vector<64x128xf32>
    %c0_21 = arith.constant 0 : index
    %c0_22 = arith.constant 0 : index
    %32 = vector.load %arg5[%c0_21, %c0_22] : memref<192x64xbf16, #tpu.memory_space<vmem>>, vector<192x64xbf16>
    %33 = arith.truncf %31 : vector<64x128xf32> to vector<64x128xbf16>
    %cst_23 = arith.constant dense<0.000000e+00> : vector<192x128xf32>
    %34 = tpu.matmul %32, %33, %cst_23 {dimension_numbers = #tpu.dot_dimension_numbers<[1], [0], [0], [1], [0, 0, 1, 1], [], []>} : vector<192x64xbf16>, vector<64x128xbf16>, vector<192x128xf32> -> vector<192x128xf32>
    %c0_24 = arith.constant 0 : index
    %c0_25 = arith.constant 0 : index
    %35 = vector.load %arg6[%c0_24, %c0_25] : memref<192x1xf32, #tpu.memory_space<vmem>>, vector<192x1xf32>
    %36 = vector.broadcast %35 : vector<192x1xf32> to vector<192x128xf32>
    %37 = arith.addf %34, %36 : vector<192x128xf32>
    %c0_26 = arith.constant 0 : index
    %c0_27 = arith.constant 0 : index
    %38 = vector.load %arg9[%c0_26, %c0_27] : memref<128x128xf32, #tpu.memory_space<vmem>>, vector<128x128xf32>
    %39 = vector.extract_strided_slice %37 {offsets = [0, 0], sizes = [32, 128], strides = [1, 1]} : vector<192x128xf32> to vector<32x128xf32>
    %40 = vector.extract_strided_slice %37 {offsets = [64, 0], sizes = [32, 128], strides = [1, 1]} : vector<192x128xf32> to vector<32x128xf32>
    %41 = vector.extract_strided_slice %37 {offsets = [128, 0], sizes = [32, 128], strides = [1, 1]} : vector<192x128xf32> to vector<32x128xf32>
    %42 = tpu.transpose %39, [1, 0] : vector<32x128xf32> -> vector<128x32xf32>
    %43 = arith.truncf %42 : vector<128x32xf32> to vector<128x32xbf16>
    %44 = arith.truncf %40 : vector<32x128xf32> to vector<32x128xbf16>
    %cst_28 = arith.constant dense<0.000000e+00> : vector<128x128xf32>
    %45 = tpu.matmul %43, %44, %cst_28 {dimension_numbers = #tpu.dot_dimension_numbers<[1], [0], [0], [1], [0, 0, 1, 1], [], []>} : vector<128x32xbf16>, vector<32x128xbf16>, vector<128x128xf32> -> vector<128x128xf32>
    %cst_29 = arith.constant 0.176776692 : f32
    %46 = vector.broadcast %cst_29 : f32 to vector<128x128xf32>
    %47 = arith.mulf %45, %46 : vector<128x128xf32>
    %48 = arith.addf %47, %38 : vector<128x128xf32>
    %cst_30 = arith.constant dense<0xFF800000> : vector<128xf32>
    %49 = vector.multi_reduction <maximumf>, %48, %cst_30 [1] : vector<128x128xf32> to vector<128xf32>
    %50 = vector.shape_cast %49 : vector<128xf32> to vector<128x1xf32>
    %51 = vector.broadcast %50 : vector<128x1xf32> to vector<128x128xf32>
    %52 = arith.subf %48, %51 : vector<128x128xf32>
    %53 = math.exp %52 : vector<128x128xf32>
    %cst_31 = arith.constant dense<0.000000e+00> : vector<128xf32>
    %54 = vector.multi_reduction <add>, %53, %cst_31 [1] : vector<128x128xf32> to vector<128xf32>
    %55 = vector.shape_cast %54 : vector<128xf32> to vector<128x1xf32>
    %56 = tpu.reciprocal %55 {approx = true} : vector<128x1xf32> -> vector<128x1xf32>
    %57 = vector.broadcast %56 : vector<128x1xf32> to vector<128x128xf32>
    %58 = arith.mulf %53, %57 : vector<128x128xf32>
    %59 = arith.truncf %41 : vector<32x128xf32> to vector<32x128xbf16>
    %60 = arith.truncf %58 : vector<128x128xf32> to vector<128x128xbf16>
    %cst_32 = arith.constant dense<0.000000e+00> : vector<32x128xf32>
    %61 = tpu.matmul %59, %60, %cst_32 {dimension_numbers = #tpu.dot_dimension_numbers<[1], [1], [0], [0], [0, 0, 1, 0], [], []>} : vector<32x128xbf16>, vector<128x128xbf16>, vector<32x128xf32> -> vector<32x128xf32>
    %62 = vector.extract_strided_slice %37 {offsets = [32, 0], sizes = [32, 128], strides = [1, 1]} : vector<192x128xf32> to vector<32x128xf32>
    %63 = vector.extract_strided_slice %37 {offsets = [96, 0], sizes = [32, 128], strides = [1, 1]} : vector<192x128xf32> to vector<32x128xf32>
    %64 = vector.extract_strided_slice %37 {offsets = [160, 0], sizes = [32, 128], strides = [1, 1]} : vector<192x128xf32> to vector<32x128xf32>
    %65 = tpu.transpose %62, [1, 0] : vector<32x128xf32> -> vector<128x32xf32>
    %66 = arith.truncf %65 : vector<128x32xf32> to vector<128x32xbf16>
    %67 = arith.truncf %63 : vector<32x128xf32> to vector<32x128xbf16>
    %cst_33 = arith.constant dense<0.000000e+00> : vector<128x128xf32>
    %68 = tpu.matmul %66, %67, %cst_33 {dimension_numbers = #tpu.dot_dimension_numbers<[1], [0], [0], [1], [0, 0, 1, 1], [], []>} : vector<128x32xbf16>, vector<32x128xbf16>, vector<128x128xf32> -> vector<128x128xf32>
    %cst_34 = arith.constant 0.176776692 : f32
    %69 = vector.broadcast %cst_34 : f32 to vector<128x128xf32>
    %70 = arith.mulf %68, %69 : vector<128x128xf32>
    %71 = arith.addf %70, %38 : vector<128x128xf32>
    %cst_35 = arith.constant dense<0xFF800000> : vector<128xf32>
    %72 = vector.multi_reduction <maximumf>, %71, %cst_35 [1] : vector<128x128xf32> to vector<128xf32>
    %73 = vector.shape_cast %72 : vector<128xf32> to vector<128x1xf32>
    %74 = vector.broadcast %73 : vector<128x1xf32> to vector<128x128xf32>
    %75 = arith.subf %71, %74 : vector<128x128xf32>
    %76 = math.exp %75 : vector<128x128xf32>
    %cst_36 = arith.constant dense<0.000000e+00> : vector<128xf32>
    %77 = vector.multi_reduction <add>, %76, %cst_36 [1] : vector<128x128xf32> to vector<128xf32>
    %78 = vector.shape_cast %77 : vector<128xf32> to vector<128x1xf32>
    %79 = tpu.reciprocal %78 {approx = true} : vector<128x1xf32> -> vector<128x1xf32>
    %80 = vector.broadcast %79 : vector<128x1xf32> to vector<128x128xf32>
    %81 = arith.mulf %76, %80 : vector<128x128xf32>
    %82 = arith.truncf %64 : vector<32x128xf32> to vector<32x128xbf16>
    %83 = arith.truncf %81 : vector<128x128xf32> to vector<128x128xbf16>
    %cst_37 = arith.constant dense<0.000000e+00> : vector<32x128xf32>
    %84 = tpu.matmul %82, %83, %cst_37 {dimension_numbers = #tpu.dot_dimension_numbers<[1], [1], [0], [0], [0, 0, 1, 0], [], []>} : vector<32x128xbf16>, vector<128x128xbf16>, vector<32x128xf32> -> vector<32x128xf32>
    %c0_38 = arith.constant 0 : index
    %c0_39 = arith.constant 0 : index
    %85 = vector.load %arg7[%c0_38, %c0_39] : memref<64x64xbf16, #tpu.memory_space<vmem>>, vector<64x64xbf16>
    %86 = tpu.concatenate %61, %84 in 0 : vector<32x128xf32>, vector<32x128xf32> -> vector<64x128xf32>
    %87 = arith.truncf %86 : vector<64x128xf32> to vector<64x128xbf16>
    %cst_40 = arith.constant dense<0.000000e+00> : vector<64x128xf32>
    %88 = tpu.matmul %85, %87, %cst_40 {dimension_numbers = #tpu.dot_dimension_numbers<[1], [0], [0], [1], [0, 0, 1, 1], [], []>} : vector<64x64xbf16>, vector<64x128xbf16>, vector<64x128xf32> -> vector<64x128xf32>
    %c0_41 = arith.constant 0 : index
    %c0_42 = arith.constant 0 : index
    %89 = vector.load %arg8[%c0_41, %c0_42] : memref<64x1xf32, #tpu.memory_space<vmem>>, vector<64x1xf32>
    %90 = vector.broadcast %89 : vector<64x1xf32> to vector<64x128xf32>
    %91 = arith.addf %88, %90 : vector<64x128xf32>
    %c3_i32 = arith.constant 3 : i32
    %92 = tpu.dynamic_rotate %91 by %c3_i32 dim 1 : vector<64x128xf32>, i32 -> vector<64x128xf32>
    %c0_43 = arith.constant 0 : index
    %c0_44 = arith.constant 0 : index
    %c0_45 = arith.constant 0 : index
    %93 = vector.load %arg12[%c0_43, %c0_44, %c0_45] : memref<7x1x128xf32, #tpu.memory_space<vmem>>, vector<1x1x128xf32>
    %94 = vector.shape_cast %93 : vector<1x1x128xf32> to vector<1x128xf32>
    %95 = vector.broadcast %94 : vector<1x128xf32> to vector<64x128xf32>
    %96 = arith.mulf %92, %95 : vector<64x128xf32>
    %97 = arith.truncf %96 : vector<64x128xf32> to vector<64x128xbf16>
    %c0_46 = arith.constant 0 : index
    %c0_47 = arith.constant 0 : index
    %98 = vector.load %arg30[%c0_46, %c0_47] : memref<448x128xbf16, #tpu.memory_space<vmem>>, vector<64x128xbf16>
    tpu.vector_store %arg30[%c0_46, %c0_47], %97 {strides = array<i32>} : memref<448x128xbf16, #tpu.memory_space<vmem>>, vector<64x128xbf16>,
    %c2_i32 = arith.constant 2 : i32
    %99 = tpu.dynamic_rotate %91 by %c2_i32 dim 1 : vector<64x128xf32>, i32 -> vector<64x128xf32>
    %c1 = arith.constant 1 : index
    %c0_48 = arith.constant 0 : index
    %c0_49 = arith.constant 0 : index
    %100 = vector.load %arg12[%c1, %c0_48, %c0_49] : memref<7x1x128xf32, #tpu.memory_space<vmem>>, vector<1x1x128xf32>
    %101 = vector.shape_cast %100 : vector<1x1x128xf32> to vector<1x128xf32>
    %102 = vector.broadcast %101 : vector<1x128xf32> to vector<64x128xf32>
    %103 = arith.mulf %99, %102 : vector<64x128xf32>
    %104 = arith.truncf %103 : vector<64x128xf32> to vector<64x128xbf16>
    %c64_50 = arith.constant 64 : index
    %c0_51 = arith.constant 0 : index
    %105 = vector.load %arg30[%c64_50, %c0_51] : memref<448x128xbf16, #tpu.memory_space<vmem>>, vector<64x128xbf16>
    tpu.vector_store %arg30[%c64_50, %c0_51], %104 {strides = array<i32>} : memref<448x128xbf16, #tpu.memory_space<vmem>>, vector<64x128xbf16>,
    %c1_i32_52 = arith.constant 1 : i32
    %106 = tpu.dynamic_rotate %91 by %c1_i32_52 dim 1 : vector<64x128xf32>, i32 -> vector<64x128xf32>
    %c2_53 = arith.constant 2 : index
    %c0_54 = arith.constant 0 : index
    %c0_55 = arith.constant 0 : index
    %107 = vector.load %arg12[%c2_53, %c0_54, %c0_55] : memref<7x1x128xf32, #tpu.memory_space<vmem>>, vector<1x1x128xf32>
    %108 = vector.shape_cast %107 : vector<1x1x128xf32> to vector<1x128xf32>
    %109 = vector.broadcast %108 : vector<1x128xf32> to vector<64x128xf32>
    %110 = arith.mulf %106, %109 : vector<64x128xf32>
    %111 = arith.truncf %110 : vector<64x128xf32> to vector<64x128xbf16>
    %c128 = arith.constant 128 : index
    %c0_56 = arith.constant 0 : index
    %112 = vector.load %arg30[%c128, %c0_56] : memref<448x128xbf16, #tpu.memory_space<vmem>>, vector<64x128xbf16>
    tpu.vector_store %arg30[%c128, %c0_56], %111 {strides = array<i32>} : memref<448x128xbf16, #tpu.memory_space<vmem>>, vector<64x128xbf16>,
    %c3_57 = arith.constant 3 : index
    %c0_58 = arith.constant 0 : index
    %c0_59 = arith.constant 0 : index
    %113 = vector.load %arg12[%c3_57, %c0_58, %c0_59] : memref<7x1x128xf32, #tpu.memory_space<vmem>>, vector<1x1x128xf32>
    %114 = vector.shape_cast %113 : vector<1x1x128xf32> to vector<1x128xf32>
    %115 = vector.broadcast %114 : vector<1x128xf32> to vector<64x128xf32>
    %116 = arith.mulf %91, %115 : vector<64x128xf32>
    %117 = arith.truncf %116 : vector<64x128xf32> to vector<64x128xbf16>
    %c192 = arith.constant 192 : index
    %c0_60 = arith.constant 0 : index
    %118 = vector.load %arg30[%c192, %c0_60] : memref<448x128xbf16, #tpu.memory_space<vmem>>, vector<64x128xbf16>
    tpu.vector_store %arg30[%c192, %c0_60], %117 {strides = array<i32>} : memref<448x128xbf16, #tpu.memory_space<vmem>>, vector<64x128xbf16>,
    %c127_i32_61 = arith.constant 127 : i32
    %119 = tpu.dynamic_rotate %91 by %c127_i32_61 dim 1 : vector<64x128xf32>, i32 -> vector<64x128xf32>
    %c4_62 = arith.constant 4 : index
    %c0_63 = arith.constant 0 : index
    %c0_64 = arith.constant 0 : index
    %120 = vector.load %arg12[%c4_62, %c0_63, %c0_64] : memref<7x1x128xf32, #tpu.memory_space<vmem>>, vector<1x1x128xf32>
    %121 = vector.shape_cast %120 : vector<1x1x128xf32> to vector<1x128xf32>
    %122 = vector.broadcast %121 : vector<1x128xf32> to vector<64x128xf32>
    %123 = arith.mulf %119, %122 : vector<64x128xf32>
    %124 = arith.truncf %123 : vector<64x128xf32> to vector<64x128xbf16>
    %c256 = arith.constant 256 : index
    %c0_65 = arith.constant 0 : index
    %125 = vector.load %arg30[%c256, %c0_65] : memref<448x128xbf16, #tpu.memory_space<vmem>>, vector<64x128xbf16>
    tpu.vector_store %arg30[%c256, %c0_65], %124 {strides = array<i32>} : memref<448x128xbf16, #tpu.memory_space<vmem>>, vector<64x128xbf16>,
    %c126_i32 = arith.constant 126 : i32
    %126 = tpu.dynamic_rotate %91 by %c126_i32 dim 1 : vector<64x128xf32>, i32 -> vector<64x128xf32>
    %c5 = arith.constant 5 : index
    %c0_66 = arith.constant 0 : index
    %c0_67 = arith.constant 0 : index
    %127 = vector.load %arg12[%c5, %c0_66, %c0_67] : memref<7x1x128xf32, #tpu.memory_space<vmem>>, vector<1x1x128xf32>
    %128 = vector.shape_cast %127 : vector<1x1x128xf32> to vector<1x128xf32>
    %129 = vector.broadcast %128 : vector<1x128xf32> to vector<64x128xf32>
    %130 = arith.mulf %126, %129 : vector<64x128xf32>
    %131 = arith.truncf %130 : vector<64x128xf32> to vector<64x128xbf16>
    %c320 = arith.constant 320 : index
    %c0_68 = arith.constant 0 : index
    %132 = vector.load %arg30[%c320, %c0_68] : memref<448x128xbf16, #tpu.memory_space<vmem>>, vector<64x128xbf16>
    tpu.vector_store %arg30[%c320, %c0_68], %131 {strides = array<i32>} : memref<448x128xbf16, #tpu.memory_space<vmem>>, vector<64x128xbf16>,
    %c125_i32 = arith.constant 125 : i32
    %133 = tpu.dynamic_rotate %91 by %c125_i32 dim 1 : vector<64x128xf32>, i32 -> vector<64x128xf32>
    %c6 = arith.constant 6 : index
    %c0_69 = arith.constant 0 : index
    %c0_70 = arith.constant 0 : index
    %134 = vector.load %arg12[%c6, %c0_69, %c0_70] : memref<7x1x128xf32, #tpu.memory_space<vmem>>, vector<1x1x128xf32>
    %135 = vector.shape_cast %134 : vector<1x1x128xf32> to vector<1x128xf32>
    %136 = vector.broadcast %135 : vector<1x128xf32> to vector<64x128xf32>
    %137 = arith.mulf %133, %136 : vector<64x128xf32>
    %138 = arith.truncf %137 : vector<64x128xf32> to vector<64x128xbf16>
    %c384 = arith.constant 384 : index
    %c0_71 = arith.constant 0 : index
    %139 = vector.load %arg30[%c384, %c0_71] : memref<448x128xbf16, #tpu.memory_space<vmem>>, vector<64x128xbf16>
    tpu.vector_store %arg30[%c384, %c0_71], %138 {strides = array<i32>} : memref<448x128xbf16, #tpu.memory_space<vmem>>, vector<64x128xbf16>,
    %c0_72 = arith.constant 0 : index
    %c0_73 = arith.constant 0 : index
    %140 = vector.load %arg10[%c0_72, %c0_73] : memref<128x448xbf16, #tpu.memory_space<vmem>>, vector<128x448xbf16>
    %c0_74 = arith.constant 0 : index
    %c0_75 = arith.constant 0 : index
    %141 = vector.load %arg30[%c0_74, %c0_75] : memref<448x128xbf16, #tpu.memory_space<vmem>>, vector<448x128xbf16>
    %cst_76 = arith.constant dense<0.000000e+00> : vector<128x128xf32>
    %142 = tpu.matmul %140, %141, %cst_76 {dimension_numbers = #tpu.dot_dimension_numbers<[1], [0], [0], [1], [0, 0, 1, 1], [], []>} : vector<128x448xbf16>, vector<448x128xbf16>, vector<128x128xf32> -> vector<128x128xf32>
    %c0_77 = arith.constant 0 : index
    %c0_78 = arith.constant 0 : index
    %143 = vector.load %arg11[%c0_77, %c0_78] : memref<128x1xf32, #tpu.memory_space<vmem>>, vector<128x1xf32>
    %144 = vector.broadcast %143 : vector<128x1xf32> to vector<128x128xf32>
    %145 = arith.addf %142, %144 : vector<128x128xf32>
    %cst_79 = arith.constant 0.000000e+00 : f32
    %146 = vector.broadcast %cst_79 : f32 to vector<128x128xf32>
    %147 = arith.maximumf %145, %146 : vector<128x128xf32>
    %148 = vector.extract_strided_slice %147 {offsets = [96, 0], sizes = [32, 128], strides = [1, 1]} : vector<128x128xf32> to vector<32x128xf32>
    %c1_i32_80 = arith.constant 1 : i32
    %149 = tpu.dynamic_rotate %148 by %c1_i32_80 dim 1 : vector<32x128xf32>, i32 -> vector<32x128xf32>
    %c0_81 = arith.constant 0 : index
    %c0_82 = arith.constant 0 : index
    %150 = vector.load %arg13[%c0_81, %c0_82] : memref<1x128xf32, #tpu.memory_space<vmem>>, vector<1x128xf32>
    %c0_83 = arith.constant 0 : index
    %c0_84 = arith.constant 0 : index
    %151 = vector.load %arg14[%c0_83, %c0_84] : memref<1x128xf32, #tpu.memory_space<vmem>>, vector<1x128xf32>
    %152 = arith.subf %148, %149 : vector<32x128xf32>
    %153 = vector.broadcast %150 : vector<1x128xf32> to vector<32x128xf32>
    %154 = arith.mulf %152, %153 : vector<32x128xf32>
    %155 = arith.addf %149, %154 : vector<32x128xf32>
    %156 = arith.subf %149, %148 : vector<32x128xf32>
    %157 = vector.broadcast %151 : vector<1x128xf32> to vector<32x128xf32>
    %158 = arith.mulf %156, %157 : vector<32x128xf32>
    %159 = arith.addf %148, %158 : vector<32x128xf32>
    %160 = vector.extract_strided_slice %147 {offsets = [0, 0], sizes = [96, 128], strides = [1, 1]} : vector<128x128xf32> to vector<96x128xf32>
    %c0_85 = arith.constant 0 : index
    %c0_86 = arith.constant 0 : index
    %161 = vector.load %arg31[%c0_85, %c0_86] : memref<128x128xf32, #tpu.memory_space<vmem>>, vector<96x128xf32>
    tpu.vector_store %arg31[%c0_85, %c0_86], %160 {strides = array<i32>} : memref<128x128xf32, #tpu.memory_space<vmem>>, vector<96x128xf32>,
    %162 = arith.maximumf %155, %159 : vector<32x128xf32>
    %c96 = arith.constant 96 : index
    %c0_87 = arith.constant 0 : index
    %163 = vector.load %arg31[%c96, %c0_87] : memref<128x128xf32, #tpu.memory_space<vmem>>, vector<32x128xf32>
    tpu.vector_store %arg31[%c96, %c0_87], %162 {strides = array<i32>} : memref<128x128xf32, #tpu.memory_space<vmem>>, vector<32x128xf32>,
    %c0_88 = arith.constant 0 : index
    %c0_89 = arith.constant 0 : index
    %164 = vector.load %arg16[%c0_88, %c0_89] : memref<128x8xf32, #tpu.memory_space<vmem>>, vector<128x8xf32>
    %c0_90 = arith.constant 0 : index
    %c0_91 = arith.constant 0 : index
    %165 = vector.load %arg31[%c0_90, %c0_91] : memref<128x128xf32, #tpu.memory_space<vmem>>, vector<128x128xf32>
    %cst_92 = arith.constant dense<0.000000e+00> : vector<128x8xf32>
    %166 = tpu.matmul %165, %164, %cst_92 {dimension_numbers = #tpu.dot_dimension_numbers<[1], [0], [0], [1], [0, 0, 1, 1], [], []>} : vector<128x128xf32>, vector<128x8xf32>, vector<128x8xf32> -> vector<128x8xf32>
    %cst_93 = arith.constant 6.250000e-02 : f32
    %167 = vector.broadcast %cst_93 : f32 to vector<128x8xf32>
    %168 = arith.mulf %166, %167 : vector<128x8xf32>
    %c0_94 = arith.constant 0 : index
    %c0_95 = arith.constant 0 : index
    %169 = vector.load %arg18[%c0_94, %c0_95] : memref<64x128xbf16, #tpu.memory_space<vmem>>, vector<64x128xbf16>
    %c0_96 = arith.constant 0 : index
    %c0_97 = arith.constant 0 : index
    %170 = vector.load %arg31[%c0_96, %c0_97] : memref<128x128xf32, #tpu.memory_space<vmem>>, vector<128x128xf32>
    %171 = arith.truncf %170 : vector<128x128xf32> to vector<128x128xbf16>
    %cst_98 = arith.constant dense<0.000000e+00> : vector<64x128xf32>
    %172 = tpu.matmul %169, %171, %cst_98 {dimension_numbers = #tpu.dot_dimension_numbers<[1], [0], [0], [1], [0, 0, 1, 1], [], []>} : vector<64x128xbf16>, vector<128x128xbf16>, vector<64x128xf32> -> vector<64x128xf32>
    %c0_99 = arith.constant 0 : index
    %c0_100 = arith.constant 0 : index
    %173 = vector.load %arg19[%c0_99, %c0_100] : memref<64x1xf32, #tpu.memory_space<vmem>>, vector<64x1xf32>
    %174 = vector.broadcast %173 : vector<64x1xf32> to vector<64x128xf32>
    %175 = arith.addf %172, %174 : vector<64x128xf32>
    %cst_101 = arith.constant 0.000000e+00 : f32
    %176 = vector.broadcast %cst_101 : f32 to vector<64x128xf32>
    %177 = arith.maximumf %175, %176 : vector<64x128xf32>
    %c0_102 = arith.constant 0 : index
    %c0_103 = arith.constant 0 : index
    %178 = vector.load %arg20[%c0_102, %c0_103] : memref<1x64xbf16, #tpu.memory_space<vmem>>, vector<1x64xbf16>
    %179 = arith.truncf %177 : vector<64x128xf32> to vector<64x128xbf16>
    %cst_104 = arith.constant dense<0.000000e+00> : vector<1x128xf32>
    %180 = tpu.matmul %178, %179, %cst_104 {dimension_numbers = #tpu.dot_dimension_numbers<[1], [0], [0], [1], [0, 0, 1, 1], [], []>} : vector<1x64xbf16>, vector<64x128xbf16>, vector<1x128xf32> -> vector<1x128xf32>
    %c0_105 = arith.constant 0 : index
    %c0_106 = arith.constant 0 : index
    %181 = vector.load %arg21[%c0_105, %c0_106] : memref<1x1xf32, #tpu.memory_space<vmem>>, vector<1x1xf32>
    %182 = vector.broadcast %181 : vector<1x1xf32> to vector<1x128xf32>
    %183 = arith.addf %180, %182 : vector<1x128xf32>
    %184 = arith.negf %183 : vector<1x128xf32>
    %185 = math.exp %184 : vector<1x128xf32>
    %cst_107 = arith.constant 1.000000e+00 : f32
    %186 = vector.broadcast %cst_107 : f32 to vector<1x128xf32>
    %187 = arith.addf %186, %185 : vector<1x128xf32>
    %188 = arith.divf %186, %187 : vector<1x128xf32>
    %c0_108 = arith.constant 0 : index
    %c0_109 = arith.constant 0 : index
    %189 = vector.load %arg31[%c0_108, %c0_109] : memref<128x128xf32, #tpu.memory_space<vmem>>, vector<128x128xf32>
    %190 = vector.broadcast %188 : vector<1x128xf32> to vector<128x128xf32>
    %191 = arith.mulf %189, %190 : vector<128x128xf32>
    %cst_110 = arith.constant dense<0.000000e+00> : vector<128x8xf32>
    %192 = tpu.matmul %191, %164, %cst_110 {dimension_numbers = #tpu.dot_dimension_numbers<[1], [0], [0], [1], [0, 0, 1, 1], [], []>} : vector<128x128xf32>, vector<128x8xf32>, vector<128x8xf32> -> vector<128x8xf32>
    %c0_111 = arith.constant 0 : index
    %c0_112 = arith.constant 0 : index
    %193 = vector.load %arg31[%c0_111, %c0_112] : memref<128x128xf32, #tpu.memory_space<vmem>>, vector<128x128xf32>
    %c127_i32_113 = arith.constant 127 : i32
    %194 = tpu.dynamic_rotate %193 by %c127_i32_113 dim 1 : vector<128x128xf32>, i32 -> vector<128x128xf32>
    %c0_114 = arith.constant 0 : index
    %c0_115 = arith.constant 0 : index
    %c0_116 = arith.constant 0 : index
    %195 = vector.load %arg15[%c0_114, %c0_115, %c0_116] : memref<4x1x128xf32, #tpu.memory_space<vmem>>, vector<1x1x128xf32>
    %196 = vector.shape_cast %195 : vector<1x1x128xf32> to vector<1x128xf32>
    %197 = vector.broadcast %196 : vector<1x128xf32> to vector<128x128xf32>
    %198 = arith.addf %194, %197 : vector<128x128xf32>
    %199 = arith.maximumf %193, %198 : vector<128x128xf32>
    %c126_i32_117 = arith.constant 126 : i32
    %200 = tpu.dynamic_rotate %199 by %c126_i32_117 dim 1 : vector<128x128xf32>, i32 -> vector<128x128xf32>
    %c1_118 = arith.constant 1 : index
    %c0_119 = arith.constant 0 : index
    %c0_120 = arith.constant 0 : index
    %201 = vector.load %arg15[%c1_118, %c0_119, %c0_120] : memref<4x1x128xf32, #tpu.memory_space<vmem>>, vector<1x1x128xf32>
    %202 = vector.shape_cast %201 : vector<1x1x128xf32> to vector<1x128xf32>
    %203 = vector.broadcast %202 : vector<1x128xf32> to vector<128x128xf32>
    %204 = arith.addf %200, %203 : vector<128x128xf32>
    %205 = arith.maximumf %199, %204 : vector<128x128xf32>
    %c124_i32 = arith.constant 124 : i32
    %206 = tpu.dynamic_rotate %205 by %c124_i32 dim 1 : vector<128x128xf32>, i32 -> vector<128x128xf32>
    %c2_121 = arith.constant 2 : index
    %c0_122 = arith.constant 0 : index
    %c0_123 = arith.constant 0 : index
    %207 = vector.load %arg15[%c2_121, %c0_122, %c0_123] : memref<4x1x128xf32, #tpu.memory_space<vmem>>, vector<1x1x128xf32>
    %208 = vector.shape_cast %207 : vector<1x1x128xf32> to vector<1x128xf32>
    %209 = vector.broadcast %208 : vector<1x128xf32> to vector<128x128xf32>
    %210 = arith.addf %206, %209 : vector<128x128xf32>
    %211 = arith.maximumf %205, %210 : vector<128x128xf32>
    %c120_i32 = arith.constant 120 : i32
    %212 = tpu.dynamic_rotate %211 by %c120_i32 dim 1 : vector<128x128xf32>, i32 -> vector<128x128xf32>
    %c3_124 = arith.constant 3 : index
    %c0_125 = arith.constant 0 : index
    %c0_126 = arith.constant 0 : index
    %213 = vector.load %arg15[%c3_124, %c0_125, %c0_126] : memref<4x1x128xf32, #tpu.memory_space<vmem>>, vector<1x1x128xf32>
    %214 = vector.shape_cast %213 : vector<1x1x128xf32> to vector<1x128xf32>
    %215 = vector.broadcast %214 : vector<1x128xf32> to vector<128x128xf32>
    %216 = arith.addf %212, %215 : vector<128x128xf32>
    %217 = arith.maximumf %211, %216 : vector<128x128xf32>
    %c0_127 = arith.constant 0 : index
    %c0_128 = arith.constant 0 : index
    %218 = vector.load %arg17[%c0_127, %c0_128] : memref<128x8xf32, #tpu.memory_space<vmem>>, vector<128x8xf32>
    %cst_129 = arith.constant dense<0.000000e+00> : vector<128x8xf32>
    %219 = tpu.matmul %217, %218, %cst_129 {dimension_numbers = #tpu.dot_dimension_numbers<[1], [0], [0], [1], [0, 0, 1, 1], [], []>} : vector<128x128xf32>, vector<128x8xf32>, vector<128x8xf32> -> vector<128x8xf32>
    %220 = tpu.concatenate %219, %168, %192 in 0 : vector<128x8xf32>, vector<128x8xf32>, vector<128x8xf32> -> vector<384x8xf32>
    %c0_130 = arith.constant 0 : index
    %c0_131 = arith.constant 0 : index
    %221 = vector.load %arg22[%c0_130, %c0_131] : memref<64x384xf32, #tpu.memory_space<vmem>>, vector<64x384xf32>
    %cst_132 = arith.constant dense<0.000000e+00> : vector<64x8xf32>
    %222 = tpu.matmul %221, %220, %cst_132 {dimension_numbers = #tpu.dot_dimension_numbers<[1], [0], [0], [1], [0, 0, 1, 1], [], []>} : vector<64x384xf32>, vector<384x8xf32>, vector<64x8xf32> -> vector<64x8xf32>
    %c0_133 = arith.constant 0 : index
    %c0_134 = arith.constant 0 : index
    %223 = vector.load %arg23[%c0_133, %c0_134] : memref<64x1xf32, #tpu.memory_space<vmem>>, vector<64x1xf32>
    %224 = vector.broadcast %223 : vector<64x1xf32> to vector<64x8xf32>
    %225 = arith.addf %222, %224 : vector<64x8xf32>
    %cst_135 = arith.constant 0.000000e+00 : f32
    %226 = vector.broadcast %cst_135 : f32 to vector<64x8xf32>
    %227 = arith.maximumf %225, %226 : vector<64x8xf32>
    %c0_136 = arith.constant 0 : index
    %c0_137 = arith.constant 0 : index
    %228 = vector.load %arg24[%c0_136, %c0_137] : memref<32x64xf32, #tpu.memory_space<vmem>>, vector<32x64xf32>
    %cst_138 = arith.constant dense<0.000000e+00> : vector<32x8xf32>
    %229 = tpu.matmul %228, %227, %cst_138 {dimension_numbers = #tpu.dot_dimension_numbers<[1], [0], [0], [1], [0, 0, 1, 1], [], []>} : vector<32x64xf32>, vector<64x8xf32>, vector<32x8xf32> -> vector<32x8xf32>
    %c0_139 = arith.constant 0 : index
    %c0_140 = arith.constant 0 : index
    %230 = vector.load %arg25[%c0_139, %c0_140] : memref<32x1xf32, #tpu.memory_space<vmem>>, vector<32x1xf32>
    %231 = vector.broadcast %230 : vector<32x1xf32> to vector<32x8xf32>
    %232 = arith.addf %229, %231 : vector<32x8xf32>
    %cst_141 = arith.constant 0.000000e+00 : f32
    %233 = vector.broadcast %cst_141 : f32 to vector<32x8xf32>
    %234 = arith.maximumf %232, %233 : vector<32x8xf32>
    %c0_142 = arith.constant 0 : index
    %c0_143 = arith.constant 0 : index
    %235 = vector.load %arg26[%c0_142, %c0_143] : memref<1x32xf32, #tpu.memory_space<vmem>>, vector<1x32xf32>
    %cst_144 = arith.constant dense<0.000000e+00> : vector<1x8xf32>
    %236 = tpu.matmul %235, %234, %cst_144 {dimension_numbers = #tpu.dot_dimension_numbers<[1], [0], [0], [1], [0, 0, 1, 1], [], []>} : vector<1x32xf32>, vector<32x8xf32>, vector<1x8xf32> -> vector<1x8xf32>
    %c0_145 = arith.constant 0 : index
    %c0_146 = arith.constant 0 : index
    %237 = vector.load %arg27[%c0_145, %c0_146] : memref<1x1xf32, #tpu.memory_space<vmem>>, vector<1x1xf32>
    %238 = vector.broadcast %237 : vector<1x1xf32> to vector<1x8xf32>
    %239 = arith.addf %236, %238 : vector<1x8xf32>
    %240 = arith.negf %239 : vector<1x8xf32>
    %241 = math.exp %240 : vector<1x8xf32>
    %cst_147 = arith.constant 1.000000e+00 : f32
    %242 = vector.broadcast %cst_147 : f32 to vector<1x8xf32>
    %243 = arith.addf %242, %241 : vector<1x8xf32>
    %244 = arith.divf %242, %243 : vector<1x8xf32>
    %c0_148 = arith.constant 0 : index
    %c0_149 = arith.constant 0 : index
    %c0_150 = arith.constant 0 : index
    %245 = vector.load %arg28[%c0_148, %c0_149, %c0_150] : memref<1x1x8xf32, #tpu.memory_space<vmem>>, vector<1x1x8xf32>
    %246 = vector.shape_cast %245 : vector<1x1x8xf32> to vector<1x8xf32>
    %247 = vector.shape_cast %244 : vector<1x8xf32> to vector<1x1x8xf32>
    tpu.vector_store %arg28[%c0_148, %c0_149, %c0_150], %247 {strides = array<i32>} : memref<1x1x8xf32, #tpu.memory_space<vmem>>, vector<1x1x8xf32>,
    return
  }
  func.func @transform_0(%arg0: i32) -> (i32, i32, i32) {
    %c0_i32 = arith.constant 0 : i32
    %c0_i32_0 = arith.constant 0 : i32
    %c0_i32_1 = arith.constant 0 : i32
    return %arg0, %c0_i32, %c0_i32_0 : i32, i32, i32
  }
  func.func @transform_1(%arg0: i32) -> (i32, i32) {
    %c0_i32 = arith.constant 0 : i32
    %c0_i32_0 = arith.constant 0 : i32
    %c0_i32_1 = arith.constant 0 : i32
    return %c0_i32, %c0_i32_0 : i32, i32
  }
  func.func @transform_2(%arg0: i32) -> (i32, i32) {
    %c0_i32 = arith.constant 0 : i32
    %c0_i32_0 = arith.constant 0 : i32
    %c0_i32_1 = arith.constant 0 : i32
    return %c0_i32, %c0_i32_0 : i32, i32
  }
  func.func @transform_3(%arg0: i32) -> (i32, i32) {
    %c0_i32 = arith.constant 0 : i32
    %c0_i32_0 = arith.constant 0 : i32
    %c0_i32_1 = arith.constant 0 : i32
    return %c0_i32, %c0_i32_0 : i32, i32
  }
  func.func @transform_4(%arg0: i32) -> (i32, i32) {
    %c0_i32 = arith.constant 0 : i32
    %c0_i32_0 = arith.constant 0 : i32
    %c0_i32_1 = arith.constant 0 : i32
    return %c0_i32, %c0_i32_0 : i32, i32
  }
  func.func @transform_5(%arg0: i32) -> (i32, i32) {
    %c0_i32 = arith.constant 0 : i32
    %c0_i32_0 = arith.constant 0 : i32
    %c0_i32_1 = arith.constant 0 : i32
    return %c0_i32, %c0_i32_0 : i32, i32
  }
  func.func @transform_6(%arg0: i32) -> (i32, i32) {
    %c0_i32 = arith.constant 0 : i32
    %c0_i32_0 = arith.constant 0 : i32
    %c0_i32_1 = arith.constant 0 : i32
    return %c0_i32, %c0_i32_0 : i32, i32
  }
  func.func @transform_7(%arg0: i32) -> (i32, i32) {
    %c0_i32 = arith.constant 0 : i32
    %c0_i32_0 = arith.constant 0 : i32
    %c0_i32_1 = arith.constant 0 : i32
    return %c0_i32, %c0_i32_0 : i32, i32
  }
  func.func @transform_8(%arg0: i32) -> (i32, i32) {
    %c0_i32 = arith.constant 0 : i32
    %c0_i32_0 = arith.constant 0 : i32
    %c0_i32_1 = arith.constant 0 : i32
    return %c0_i32, %c0_i32_0 : i32, i32
  }
  func.func @transform_9(%arg0: i32) -> (i32, i32) {
    %c0_i32 = arith.constant 0 : i32
    %c0_i32_0 = arith.constant 0 : i32
    %c0_i32_1 = arith.constant 0 : i32
    return %c0_i32, %c0_i32_0 : i32, i32
  }
  func.func @transform_10(%arg0: i32) -> (i32, i32) {
    %c0_i32 = arith.constant 0 : i32
    %c0_i32_0 = arith.constant 0 : i32
    %c0_i32_1 = arith.constant 0 : i32
    return %c0_i32, %c0_i32_0 : i32, i32
  }
  func.func @transform_11(%arg0: i32) -> (i32, i32, i32) {
    %c0_i32 = arith.constant 0 : i32
    %c0_i32_0 = arith.constant 0 : i32
    %c0_i32_1 = arith.constant 0 : i32
    %c0_i32_2 = arith.constant 0 : i32
    return %c0_i32, %c0_i32_0, %c0_i32_1 : i32, i32, i32
  }
  func.func @transform_12(%arg0: i32) -> (i32, i32) {
    %c0_i32 = arith.constant 0 : i32
    %c0_i32_0 = arith.constant 0 : i32
    %c0_i32_1 = arith.constant 0 : i32
    return %c0_i32, %c0_i32_0 : i32, i32
  }
  func.func @transform_13(%arg0: i32) -> (i32, i32) {
    %c0_i32 = arith.constant 0 : i32
    %c0_i32_0 = arith.constant 0 : i32
    %c0_i32_1 = arith.constant 0 : i32
    return %c0_i32, %c0_i32_0 : i32, i32
  }
  func.func @transform_14(%arg0: i32) -> (i32, i32, i32) {
    %c0_i32 = arith.constant 0 : i32
    %c0_i32_0 = arith.constant 0 : i32
    %c0_i32_1 = arith.constant 0 : i32
    %c0_i32_2 = arith.constant 0 : i32
    return %c0_i32, %c0_i32_0, %c0_i32_1 : i32, i32, i32
  }
  func.func @transform_15(%arg0: i32) -> (i32, i32) {
    %c0_i32 = arith.constant 0 : i32
    %c0_i32_0 = arith.constant 0 : i32
    %c0_i32_1 = arith.constant 0 : i32
    return %c0_i32, %c0_i32_0 : i32, i32
  }
  func.func @transform_16(%arg0: i32) -> (i32, i32) {
    %c0_i32 = arith.constant 0 : i32
    %c0_i32_0 = arith.constant 0 : i32
    %c0_i32_1 = arith.constant 0 : i32
    return %c0_i32, %c0_i32_0 : i32, i32
  }
  func.func @transform_17(%arg0: i32) -> (i32, i32) {
    %c0_i32 = arith.constant 0 : i32
    %c0_i32_0 = arith.constant 0 : i32
    %c0_i32_1 = arith.constant 0 : i32
    return %c0_i32, %c0_i32_0 : i32, i32
  }
  func.func @transform_18(%arg0: i32) -> (i32, i32) {
    %c0_i32 = arith.constant 0 : i32
    %c0_i32_0 = arith.constant 0 : i32
    %c0_i32_1 = arith.constant 0 : i32
    return %c0_i32, %c0_i32_0 : i32, i32
  }
  func.func @transform_19(%arg0: i32) -> (i32, i32) {
    %c0_i32 = arith.constant 0 : i32
    %c0_i32_0 = arith.constant 0 : i32
    %c0_i32_1 = arith.constant 0 : i32
    return %c0_i32, %c0_i32_0 : i32, i32
  }
  func.func @transform_20(%arg0: i32) -> (i32, i32) {
    %c0_i32 = arith.constant 0 : i32
    %c0_i32_0 = arith.constant 0 : i32
    %c0_i32_1 = arith.constant 0 : i32
    return %c0_i32, %c0_i32_0 : i32, i32
  }
  func.func @transform_21(%arg0: i32) -> (i32, i32) {
    %c0_i32 = arith.constant 0 : i32
    %c0_i32_0 = arith.constant 0 : i32
    %c0_i32_1 = arith.constant 0 : i32
    return %c0_i32, %c0_i32_0 : i32, i32
  }
  func.func @transform_22(%arg0: i32) -> (i32, i32) {
    %c0_i32 = arith.constant 0 : i32
    %c0_i32_0 = arith.constant 0 : i32
    %c0_i32_1 = arith.constant 0 : i32
    return %c0_i32, %c0_i32_0 : i32, i32
  }
  func.func @transform_23(%arg0: i32) -> (i32, i32) {
    %c0_i32 = arith.constant 0 : i32
    %c0_i32_0 = arith.constant 0 : i32
    %c0_i32_1 = arith.constant 0 : i32
    return %c0_i32, %c0_i32_0 : i32, i32
  }
  func.func @transform_24(%arg0: i32) -> (i32, i32) {
    %c0_i32 = arith.constant 0 : i32
    %c0_i32_0 = arith.constant 0 : i32
    %c0_i32_1 = arith.constant 0 : i32
    return %c0_i32, %c0_i32_0 : i32, i32
  }
  func.func @transform_25(%arg0: i32) -> (i32, i32) {
    %c0_i32 = arith.constant 0 : i32
    %c0_i32_0 = arith.constant 0 : i32
    %c0_i32_1 = arith.constant 0 : i32
    return %c0_i32, %c0_i32_0 : i32, i32
  }
  func.func @transform_26(%arg0: i32) -> (i32, i32) {
    %c0_i32 = arith.constant 0 : i32
    %c0_i32_0 = arith.constant 0 : i32
    %c0_i32_1 = arith.constant 0 : i32
    return %c0_i32, %c0_i32_0 : i32, i32
  }
  func.func @transform_27(%arg0: i32) -> (i32, i32, i32) {
    %c0_i32 = arith.constant 0 : i32
    %c0_i32_0 = arith.constant 0 : i32
    %c0_i32_1 = arith.constant 0 : i32
    return %arg0, %c0_i32, %c0_i32_0 : i32, i32, i32
  }
}

</mosaic_0001>

<llo_original>
// kernel: promoter_forward.1
$region0: #{promoter_forward.1}
  #allocation0 [shape = 'u32[]', space=smem, size = 0x4, offset = 0x4, fixed_abs, tag = 'smem constant byte address 0x4 - core index']
  #allocation1 [shape = 'u32[144,128]{1,0:T(1,128)}', space=vmem, size = 0x12000, scoped, tag = 'internal scratch']
  #allocation2 [shape = 'bf16[96,128]{1,0:T(16,128)(2,1)}', space=vmem, size = 0x6000, scoped, tag = 'scratch operand']
  #allocation3 [shape = 'bf16[448,128]{1,0:T(16,128)(2,1)}', space=vmem, size = 0x1c000, scoped, tag = 'scratch operand']
  #allocation4 [shape = 'f32[128,128]{1,0:T(8,128)}', space=vmem, size = 0x10000, scoped, tag = 'scratch operand']
  #allocation5 [shape = 'f32[1,1]{1,0:T(1,128)S(1)}', space=vmem, size = 0x200, scoped, tag = 'scoped memory for promoter_forward.1']
  #allocation6 [shape = 'f32[1,1]{1,0:T(1,128)S(1)}', space=vmem, size = 0x200, scoped, tag = 'scoped memory for promoter_forward.1']
  %s0 = inlined_call_operand.vmem [shape: f32[1,32,128], index: 0, kind: input, shape index: {}]
  %s1 = inlined_call_operand.vmem [shape: bf16[64,96], index: 1, kind: input, shape index: {}]
  %s2 = inlined_call_operand.vmem [shape: f32[64,1], index: 2, kind: input, shape index: {}]
  %s3 = inlined_call_operand.vmem [shape: f32[64,128], index: 3, kind: input, shape index: {}]
  %s4 = inlined_call_operand.vmem [shape: bf16[192,64], index: 4, kind: input, shape index: {}]
  %s5 = inlined_call_operand.vmem [shape: f32[192,1], index: 5, kind: input, shape index: {}]
  %s6 = inlined_call_operand.vmem [shape: bf16[64,64], index: 6, kind: input, shape index: {}]
  %s7 = inlined_call_operand.vmem [shape: f32[64,1], index: 7, kind: input, shape index: {}]
  %s8 = inlined_call_operand.vmem [shape: f32[128,128], index: 8, kind: input, shape index: {}]
  %s9 = inlined_call_operand.vmem [shape: bf16[128,448], index: 9, kind: input, shape index: {}]
  %s10 = inlined_call_operand.vmem [shape: f32[128,1], index: 10, kind: input, shape index: {}]
  %s11 = inlined_call_operand.vmem [shape: f32[7,1,128], index: 11, kind: input, shape index: {}]
  %s12 = inlined_call_operand.vmem [shape: f32[1,128], index: 12, kind: input, shape index: {}]
  %s13 = inlined_call_operand.vmem [shape: f32[1,128], index: 13, kind: input, shape index: {}]
  %s14 = inlined_call_operand.vmem [shape: f32[4,1,128], index: 14, kind: input, shape index: {}]
  %s15 = inlined_call_operand.vmem [shape: f32[128,8], index: 15, kind: input, shape index: {}]
  %s16 = inlined_call_operand.vmem [shape: f32[128,8], index: 16, kind: input, shape index: {}]
  %s17 = inlined_call_operand.vmem [shape: bf16[64,128], index: 17, kind: input, shape index: {}]
  %s18 = inlined_call_operand.vmem [shape: f32[64,1], index: 18, kind: input, shape index: {}]
  %s19 = inlined_call_operand.vmem [shape: bf16[1,64], index: 19, kind: input, shape index: {}]
  %s20 = inlined_call_operand.<no memory space> [shape: f32[1,1], index: 20, kind: input, shape index: {}]
  %s21 = inlined_call_operand.vmem [shape: f32[64,384], index: 21, kind: input, shape index: {}]
  %s22 = inlined_call_operand.vmem [shape: f32[64,1], index: 22, kind: input, shape index: {}]
  %s23 = inlined_call_operand.vmem [shape: f32[32,64], index: 23, kind: input, shape index: {}]
  %s24 = inlined_call_operand.vmem [shape: f32[32,1], index: 24, kind: input, shape index: {}]
  %s25 = inlined_call_operand.vmem [shape: f32[1,32], index: 25, kind: input, shape index: {}]
  %s26 = inlined_call_operand.<no memory space> [shape: f32[1,1], index: 26, kind: input, shape index: {}]
  %s27 = inlined_call_operand.vmem [shape: f32[1,1,8], index: 27, kind: output, shape index: {}]
  %s28 = sld [smem:[#allocation0]]
  $region118: #{promoter_forward.1} parent=0
    _
  %s30 = ssub.s32 1, %s28
  %s31 = scalar_select 0, %s30, %s28
  %v32 = vstv %s20
  %33 = vst [vmem:[#allocation5] sm:$0x1] %v32
  %v34 = vstv %s26
  %35 = vst [vmem:[#allocation6] sm:$0x1] %v34
  // Predicated region
  $region2: #{promoter_forward.1} parent=0 // pred_check
    _
  $region3: #{promoter_forward.1} parent=0 // pred_check_branch
    %37 = sbr.rel (0) target = $region5
  $region4: #{promoter_forward.1} parent=0 // pred_region
    _
  $region5: #{promoter_forward.1} parent=0 // pred_fallthru
    _
  // Predicated region
  $region6: #{promoter_forward.1} parent=0 // pred_check
    _
  $region7: #{promoter_forward.1} parent=0 // pred_check_branch
    %39 = sbr.rel (0) target = $region9
  $region8: #{promoter_forward.1} parent=0 // pred_region
    _
  $region9: #{promoter_forward.1} parent=0 // pred_fallthru
    _
  // Predicated region
  $region10: #{promoter_forward.1} parent=0 // pred_check
    _
  $region11: #{promoter_forward.1} parent=0 // pred_check_branch
    %41 = sbr.rel (0) target = $region13
  $region12: #{promoter_forward.1} parent=0 // pred_region
    _
  $region13: #{promoter_forward.1} parent=0 // pred_fallthru
    _
  // Predicated region
  $region14: #{promoter_forward.1} parent=0 // pred_check
    _
  $region15: #{promoter_forward.1} parent=0 // pred_check_branch
    %43 = sbr.rel (0) target = $region17
  $region16: #{promoter_forward.1} parent=0 // pred_region
    _
  $region17: #{promoter_forward.1} parent=0 // pred_fallthru
    _
  // Predicated region
  $region18: #{promoter_forward.1} parent=0 // pred_check
    _
  $region19: #{promoter_forward.1} parent=0 // pred_check_branch
    %45 = sbr.rel (0) target = $region21
  $region20: #{promoter_forward.1} parent=0 // pred_region
    _
  $region21: #{promoter_forward.1} parent=0 // pred_fallthru
    _
  // Predicated region
  $region22: #{promoter_forward.1} parent=0 // pred_check
    _
  $region23: #{promoter_forward.1} parent=0 // pred_check_branch
    %47 = sbr.rel (0) target = $region25
  $region24: #{promoter_forward.1} parent=0 // pred_region
    _
  $region25: #{promoter_forward.1} parent=0 // pred_fallthru
    _
  // Predicated region
  $region26: #{promoter_forward.1} parent=0 // pred_check
    _
  $region27: #{promoter_forward.1} parent=0 // pred_check_branch
    %49 = sbr.rel (0) target = $region29
  $region28: #{promoter_forward.1} parent=0 // pred_region
    _
  $region29: #{promoter_forward.1} parent=0 // pred_fallthru
    _
  // Predicated region
  $region30: #{promoter_forward.1} parent=0 // pred_check
    _
  $region31: #{promoter_forward.1} parent=0 // pred_check_branch
    %51 = sbr.rel (0) target = $region33
  $region32: #{promoter_forward.1} parent=0 // pred_region
    _
  $region33: #{promoter_forward.1} parent=0 // pred_fallthru
    _
  // Predicated region
  $region34: #{promoter_forward.1} parent=0 // pred_check
    _
  $region35: #{promoter_forward.1} parent=0 // pred_check_branch
    %53 = sbr.rel (0) target = $region37
  $region36: #{promoter_forward.1} parent=0 // pred_region
    _
  $region37: #{promoter_forward.1} parent=0 // pred_fallthru
    _
  // Predicated region
  $region38: #{promoter_forward.1} parent=0 // pred_check
    _
  $region39: #{promoter_forward.1} parent=0 // pred_check_branch
    %55 = sbr.rel (0) target = $region41
  $region40: #{promoter_forward.1} parent=0 // pred_region
    _
  $region41: #{promoter_forward.1} parent=0 // pred_fallthru
    _
  // Predicated region
  $region42: #{promoter_forward.1} parent=0 // pred_check
    _
  $region43: #{promoter_forward.1} parent=0 // pred_check_branch
    %57 = sbr.rel (0) target = $region45
  $region44: #{promoter_forward.1} parent=0 // pred_region
    _
  $region45: #{promoter_forward.1} parent=0 // pred_fallthru
    _
  // Predicated region
  $region46: #{promoter_forward.1} parent=0 // pred_check
    _
  $region47: #{promoter_forward.1} parent=0 // pred_check_branch
    %59 = sbr.rel (0) target = $region49
  $region48: #{promoter_forward.1} parent=0 // pred_region
    _
  $region49: #{promoter_forward.1} parent=0 // pred_fallthru
    _
  // Predicated region
  $region50: #{promoter_forward.1} parent=0 // pred_check
    _
  $region51: #{promoter_forward.1} parent=0 // pred_check_branch
    %61 = sbr.rel (0) target = $region53
  $region52: #{promoter_forward.1} parent=0 // pred_region
    _
  $region53: #{promoter_forward.1} parent=0 // pred_fallthru
    _
  // Predicated region
  $region54: #{promoter_forward.1} parent=0 // pred_check
    _
  $region55: #{promoter_forward.1} parent=0 // pred_check_branch
    %63 = sbr.rel (0) target = $region57
  $region56: #{promoter_forward.1} parent=0 // pred_region
    _
  $region57: #{promoter_forward.1} parent=0 // pred_fallthru
    _
  // Predicated region
  $region58: #{promoter_forward.1} parent=0 // pred_check
    _
  $region59: #{promoter_forward.1} parent=0 // pred_check_branch
    %65 = sbr.rel (0) target = $region61
  $region60: #{promoter_forward.1} parent=0 // pred_region
    _
  $region61: #{promoter_forward.1} parent=0 // pred_fallthru
    _
  // Predicated region
  $region62: #{promoter_forward.1} parent=0 // pred_check
    _
  $region63: #{promoter_forward.1} parent=0 // pred_check_branch
    %67 = sbr.rel (0) target = $region65
  $region64: #{promoter_forward.1} parent=0 // pred_region
    _
  $region65: #{promoter_forward.1} parent=0 // pred_fallthru
    _
  // Predicated region
  $region66: #{promoter_forward.1} parent=0 // pred_check
    _
  $region67: #{promoter_forward.1} parent=0 // pred_check_branch
    %69 = sbr.rel (0) target = $region69
  $region68: #{promoter_forward.1} parent=0 // pred_region
    _
  $region69: #{promoter_forward.1} parent=0 // pred_fallthru
    _
  // Predicated region
  $region70: #{promoter_forward.1} parent=0 // pred_check
    _
  $region71: #{promoter_forward.1} parent=0 // pred_check_branch
    %71 = sbr.rel (0) target = $region73
  $region72: #{promoter_forward.1} parent=0 // pred_region
    _
  $region73: #{promoter_forward.1} parent=0 // pred_fallthru
    _
  // Predicated region
  $region74: #{promoter_forward.1} parent=0 // pred_check
    _
  $region75: #{promoter_forward.1} parent=0 // pred_check_branch
    %73 = sbr.rel (0) target = $region77
  $region76: #{promoter_forward.1} parent=0 // pred_region
    _
  $region77: #{promoter_forward.1} parent=0 // pred_fallthru
    _
  // Predicated region
  $region78: #{promoter_forward.1} parent=0 // pred_check
    _
  $region79: #{promoter_forward.1} parent=0 // pred_check_branch
    %75 = sbr.rel (0) target = $region81
  $region80: #{promoter_forward.1} parent=0 // pred_region
    _
  $region81: #{promoter_forward.1} parent=0 // pred_fallthru
    _
  // Predicated region
  $region82: #{promoter_forward.1} parent=0 // pred_check
    _
  $region83: #{promoter_forward.1} parent=0 // pred_check_branch
    %77 = sbr.rel (0) target = $region85
  $region84: #{promoter_forward.1} parent=0 // pred_region
    _
  $region85: #{promoter_forward.1} parent=0 // pred_fallthru
    _
  // Predicated region
  $region86: #{promoter_forward.1} parent=0 // pred_check
    _
  $region87: #{promoter_forward.1} parent=0 // pred_check_branch
    %79 = sbr.rel (0) target = $region89
  $region88: #{promoter_forward.1} parent=0 // pred_region
    _
  $region89: #{promoter_forward.1} parent=0 // pred_fallthru
    _
  // Predicated region
  $region90: #{promoter_forward.1} parent=0 // pred_check
    _
  $region91: #{promoter_forward.1} parent=0 // pred_check_branch
    %81 = sbr.rel (0) target = $region93
  $region92: #{promoter_forward.1} parent=0 // pred_region
    _
  $region93: #{promoter_forward.1} parent=0 // pred_fallthru
    _
  // Predicated region
  $region94: #{promoter_forward.1} parent=0 // pred_check
    _
  $region95: #{promoter_forward.1} parent=0 // pred_check_branch
    %83 = sbr.rel (0) target = $region97
  $region96: #{promoter_forward.1} parent=0 // pred_region
    _
  $region97: #{promoter_forward.1} parent=0 // pred_fallthru
    _
  // Predicated region
  $region98: #{promoter_forward.1} parent=0 // pred_check
    _
  $region99: #{promoter_forward.1} parent=0 // pred_check_branch
    %85 = sbr.rel (0) target = $region101
  $region100: #{promoter_forward.1} parent=0 // pred_region
    _
  $region101: #{promoter_forward.1} parent=0 // pred_fallthru
    _
  // Predicated region
  $region102: #{promoter_forward.1} parent=0 // pred_check
    _
  $region103: #{promoter_forward.1} parent=0 // pred_check_branch
    %87 = sbr.rel (0) target = $region105
  $region104: #{promoter_forward.1} parent=0 // pred_region
    _
  $region105: #{promoter_forward.1} parent=0 // pred_fallthru
    _
  // Predicated region
  $region106: #{promoter_forward.1} parent=0 // pred_check
    _
  $region107: #{promoter_forward.1} parent=0 // pred_check_branch
    %89 = sbr.rel (0) target = $region109
  $region108: #{promoter_forward.1} parent=0 // pred_region
    _
  $region109: #{promoter_forward.1} parent=0 // pred_fallthru
    _
  %v91 = vld [vmem:[%s0] sm:$0xff]
  %v92 = vld [vmem:[%s0 + $0x8] sm:$0xff]
  %v93 = vld [vmem:[%s0 + $0x10] sm:$0xff]
  %v94 = vld [vmem:[%s0 + $0x18] sm:$0xff]
  %95 = vrot.lane.b32.xlu0 %v91, 1
  %v96 = vpop.permute.xlu0 %95
  %97 = vrot.lane.b32.xlu0 %v92, 1
  %v98 = vpop.permute.xlu0 %97
  %99 = vrot.lane.b32.xlu0 %v93, 1
  %v100 = vpop.permute.xlu0 %99
  %101 = vrot.lane.b32.xlu0 %v94, 1
  %v102 = vpop.permute.xlu0 %101
  %s103 = scalar_lea.vmem %s11, 2
  %v104 = vld [vmem:[%s103] sm:$0x1]
  %v106 = vlaneseq
  %v107 = vshrl.u32 %v106, 7
  %v108 = vsub.s32 0, %v107
  %v109 = vrot.slane %v104, %v108
  %v111 = vmul.f32 %v96, %v109
  %v112 = vmul.f32 %v98, %v109
  %v113 = vmul.f32 %v100, %v109
  %v114 = vmul.f32 %v102, %v109
  %v115 = vpack.c.bf16 %v112, %v111
  %v116 = vpack.c.bf16 %v114, %v113
  %117 = vst [vmem:[#allocation2] sm:$0xff] %v115
  %118 = vst [vmem:[#allocation2 + $0x8] sm:$0xff] %v116
  %s119 = scalar_lea.vmem %s11, 3
  %v120 = vld [vmem:[%s119] sm:$0x1]
  %v122 = vlaneseq
  %v123 = vshrl.u32 %v122, 7
  %v124 = vsub.s32 0, %v123
  %v125 = vrot.slane %v120, %v124
  %v127 = vmul.f32 %v91, %v125
  %v128 = vmul.f32 %v92, %v125
  %v129 = vmul.f32 %v93, %v125
  %v130 = vmul.f32 %v94, %v125
  %v131 = vpack.c.bf16 %v128, %v127
  %v132 = vpack.c.bf16 %v130, %v129
  %133 = vst [vmem:[#allocation2 + $0x10] sm:$0xff] %v131
  %134 = vst [vmem:[#allocation2 + $0x18] sm:$0xff] %v132
  %135 = vrot.lane.b32.xlu0 %v91, 127
  %v136 = vpop.permute.xlu0 %135
  %137 = vrot.lane.b32.xlu0 %v92, 127
  %v138 = vpop.permute.xlu0 %137
  %139 = vrot.lane.b32.xlu0 %v93, 127
  %v140 = vpop.permute.xlu0 %139
  %141 = vrot.lane.b32.xlu0 %v94, 127
  %v142 = vpop.permute.xlu0 %141
  %s143 = scalar_lea.vmem %s11, 4
  %v144 = vld [vmem:[%s143] sm:$0x1]
  %v146 = vlaneseq
  %v147 = vshrl.u32 %v146, 7
  %v148 = vsub.s32 0, %v147
  %v149 = vrot.slane %v144, %v148
  %v151 = vmul.f32 %v136, %v149
  %v152 = vmul.f32 %v138, %v149
  %v153 = vmul.f32 %v140, %v149
  %v154 = vmul.f32 %v142, %v149
  %v155 = vpack.c.bf16 %v152, %v151
  %v156 = vpack.c.bf16 %v154, %v153
  %157 = vst [vmem:[#allocation2 + $0x20] sm:$0xff] %v155
  %158 = vst [vmem:[#allocation2 + $0x28] sm:$0xff] %v156
  %v159 = vld [vmem:[%s1] sm:$0xf]
  %v160 = vld [vmem:[%s1 + $0x4] sm:$0xf]
  %v161 = vld [vmem:[%s1 + $0x8] sm:$0xf]
  %v162 = vld [vmem:[%s1 + $0xc] sm:$0xf]
  %v163 = vld [vmem:[%s1 + $0x10] sm:$0xf]
  %v164 = vld [vmem:[%s1 + $0x14] sm:$0xf]
  %v165 = vld [vmem:[%s1 + $0x18] sm:$0xf]
  %v166 = vld [vmem:[%s1 + $0x1c] sm:$0xf]
  %v167 = vld [vmem:[#allocation2] sm:$0xff]
  %v168 = vld [vmem:[#allocation2 + $0x8] sm:$0xff]
  %v169 = vld [vmem:[#allocation2 + $0x10] sm:$0xff]
  %v170 = vld [vmem:[#allocation2 + $0x18] sm:$0xff]
  %v171 = vld [vmem:[#allocation2 + $0x20] sm:$0xff]
  %v172 = vld [vmem:[#allocation2 + $0x28] sm:$0xff]
  %v173 = vld [vmem:[%s2] sm:$0xff]
  %v174 = vld [vmem:[%s2 + $0x8] sm:$0xff]
  %v175 = vld [vmem:[%s2 + $0x10] sm:$0xff]
  %v176 = vld [vmem:[%s2 + $0x18] sm:$0xff]
  %v177 = vld [vmem:[%s2 + $0x20] sm:$0xff]
  %v178 = vld [vmem:[%s2 + $0x28] sm:$0xff]
  %v179 = vld [vmem:[%s2 + $0x30] sm:$0xff]
  %v180 = vld [vmem:[%s2 + $0x38] sm:$0xff]
  %182 = vset.pattern.permute.xlu0 0
  %183 = vperm.xlu0 %182, %v173
  %v184 = vpop.permute.xlu0 %183
  %187 = vset.pattern.permute.xlu0 0
  %188 = vperm.xlu0 %187, %v174
  %v189 = vpop.permute.xlu0 %188
  %192 = vset.pattern.permute.xlu0 0
  %193 = vperm.xlu0 %192, %v175
  %v194 = vpop.permute.xlu0 %193
  %197 = vset.pattern.permute.xlu0 0
  %198 = vperm.xlu0 %197, %v176
  %v199 = vpop.permute.xlu0 %198
  %202 = vset.pattern.permute.xlu0 0
  %203 = vperm.xlu0 %202, %v177
  %v204 = vpop.permute.xlu0 %203
  %207 = vset.pattern.permute.xlu0 0
  %208 = vperm.xlu0 %207, %v178
  %v209 = vpop.permute.xlu0 %208
  %212 = vset.pattern.permute.xlu0 0
  %213 = vperm.xlu0 %212, %v179
  %v214 = vpop.permute.xlu0 %213
  %217 = vset.pattern.permute.xlu0 0
  %218 = vperm.xlu0 %217, %v180
  %v219 = vpop.permute.xlu0 %218
  %v229 = vunpack.c.l.b16 %v159
  %v230 = vunpack.c.l.b16 %v160
  %v231 = vunpack.c.l.b16 %v161
  %v232 = vunpack.c.l.b16 %v162
  %v233 = vunpack.c.l.b16 %v163
  %v234 = vunpack.c.l.b16 %v164
  %v235 = vunpack.c.l.b16 %v165
  %v236 = vunpack.c.l.b16 %v166
  %v237 = vpack.c.b16 %v230, %v229
  %v238 = vpack.c.b16 %v232, %v231
  %v239 = vpack.c.b16 %v234, %v233
  %v240 = vpack.c.b16 %v236, %v235
  %vm241 = vcmask 785408
  %v243 = vsel %vm241, %v237, 0
  %v246 = vsel %vm241, %v238, 0
  %v249 = vsel %vm241, %v239, 0
  %v252 = vsel %vm241, %v240, 0
  %254 = vmatprep.subr.bf16.mxu0 0
  %255 = vmatpush1.bf16.msra.mxu0 %v167
  %256 = vmatprep.subr.bf16.mxu0 0
  %257 = vmatpush1.bf16.msra.mxu0 %v168
  %258 = vmatprep.subr.bf16.mxu0 0
  %259 = vmatpush1.bf16.msra.mxu0 %v169
  %260 = vmatprep.subr.bf16.mxu0 0
  %261 = vmatpush1.bf16.msra.mxu0 %v170
  %262 = vmatprep.subr.bf16.mxu0 0
  %263 = vmatpush1.bf16.msra.mxu0 %v171
  %264 = vmatprep.subr.bf16.mxu0 0
  %265 = vmatpush1.bf16.msra.mxu0 %v172
  %266 = vmatprep.subr.bf16.mxu0 0
  %267 = vmatpush1.bf16.msra.mxu0 0
  %268 = vmatprep.subr.bf16.mxu0 0
  %269 = vmatpush1.bf16.msra.mxu0 0
  %270 = vmatprep.subr.bf16.mxu0 0
  %271 = vmatpush1.bf16.msra.mxu0 0
  %272 = vmatprep.subr.bf16.mxu0 0
  %273 = vmatpush1.bf16.msra.mxu0 0
  %274 = vmatprep.subr.bf16.mxu0 0
  %275 = vmatpush1.bf16.msra.mxu0 0
  %276 = vmatprep.subr.bf16.mxu0 0
  %277 = vmatpush1.bf16.msra.mxu0 0
  %278 = vmatprep.subr.bf16.mxu0 0
  %279 = vmatpush1.bf16.msra.mxu0 0
  %280 = vmatprep.subr.bf16.mxu0 0
  %281 = vmatpush1.bf16.msra.mxu0 0
  %282 = vmatprep.subr.bf16.mxu0 0
  %283 = vmatpush1.bf16.msra.mxu0 0
  %284 = vmatprep.subr.bf16.mxu0 0
  %285 = vmatpush1.bf16.msra.mxu0 0
  %286 = vmatprep.mubr.bf16.mxu0 0
  %287 = vmatmul.mubr.bf16.gmra.mrb[0].mxu0 %v243
  %v288 = vpop.f32.mrb[0].mxu0
  %v289 = vadd.f32 %v184, %v288
  %v290 = vpop.f32.mrb[0].mxu0
  %v291 = vpop.f32.mrb[0].mxu0
  %v292 = vadd.f32 %v189, %v291
  %v293 = vpop.f32.mrb[0].mxu0
  %294 = vmatprep.mubr.bf16.mxu0 0
  %295 = vmatmul.mubr.bf16.gmra.mrb[0].mxu0 %v246
  %v296 = vpop.f32.mrb[0].mxu0
  %v297 = vadd.f32 %v194, %v296
  %v298 = vpop.f32.mrb[0].mxu0
  %v299 = vpop.f32.mrb[0].mxu0
  %v300 = vadd.f32 %v199, %v299
  %v301 = vpop.f32.mrb[0].mxu0
  %302 = vmatprep.mubr.bf16.mxu0 0
  %303 = vmatmul.mubr.bf16.gmra.mrb[0].mxu0 %v249
  %v304 = vpop.f32.mrb[0].mxu0
  %v305 = vadd.f32 %v204, %v304
  %v306 = vpop.f32.mrb[0].mxu0
  %v307 = vpop.f32.mrb[0].mxu0
  %v308 = vadd.f32 %v209, %v307
  %v309 = vpop.f32.mrb[0].mxu0
  %310 = vmatprep.mubr.bf16.mxu0 0
  %311 = vmatmul.mubr.bf16.gmra.mrb[0].mxu0 %v252
  %v312 = vpop.f32.mrb[0].mxu0
  %v313 = vadd.f32 %v214, %v312
  %v314 = vpop.f32.mrb[0].mxu0
  %v315 = vpop.f32.mrb[0].mxu0
  %v316 = vadd.f32 %v219, %v315
  %v317 = vpop.f32.mrb[0].mxu0
  %318 = vdwg.mxu0
  %v319 = vmax.f32 %v289, 0.0
  %v320 = vmax.f32 %v292, 0.0
  %v321 = vmax.f32 %v297, 0.0
  %v322 = vmax.f32 %v300, 0.0
  %v323 = vmax.f32 %v305, 0.0
  %v324 = vmax.f32 %v308, 0.0
  %v325 = vmax.f32 %v313, 0.0
  %v326 = vmax.f32 %v316, 0.0
  %v327 = vld [vmem:[%s3] sm:$0xff]
  %v328 = vld [vmem:[%s3 + $0x8] sm:$0xff]
  %v329 = vld [vmem:[%s3 + $0x10] sm:$0xff]
  %v330 = vld [vmem:[%s3 + $0x18] sm:$0xff]
  %v331 = vld [vmem:[%s3 + $0x20] sm:$0xff]
  %v332 = vld [vmem:[%s3 + $0x28] sm:$0xff]
  %v333 = vld [vmem:[%s3 + $0x30] sm:$0xff]
  %v334 = vld [vmem:[%s3 + $0x38] sm:$0xff]
  %v335 = vadd.f32 %v319, %v327
  %v336 = vadd.f32 %v320, %v328
  %v337 = vadd.f32 %v321, %v329
  %v338 = vadd.f32 %v322, %v330
  %v339 = vadd.f32 %v323, %v331
  %v340 = vadd.f32 %v324, %v332
  %v341 = vadd.f32 %v325, %v333
  %v342 = vadd.f32 %v326, %v334
  %v343 = vld [vmem:[%s4] sm:$0xf]
  %v344 = vld [vmem:[%s4 + $0x4] sm:$0xf]
  %v345 = vld [vmem:[%s4 + $0x8] sm:$0xf]
  %v346 = vld [vmem:[%s4 + $0xc] sm:$0xf]
  %v347 = vld [vmem:[%s4 + $0x10] sm:$0xf]
  %v348 = vld [vmem:[%s4 + $0x14] sm:$0xf]
  %v349 = vld [vmem:[%s4 + $0x18] sm:$0xf]
  %v350 = vld [vmem:[%s4 + $0x1c] sm:$0xf]
  %v351 = vld [vmem:[%s4 + $0x20] sm:$0xf]
  %v352 = vld [vmem:[%s4 + $0x24] sm:$0xf]
  %v353 = vld [vmem:[%s4 + $0x28] sm:$0xf]
  %v354 = vld [vmem:[%s4 + $0x2c] sm:$0xf]
  %v355 = vld [vmem:[%s4 + $0x30] sm:$0xf]
  %v356 = vld [vmem:[%s4 + $0x34] sm:$0xf]
  %v357 = vld [vmem:[%s4 + $0x38] sm:$0xf]
  %v358 = vld [vmem:[%s4 + $0x3c] sm:$0xf]
  %v359 = vld [vmem:[%s4 + $0x40] sm:$0xf]
  %v360 = vld [vmem:[%s4 + $0x44] sm:$0xf]
  %v361 = vld [vmem:[%s4 + $0x48] sm:$0xf]
  %v362 = vld [vmem:[%s4 + $0x4c] sm:$0xf]
  %v363 = vld [vmem:[%s4 + $0x50] sm:$0xf]
  %v364 = vld [vmem:[%s4 + $0x54] sm:$0xf]
  %v365 = vld [vmem:[%s4 + $0x58] sm:$0xf]
  %v366 = vld [vmem:[%s4 + $0x5c] sm:$0xf]
  %v367 = vpack.c.bf16 %v336, %v335
  %v368 = vpack.c.bf16 %v338, %v337
  %v369 = vpack.c.bf16 %v340, %v339
  %v370 = vpack.c.bf16 %v342, %v341
  %v371 = vld [vmem:[%s5] sm:$0xff]
  %v372 = vld [vmem:[%s5 + $0x8] sm:$0xff]
  %v373 = vld [vmem:[%s5 + $0x10] sm:$0xff]
  %v374 = vld [vmem:[%s5 + $0x18] sm:$0xff]
  %v375 = vld [vmem:[%s5 + $0x20] sm:$0xff]
  %v376 = vld [vmem:[%s5 + $0x28] sm:$0xff]
  %v377 = vld [vmem:[%s5 + $0x30] sm:$0xff]
  %v378 = vld [vmem:[%s5 + $0x38] sm:$0xff]
  %v379 = vld [vmem:[%s5 + $0x40] sm:$0xff]
  %v380 = vld [vmem:[%s5 + $0x48] sm:$0xff]
  %v381 = vld [vmem:[%s5 + $0x50] sm:$0xff]
  %v382 = vld [vmem:[%s5 + $0x58] sm:$0xff]
  %v383 = vld [vmem:[%s5 + $0x60] sm:$0xff]
  %v384 = vld [vmem:[%s5 + $0x68] sm:$0xff]
  %v385 = vld [vmem:[%s5 + $0x70] sm:$0xff]
  %v386 = vld [vmem:[%s5 + $0x78] sm:$0xff]
  %v387 = vld [vmem:[%s5 + $0x80] sm:$0xff]
  %v388 = vld [vmem:[%s5 + $0x88] sm:$0xff]
  %v389 = vld [vmem:[%s5 + $0x90] sm:$0xff]
  %v390 = vld [vmem:[%s5 + $0x98] sm:$0xff]
  %v391 = vld [vmem:[%s5 + $0xa0] sm:$0xff]
  %v392 = vld [vmem:[%s5 + $0xa8] sm:$0xff]
  %v393 = vld [vmem:[%s5 + $0xb0] sm:$0xff]
  %v394 = vld [vmem:[%s5 + $0xb8] sm:$0xff]
  %396 = vset.pattern.permute.xlu0 0
  %397 = vperm.xlu0 %396, %v371
  %v398 = vpop.permute.xlu0 %397
  %401 = vset.pattern.permute.xlu0 0
  %402 = vperm.xlu0 %401, %v372
  %v403 = vpop.permute.xlu0 %402
  %406 = vset.pattern.permute.xlu0 0
  %407 = vperm.xlu0 %406, %v373
  %v408 = vpop.permute.xlu0 %407
  %411 = vset.pattern.permute.xlu0 0
  %412 = vperm.xlu0 %411, %v374
  %v413 = vpop.permute.xlu0 %412
  %416 = vset.pattern.permute.xlu0 0
  %417 = vperm.xlu0 %416, %v375
  %v418 = vpop.permute.xlu0 %417
  %421 = vset.pattern.permute.xlu0 0
  %422 = vperm.xlu0 %421, %v376
  %v423 = vpop.permute.xlu0 %422
  %426 = vset.pattern.permute.xlu0 0
  %427 = vperm.xlu0 %426, %v377
  %v428 = vpop.permute.xlu0 %427
  %431 = vset.pattern.permute.xlu0 0
  %432 = vperm.xlu0 %431, %v378
  %v433 = vpop.permute.xlu0 %432
  %436 = vset.pattern.permute.xlu0 0
  %437 = vperm.xlu0 %436, %v379
  %v438 = vpop.permute.xlu0 %437
  %441 = vset.pattern.permute.xlu0 0
  %442 = vperm.xlu0 %441, %v380
  %v443 = vpop.permute.xlu0 %442
  %446 = vset.pattern.permute.xlu0 0
  %447 = vperm.xlu0 %446, %v381
  %v448 = vpop.permute.xlu0 %447
  %451 = vset.pattern.permute.xlu0 0
  %452 = vperm.xlu0 %451, %v382
  %v453 = vpop.permute.xlu0 %452
  %456 = vset.pattern.permute.xlu0 0
  %457 = vperm.xlu0 %456, %v383
  %v458 = vpop.permute.xlu0 %457
  %461 = vset.pattern.permute.xlu0 0
  %462 = vperm.xlu0 %461, %v384
  %v463 = vpop.permute.xlu0 %462
  %466 = vset.pattern.permute.xlu0 0
  %467 = vperm.xlu0 %466, %v385
  %v468 = vpop.permute.xlu0 %467
  %471 = vset.pattern.permute.xlu0 0
  %472 = vperm.xlu0 %471, %v386
  %v473 = vpop.permute.xlu0 %472
  %476 = vset.pattern.permute.xlu0 0
  %477 = vperm.xlu0 %476, %v387
  %v478 = vpop.permute.xlu0 %477
  %481 = vset.pattern.permute.xlu0 0
  %482 = vperm.xlu0 %481, %v388
  %v483 = vpop.permute.xlu0 %482
  %486 = vset.pattern.permute.xlu0 0
  %487 = vperm.xlu0 %486, %v389
  %v488 = vpop.permute.xlu0 %487
  %491 = vset.pattern.permute.xlu0 0
  %492 = vperm.xlu0 %491, %v390
  %v493 = vpop.permute.xlu0 %492
  %496 = vset.pattern.permute.xlu0 0
  %497 = vperm.xlu0 %496, %v391
  %v498 = vpop.permute.xlu0 %497
  %501 = vset.pattern.permute.xlu0 0
  %502 = vperm.xlu0 %501, %v392
  %v503 = vpop.permute.xlu0 %502
  %506 = vset.pattern.permute.xlu0 0
  %507 = vperm.xlu0 %506, %v393
  %v508 = vpop.permute.xlu0 %507
  %511 = vset.pattern.permute.xlu0 0
  %512 = vperm.xlu0 %511, %v394
  %v513 = vpop.permute.xlu0 %512
  %v539 = vunpack.c.l.b16 %v343
  %v540 = vunpack.c.l.b16 %v344
  %v541 = vunpack.c.l.b16 %v345
  %v542 = vunpack.c.l.b16 %v346
  %v543 = vunpack.c.l.b16 %v347
  %v544 = vunpack.c.l.b16 %v348
  %v545 = vunpack.c.l.b16 %v349
  %v546 = vunpack.c.l.b16 %v350
  %v547 = vunpack.c.l.b16 %v351
  %v548 = vunpack.c.l.b16 %v352
  %v549 = vunpack.c.l.b16 %v353
  %v550 = vunpack.c.l.b16 %v354
  %v551 = vunpack.c.l.b16 %v355
  %v552 = vunpack.c.l.b16 %v356
  %v553 = vunpack.c.l.b16 %v357
  %v554 = vunpack.c.l.b16 %v358
  %v555 = vunpack.c.l.b16 %v359
  %v556 = vunpack.c.l.b16 %v360
  %v557 = vunpack.c.l.b16 %v361
  %v558 = vunpack.c.l.b16 %v362
  %v559 = vunpack.c.l.b16 %v363
  %v560 = vunpack.c.l.b16 %v364
  %v561 = vunpack.c.l.b16 %v365
  %v562 = vunpack.c.l.b16 %v366
  %v563 = vpack.c.b16 %v540, %v539
  %v564 = vpack.c.b16 %v542, %v541
  %v565 = vpack.c.b16 %v544, %v543
  %v566 = vpack.c.b16 %v546, %v545
  %v567 = vpack.c.b16 %v548, %v547
  %v568 = vpack.c.b16 %v550, %v549
  %v569 = vpack.c.b16 %v552, %v551
  %v570 = vpack.c.b16 %v554, %v553
  %v571 = vpack.c.b16 %v556, %v555
  %v572 = vpack.c.b16 %v558, %v557
  %v573 = vpack.c.b16 %v560, %v559
  %v574 = vpack.c.b16 %v562, %v561
  %vm575 = vcmask 523264
  %v577 = vsel %vm575, %v563, 0
  %v580 = vsel %vm575, %v564, 0
  %v583 = vsel %vm575, %v565, 0
  %v586 = vsel %vm575, %v566, 0
  %v589 = vsel %vm575, %v567, 0
  %v592 = vsel %vm575, %v568, 0
  %v595 = vsel %vm575, %v569, 0
  %v598 = vsel %vm575, %v570, 0
  %v601 = vsel %vm575, %v571, 0
  %v604 = vsel %vm575, %v572, 0
  %v607 = vsel %vm575, %v573, 0
  %v610 = vsel %vm575, %v574, 0
  %612 = vmatprep.subr.bf16.mxu0 0
  %613 = vmatpush1.bf16.msra.mxu0 %v367
  %614 = vmatprep.subr.bf16.mxu0 0
  %615 = vmatpush1.bf16.msra.mxu0 %v368
  %616 = vmatprep.subr.bf16.mxu0 0
  %617 = vmatpush1.bf16.msra.mxu0 %v369
  %618 = vmatprep.subr.bf16.mxu0 0
  %619 = vmatpush1.bf16.msra.mxu0 %v370
  %620 = vmatprep.subr.bf16.mxu0 0
  %621 = vmatpush1.bf16.msra.mxu0 0
  %622 = vmatprep.subr.bf16.mxu0 0
  %623 = vmatpush1.bf16.msra.mxu0 0
  %624 = vmatprep.subr.bf16.mxu0 0
  %625 = vmatpush1.bf16.msra.mxu0 0
  %626 = vmatprep.subr.bf16.mxu0 0
  %627 = vmatpush1.bf16.msra.mxu0 0
  %628 = vmatprep.subr.bf16.mxu0 0
  %629 = vmatpush1.bf16.msra.mxu0 0
  %630 = vmatprep.subr.bf16.mxu0 0
  %631 = vmatpush1.bf16.msra.mxu0 0
  %632 = vmatprep.subr.bf16.mxu0 0
  %633 = vmatpush1.bf16.msra.mxu0 0
  %634 = vmatprep.subr.bf16.mxu0 0
  %635 = vmatpush1.bf16.msra.mxu0 0
  %636 = vmatprep.subr.bf16.mxu0 0
  %637 = vmatpush1.bf16.msra.mxu0 0
  %638 = vmatprep.subr.bf16.mxu0 0
  %639 = vmatpush1.bf16.msra.mxu0 0
  %640 = vmatprep.subr.bf16.mxu0 0
  %641 = vmatpush1.bf16.msra.mxu0 0
  %642 = vmatprep.subr.bf16.mxu0 0
  %643 = vmatpush1.bf16.msra.mxu0 0
  %644 = vmatprep.mubr.bf16.mxu0 0
  %645 = vmatmul.mubr.bf16.gmra.mrb[0].mxu0 %v577
  %v646 = vpop.f32.mrb[0].mxu0
  %v647 = vadd.f32 %v398, %v646
  %v648 = vpop.f32.mrb[0].mxu0
  %v649 = vpop.f32.mrb[0].mxu0
  %v650 = vadd.f32 %v403, %v649
  %v651 = vpop.f32.mrb[0].mxu0
  %652 = vmatprep.mubr.bf16.mxu0 0
  %653 = vmatmul.mubr.bf16.gmra.mrb[0].mxu0 %v580
  %v654 = vpop.f32.mrb[0].mxu0
  %v655 = vadd.f32 %v408, %v654
  %v656 = vpop.f32.mrb[0].mxu0
  %v657 = vpop.f32.mrb[0].mxu0
  %v658 = vadd.f32 %v413, %v657
  %v659 = vpop.f32.mrb[0].mxu0
  %660 = vmatprep.mubr.bf16.mxu0 0
  %661 = vmatmul.mubr.bf16.gmra.mrb[0].mxu0 %v583
  %v662 = vpop.f32.mrb[0].mxu0
  %v663 = vadd.f32 %v418, %v662
  %v664 = vpop.f32.mrb[0].mxu0
  %v665 = vpop.f32.mrb[0].mxu0
  %v666 = vadd.f32 %v423, %v665
  %v667 = vpop.f32.mrb[0].mxu0
  %668 = vmatprep.mubr.bf16.mxu0 0
  %669 = vmatmul.mubr.bf16.gmra.mrb[0].mxu0 %v586
  %v670 = vpop.f32.mrb[0].mxu0
  %v671 = vadd.f32 %v428, %v670
  %v672 = vpop.f32.mrb[0].mxu0
  %v673 = vpop.f32.mrb[0].mxu0
  %v674 = vadd.f32 %v433, %v673
  %v675 = vpop.f32.mrb[0].mxu0
  %676 = vmatprep.mubr.bf16.mxu0 0
  %677 = vmatmul.mubr.bf16.gmra.mrb[0].mxu0 %v589
  %v678 = vpop.f32.mrb[0].mxu0
  %v679 = vadd.f32 %v438, %v678
  %v680 = vpop.f32.mrb[0].mxu0
  %v681 = vpop.f32.mrb[0].mxu0
  %v682 = vadd.f32 %v443, %v681
  %v683 = vpop.f32.mrb[0].mxu0
  %684 = vmatprep.mubr.bf16.mxu0 0
  %685 = vmatmul.mubr.bf16.gmra.mrb[0].mxu0 %v592
  %v686 = vpop.f32.mrb[0].mxu0
  %v687 = vadd.f32 %v448, %v686
  %v688 = vpop.f32.mrb[0].mxu0
  %v689 = vpop.f32.mrb[0].mxu0
  %v690 = vadd.f32 %v453, %v689
  %v691 = vpop.f32.mrb[0].mxu0
  %692 = vmatprep.mubr.bf16.mxu0 0
  %693 = vmatmul.mubr.bf16.gmra.mrb[0].mxu0 %v595
  %v694 = vpop.f32.mrb[0].mxu0
  %v695 = vadd.f32 %v458, %v694
  %v696 = vpop.f32.mrb[0].mxu0
  %v697 = vpop.f32.mrb[0].mxu0
  %v698 = vadd.f32 %v463, %v697
  %v699 = vpop.f32.mrb[0].mxu0
  %700 = vmatprep.mubr.bf16.mxu0 0
  %701 = vmatmul.mubr.bf16.gmra.mrb[0].mxu0 %v598
  %v702 = vpop.f32.mrb[0].mxu0
  %v703 = vadd.f32 %v468, %v702
  %v704 = vpop.f32.mrb[0].mxu0
  %v705 = vpop.f32.mrb[0].mxu0
  %v706 = vadd.f32 %v473, %v705
  %v707 = vpop.f32.mrb[0].mxu0
  %708 = vmatprep.mubr.bf16.mxu0 0
  %709 = vmatmul.mubr.bf16.gmra.mrb[0].mxu0 %v601
  %v710 = vpop.f32.mrb[0].mxu0
  %v711 = vadd.f32 %v478, %v710
  %v712 = vpop.f32.mrb[0].mxu0
  %v713 = vpop.f32.mrb[0].mxu0
  %v714 = vadd.f32 %v483, %v713
  %v715 = vpop.f32.mrb[0].mxu0
  %716 = vmatprep.mubr.bf16.mxu0 0
  %717 = vmatmul.mubr.bf16.gmra.mrb[0].mxu0 %v604
  %v718 = vpop.f32.mrb[0].mxu0
  %v719 = vadd.f32 %v488, %v718
  %v720 = vpop.f32.mrb[0].mxu0
  %v721 = vpop.f32.mrb[0].mxu0
  %v722 = vadd.f32 %v493, %v721
  %v723 = vpop.f32.mrb[0].mxu0
  %724 = vmatprep.mubr.bf16.mxu0 0
  %725 = vmatmul.mubr.bf16.gmra.mrb[0].mxu0 %v607
  %v726 = vpop.f32.mrb[0].mxu0
  %v727 = vadd.f32 %v498, %v726
  %v728 = vpop.f32.mrb[0].mxu0
  %v729 = vpop.f32.mrb[0].mxu0
  %v730 = vadd.f32 %v503, %v729
  %v731 = vpop.f32.mrb[0].mxu0
  %732 = vmatprep.mubr.bf16.mxu0 0
  %733 = vmatmul.mubr.bf16.gmra.mrb[0].mxu0 %v610
  %v734 = vpop.f32.mrb[0].mxu0
  %v735 = vadd.f32 %v508, %v734
  %v736 = vpop.f32.mrb[0].mxu0
  %v737 = vpop.f32.mrb[0].mxu0
  %v738 = vadd.f32 %v513, %v737
  %v739 = vpop.f32.mrb[0].mxu0
  %740 = vdwg.mxu0
  %v741 = vld [vmem:[%s8] sm:$0xff]
  %v742 = vld [vmem:[%s8 + $0x8] sm:$0xff]
  %v743 = vld [vmem:[%s8 + $0x10] sm:$0xff]
  %v744 = vld [vmem:[%s8 + $0x18] sm:$0xff]
  %v745 = vld [vmem:[%s8 + $0x20] sm:$0xff]
  %v746 = vld [vmem:[%s8 + $0x28] sm:$0xff]
  %v747 = vld [vmem:[%s8 + $0x30] sm:$0xff]
  %v748 = vld [vmem:[%s8 + $0x38] sm:$0xff]
  %v749 = vld [vmem:[%s8 + $0x40] sm:$0xff]
  %v750 = vld [vmem:[%s8 + $0x48] sm:$0xff]
  %v751 = vld [vmem:[%s8 + $0x50] sm:$0xff]
  %v752 = vld [vmem:[%s8 + $0x58] sm:$0xff]
  %v753 = vld [vmem:[%s8 + $0x60] sm:$0xff]
  %v754 = vld [vmem:[%s8 + $0x68] sm:$0xff]
  %v755 = vld [vmem:[%s8 + $0x70] sm:$0xff]
  %v756 = vld [vmem:[%s8 + $0x78] sm:$0xff]
  %757 = vxpose.xlu0.b32.start [1/16] %v647, 128
  %758 = vxpose.xlu0.b32.cont [2/16] %v650, 128
  %759 = vxpose.xlu0.b32.cont [3/16] %v655, 128
  %760 = vxpose.xlu0.b32.cont [4/16] %v658, 128
  %761 = vxpose.xlu0.b32.cont [5/16] 0.0, 128
  %762 = vxpose.xlu0.b32.cont [6/16] 0.0, 128
  %763 = vxpose.xlu0.b32.cont [7/16] 0.0, 128
  %764 = vxpose.xlu0.b32.cont [8/16] 0.0, 128
  %765 = vxpose.xlu0.b32.cont [9/16] 0.0, 128
  %766 = vxpose.xlu0.b32.cont [10/16] 0.0, 128
  %767 = vxpose.xlu0.b32.cont [11/16] 0.0, 128
  %768 = vxpose.xlu0.b32.cont [12/16] 0.0, 128
  %769 = vxpose.xlu0.b32.cont [13/16] 0.0, 128
  %770 = vxpose.xlu0.b32.cont [14/16] 0.0, 128
  %771 = vxpose.xlu0.b32.cont [15/16] 0.0, 128
  %772 = vxpose.xlu0.b32.end [16/16] 0.0, 128
  %v773 = vpop.trf.xlu0
  %v774 = vpop.trf.xlu0
  %v775 = vpop.trf.xlu0
  %v776 = vpop.trf.xlu0
  %v777 = vpop.trf.xlu0
  %v778 = vpop.trf.xlu0
  %v779 = vpop.trf.xlu0
  %v780 = vpop.trf.xlu0
  %v781 = vpop.trf.xlu0
  %v782 = vpop.trf.xlu0
  %v783 = vpop.trf.xlu0
  %v784 = vpop.trf.xlu0
  %v785 = vpop.trf.xlu0
  %v786 = vpop.trf.xlu0
  %v787 = vpop.trf.xlu0
  %v788 = vpop.trf.xlu0
  %v789 = vpack.c.bf16 %v774, %v773
  %v790 = vpack.c.bf16 %v776, %v775
  %v791 = vpack.c.bf16 %v778, %v777
  %v792 = vpack.c.bf16 %v780, %v779
  %v793 = vpack.c.bf16 %v782, %v781
  %v794 = vpack.c.bf16 %v784, %v783
  %v795 = vpack.c.bf16 %v786, %v785
  %v796 = vpack.c.bf16 %v788, %v787
  %v797 = vpack.c.bf16 %v682, %v679
  %v798 = vpack.c.bf16 %v690, %v687
  %vm799 = vcmask 261120
  %v801 = vsel %vm799, %v789, 0
  %v804 = vsel %vm799, %v790, 0
  %v807 = vsel %vm799, %v791, 0
  %v810 = vsel %vm799, %v792, 0
  %v813 = vsel %vm799, %v793, 0
  %v816 = vsel %vm799, %v794, 0
  %v819 = vsel %vm799, %v795, 0
  %v822 = vsel %vm799, %v796, 0
  %824 = vmatprep.subr.bf16.mxu0 0
  %825 = vmatpush1.bf16.msra.mxu0 %v797
  %826 = vmatprep.subr.bf16.mxu0 0
  %827 = vmatpush1.bf16.msra.mxu0 %v798
  %828 = vmatprep.subr.bf16.mxu0 0
  %829 = vmatpush1.bf16.msra.mxu0 0
  %830 = vmatprep.subr.bf16.mxu0 0
  %831 = vmatpush1.bf16.msra.mxu0 0
  %832 = vmatprep.subr.bf16.mxu0 0
  %833 = vmatpush1.bf16.msra.mxu0 0
  %834 = vmatprep.subr.bf16.mxu0 0
  %835 = vmatpush1.bf16.msra.mxu0 0
  %836 = vmatprep.subr.bf16.mxu0 0
  %837 = vmatpush1.bf16.msra.mxu0 0
  %838 = vmatprep.subr.bf16.mxu0 0
  %839 = vmatpush1.bf16.msra.mxu0 0
  %840 = vmatprep.subr.bf16.mxu0 0
  %841 = vmatpush1.bf16.msra.mxu0 0
  %842 = vmatprep.subr.bf16.mxu0 0
  %843 = vmatpush1.bf16.msra.mxu0 0
  %844 = vmatprep.subr.bf16.mxu0 0
  %845 = vmatpush1.bf16.msra.mxu0 0
  %846 = vmatprep.subr.bf16.mxu0 0
  %847 = vmatpush1.bf16.msra.mxu0 0
  %848 = vmatprep.subr.bf16.mxu0 0
  %849 = vmatpush1.bf16.msra.mxu0 0
  %850 = vmatprep.subr.bf16.mxu0 0
  %851 = vmatpush1.bf16.msra.mxu0 0
  %852 = vmatprep.subr.bf16.mxu0 0
  %853 = vmatpush1.bf16.msra.mxu0 0
  %854 = vmatprep.subr.bf16.mxu0 0
  %855 = vmatpush1.bf16.msra.mxu0 0
  %856 = vmatprep.mubr.bf16.mxu0 0
  %857 = vmatmul.mubr.bf16.gmra.mrb[0].mxu0 %v801
  %v858 = vpop.f32.mrb[0].mxu0
  %v859 = vadd.f32 0.0, %v858
  %v860 = vpop.f32.mrb[0].mxu0
  %v861 = vpop.f32.mrb[0].mxu0
  %v862 = vadd.f32 0.0, %v861
  %v863 = vpop.f32.mrb[0].mxu0
  %864 = vmatprep.mubr.bf16.mxu0 0
  %865 = vmatmul.mubr.bf16.gmra.mrb[0].mxu0 %v804
  %v866 = vpop.f32.mrb[0].mxu0
  %v867 = vadd.f32 0.0, %v866
  %v868 = vpop.f32.mrb[0].mxu0
  %v869 = vpop.f32.mrb[0].mxu0
  %v870 = vadd.f32 0.0, %v869
  %v871 = vpop.f32.mrb[0].mxu0
  %872 = vmatprep.mubr.bf16.mxu0 0
  %873 = vmatmul.mubr.bf16.gmra.mrb[0].mxu0 %v807
  %v874 = vpop.f32.mrb[0].mxu0
  %v875 = vadd.f32 0.0, %v874
  %v876 = vpop.f32.mrb[0].mxu0
  %v877 = vpop.f32.mrb[0].mxu0
  %v878 = vadd.f32 0.0, %v877
  %v879 = vpop.f32.mrb[0].mxu0
  %880 = vmatprep.mubr.bf16.mxu0 0
  %881 = vmatmul.mubr.bf16.gmra.mrb[0].mxu0 %v810
  %v882 = vpop.f32.mrb[0].mxu0
  %v883 = vadd.f32 0.0, %v882
  %v884 = vpop.f32.mrb[0].mxu0
  %v885 = vpop.f32.mrb[0].mxu0
  %v886 = vadd.f32 0.0, %v885
  %v887 = vpop.f32.mrb[0].mxu0
  %888 = vmatprep.mubr.bf16.mxu0 0
  %889 = vmatmul.mubr.bf16.gmra.mrb[0].mxu0 %v813
  %v890 = vpop.f32.mrb[0].mxu0
  %v891 = vadd.f32 0.0, %v890
  %v892 = vpop.f32.mrb[0].mxu0
  %v893 = vpop.f32.mrb[0].mxu0
  %v894 = vadd.f32 0.0, %v893
  %v895 = vpop.f32.mrb[0].mxu0
  %896 = vmatprep.mubr.bf16.mxu0 0
  %897 = vmatmul.mubr.bf16.gmra.mrb[0].mxu0 %v816
  %v898 = vpop.f32.mrb[0].mxu0
  %v899 = vadd.f32 0.0, %v898
  %v900 = vpop.f32.mrb[0].mxu0
  %v901 = vpop.f32.mrb[0].mxu0
  %v902 = vadd.f32 0.0, %v901
  %v903 = vpop.f32.mrb[0].mxu0
  %904 = vmatprep.mubr.bf16.mxu0 0
  %905 = vmatmul.mubr.bf16.gmra.mrb[0].mxu0 %v819
  %v906 = vpop.f32.mrb[0].mxu0
  %v907 = vadd.f32 0.0, %v906
  %v908 = vpop.f32.mrb[0].mxu0
  %v909 = vpop.f32.mrb[0].mxu0
  %v910 = vadd.f32 0.0, %v909
  %v911 = vpop.f32.mrb[0].mxu0
  %912 = vmatprep.mubr.bf16.mxu0 0
  %913 = vmatmul.mubr.bf16.gmra.mrb[0].mxu0 %v822
  %v914 = vpop.f32.mrb[0].mxu0
  %v915 = vadd.f32 0.0, %v914
  %v916 = vpop.f32.mrb[0].mxu0
  %v917 = vpop.f32.mrb[0].mxu0
  %v918 = vadd.f32 0.0, %v917
  %v919 = vpop.f32.mrb[0].mxu0
  %920 = vdwg.mxu0
  %v921 = vmul.f32 %v859, 0.17677669
  %v922 = vmul.f32 %v862, 0.17677669
  %v923 = vmul.f32 %v867, 0.17677669
  %v924 = vmul.f32 %v870, 0.17677669
  %v925 = vmul.f32 %v875, 0.17677669
  %v926 = vmul.f32 %v878, 0.17677669
  %v927 = vmul.f32 %v883, 0.17677669
  %v928 = vmul.f32 %v886, 0.17677669
  %v929 = vmul.f32 %v891, 0.17677669
  %v930 = vmul.f32 %v894, 0.17677669
  %v931 = vmul.f32 %v899, 0.17677669
  %v932 = vmul.f32 %v902, 0.17677669
  %v933 = vmul.f32 %v907, 0.17677669
  %v934 = vmul.f32 %v910, 0.17677669
  %v935 = vmul.f32 %v915, 0.17677669
  %v936 = vmul.f32 %v918, 0.17677669
  %v937 = vadd.f32 %v921, %v741
  %v938 = vadd.f32 %v922, %v742
  %v939 = vadd.f32 %v923, %v743
  %v940 = vadd.f32 %v924, %v744
  %v941 = vadd.f32 %v925, %v745
  %v942 = vadd.f32 %v926, %v746
  %v943 = vadd.f32 %v927, %v747
  %v944 = vadd.f32 %v928, %v748
  %v945 = vadd.f32 %v929, %v749
  %v946 = vadd.f32 %v930, %v750
  %v947 = vadd.f32 %v931, %v751
  %v948 = vadd.f32 %v932, %v752
  %v949 = vadd.f32 %v933, %v753
  %v950 = vadd.f32 %v934, %v754
  %v951 = vadd.f32 %v935, %v755
  %v952 = vadd.f32 %v936, %v756
  %953 = vmax.xlane.f32.xlu0 %v937
  %v954 = vpop.xlane.xlu0 %953
  %955 = vmax.xlane.f32.xlu0 %v938
  %v956 = vpop.xlane.xlu0 %955
  %957 = vmax.xlane.f32.xlu0 %v939
  %v958 = vpop.xlane.xlu0 %957
  %959 = vmax.xlane.f32.xlu0 %v940
  %v960 = vpop.xlane.xlu0 %959
  %961 = vmax.xlane.f32.xlu0 %v941
  %v962 = vpop.xlane.xlu0 %961
  %963 = vmax.xlane.f32.xlu0 %v942
  %v964 = vpop.xlane.xlu0 %963
  %965 = vmax.xlane.f32.xlu0 %v943
  %v966 = vpop.xlane.xlu0 %965
  %967 = vmax.xlane.f32.xlu0 %v944
  %v968 = vpop.xlane.xlu0 %967
  %969 = vmax.xlane.f32.xlu0 %v945
  %v970 = vpop.xlane.xlu0 %969
  %971 = vmax.xlane.f32.xlu0 %v946
  %v972 = vpop.xlane.xlu0 %971
  %973 = vmax.xlane.f32.xlu0 %v947
  %v974 = vpop.xlane.xlu0 %973
  %975 = vmax.xlane.f32.xlu0 %v948
  %v976 = vpop.xlane.xlu0 %975
  %977 = vmax.xlane.f32.xlu0 %v949
  %v978 = vpop.xlane.xlu0 %977
  %979 = vmax.xlane.f32.xlu0 %v950
  %v980 = vpop.xlane.xlu0 %979
  %981 = vmax.xlane.f32.xlu0 %v951
  %v982 = vpop.xlane.xlu0 %981
  %983 = vmax.xlane.f32.xlu0 %v952
  %v984 = vpop.xlane.xlu0 %983
  %v985 = vsub.f32 %v937, %v954
  %v986 = vsub.f32 %v938, %v956
  %v987 = vsub.f32 %v939, %v958
  %v988 = vsub.f32 %v940, %v960
  %v989 = vsub.f32 %v941, %v962
  %v990 = vsub.f32 %v942, %v964
  %v991 = vsub.f32 %v943, %v966
  %v992 = vsub.f32 %v944, %v968
  %v993 = vsub.f32 %v945, %v970
  %v994 = vsub.f32 %v946, %v972
  %v995 = vsub.f32 %v947, %v974
  %v996 = vsub.f32 %v948, %v976
  %v997 = vsub.f32 %v949, %v978
  %v998 = vsub.f32 %v950, %v980
  %v999 = vsub.f32 %v951, %v982
  %v1000 = vsub.f32 %v952, %v984
  %v1001 = vmul.f32 %v985, 1.442695
  %v1002 = vpow.pop %v1001
  %v1003 = vmul.f32 %v986, 1.442695
  %v1004 = vpow.pop %v1003
  %v1005 = vmul.f32 %v987, 1.442695
  %v1006 = vpow.pop %v1005
  %v1007 = vmul.f32 %v988, 1.442695
  %v1008 = vpow.pop %v1007
  %v1009 = vmul.f32 %v989, 1.442695
  %v1010 = vpow.pop %v1009
  %v1011 = vmul.f32 %v990, 1.442695
  %v1012 = vpow.pop %v1011
  %v1013 = vmul.f32 %v991, 1.442695
  %v1014 = vpow.pop %v1013
  %v1015 = vmul.f32 %v992, 1.442695
  %v1016 = vpow.pop %v1015
  %v1017 = vmul.f32 %v993, 1.442695
  %v1018 = vpow.pop %v1017
  %v1019 = vmul.f32 %v994, 1.442695
  %v1020 = vpow.pop %v1019
  %v1021 = vmul.f32 %v995, 1.442695
  %v1022 = vpow.pop %v1021
  %v1023 = vmul.f32 %v996, 1.442695
  %v1024 = vpow.pop %v1023
  %v1025 = vmul.f32 %v997, 1.442695
  %v1026 = vpow.pop %v1025
  %v1027 = vmul.f32 %v998, 1.442695
  %v1028 = vpow.pop %v1027
  %v1029 = vmul.f32 %v999, 1.442695
  %v1030 = vpow.pop %v1029
  %v1031 = vmul.f32 %v1000, 1.442695
  %v1032 = vpow.pop %v1031
  %1033 = vadd.xlane.f32.xlu0 %v1002
  %v1034 = vpop.xlane.xlu0 %1033
  %1035 = vadd.xlane.f32.xlu0 %v1004
  %v1036 = vpop.xlane.xlu0 %1035
  %1037 = vadd.xlane.f32.xlu0 %v1006
  %v1038 = vpop.xlane.xlu0 %1037
  %1039 = vadd.xlane.f32.xlu0 %v1008
  %v1040 = vpop.xlane.xlu0 %1039
  %1041 = vadd.xlane.f32.xlu0 %v1010
  %v1042 = vpop.xlane.xlu0 %1041
  %1043 = vadd.xlane.f32.xlu0 %v1012
  %v1044 = vpop.xlane.xlu0 %1043
  %1045 = vadd.xlane.f32.xlu0 %v1014
  %v1046 = vpop.xlane.xlu0 %1045
  %1047 = vadd.xlane.f32.xlu0 %v1016
  %v1048 = vpop.xlane.xlu0 %1047
  %1049 = vadd.xlane.f32.xlu0 %v1018
  %v1050 = vpop.xlane.xlu0 %1049
  %1051 = vadd.xlane.f32.xlu0 %v1020
  %v1052 = vpop.xlane.xlu0 %1051
  %1053 = vadd.xlane.f32.xlu0 %v1022
  %v1054 = vpop.xlane.xlu0 %1053
  %1055 = vadd.xlane.f32.xlu0 %v1024
  %v1056 = vpop.xlane.xlu0 %1055
  %1057 = vadd.xlane.f32.xlu0 %v1026
  %v1058 = vpop.xlane.xlu0 %1057
  %1059 = vadd.xlane.f32.xlu0 %v1028
  %v1060 = vpop.xlane.xlu0 %1059
  %1061 = vadd.xlane.f32.xlu0 %v1030
  %v1062 = vpop.xlane.xlu0 %1061
  %1063 = vadd.xlane.f32.xlu0 %v1032
  %v1064 = vpop.xlane.xlu0 %1063
  %v1065 = vrcp.pop %v1034
  %v1066 = vrcp.pop %v1036
  %v1067 = vrcp.pop %v1038
  %v1068 = vrcp.pop %v1040
  %v1069 = vrcp.pop %v1042
  %v1070 = vrcp.pop %v1044
  %v1071 = vrcp.pop %v1046
  %v1072 = vrcp.pop %v1048
  %v1073 = vrcp.pop %v1050
  %v1074 = vrcp.pop %v1052
  %v1075 = vrcp.pop %v1054
  %v1076 = vrcp.pop %v1056
  %v1077 = vrcp.pop %v1058
  %v1078 = vrcp.pop %v1060
  %v1079 = vrcp.pop %v1062
  %v1080 = vrcp.pop %v1064
  %v1081 = vmul.f32 %v1002, %v1065
  %v1082 = vmul.f32 %v1004, %v1066
  %v1083 = vmul.f32 %v1006, %v1067
  %v1084 = vmul.f32 %v1008, %v1068
  %v1085 = vmul.f32 %v1010, %v1069
  %v1086 = vmul.f32 %v1012, %v1070
  %v1087 = vmul.f32 %v1014, %v1071
  %v1088 = vmul.f32 %v1016, %v1072
  %v1089 = vmul.f32 %v1018, %v1073
  %v1090 = vmul.f32 %v1020, %v1074
  %v1091 = vmul.f32 %v1022, %v1075
  %v1092 = vmul.f32 %v1024, %v1076
  %v1093 = vmul.f32 %v1026, %v1077
  %v1094 = vmul.f32 %v1028, %v1078
  %v1095 = vmul.f32 %v1030, %v1079
  %v1096 = vmul.f32 %v1032, %v1080
  %v1097 = vpack.c.bf16 %v714, %v711
  %v1098 = vpack.c.bf16 %v722, %v719
  %v1099 = vpack.c.bf16 %v1082, %v1081
  %v1100 = vpack.c.bf16 %v1084, %v1083
  %v1101 = vpack.c.bf16 %v1086, %v1085
  %v1102 = vpack.c.bf16 %v1088, %v1087
  %v1103 = vpack.c.bf16 %v1090, %v1089
  %v1104 = vpack.c.bf16 %v1092, %v1091
  %v1105 = vpack.c.bf16 %v1094, %v1093
  %v1106 = vpack.c.bf16 %v1096, %v1095
  %1107 = vmatprep.subr.bf16.mxu0 0
  %1108 = vmatpush1.bf16.xpose.msra.mxu0 %v1099
  %1109 = vmatprep.subr.bf16.mxu0 0
  %1110 = vmatpush1.bf16.xpose.msra.mxu0 %v1100
  %1111 = vmatprep.subr.bf16.mxu0 0
  %1112 = vmatpush1.bf16.xpose.msra.mxu0 %v1101
  %1113 = vmatprep.subr.bf16.mxu0 0
  %1114 = vmatpush1.bf16.xpose.msra.mxu0 %v1102
  %1115 = vmatprep.subr.bf16.mxu0 0
  %1116 = vmatpush1.bf16.xpose.msra.mxu0 %v1103
  %1117 = vmatprep.subr.bf16.mxu0 0
  %1118 = vmatpush1.bf16.xpose.msra.mxu0 %v1104
  %1119 = vmatprep.subr.bf16.mxu0 0
  %1120 = vmatpush1.bf16.xpose.msra.mxu0 %v1105
  %1121 = vmatprep.subr.bf16.mxu0 0
  %1122 = vmatpush1.bf16.xpose.msra.mxu0 %v1106
  %1123 = vmatprep.subr.bf16.mxu0 0
  %1124 = vmatpush1.bf16.xpose.msra.mxu0 0
  %1125 = vmatprep.subr.bf16.mxu0 0
  %1126 = vmatpush1.bf16.xpose.msra.mxu0 0
  %1127 = vmatprep.subr.bf16.mxu0 0
  %1128 = vmatpush1.bf16.xpose.msra.mxu0 0
  %1129 = vmatprep.subr.bf16.mxu0 0
  %1130 = vmatpush1.bf16.xpose.msra.mxu0 0
  %1131 = vmatprep.subr.bf16.mxu0 0
  %1132 = vmatpush1.bf16.xpose.msra.mxu0 0
  %1133 = vmatprep.subr.bf16.mxu0 0
  %1134 = vmatpush1.bf16.xpose.msra.mxu0 0
  %1135 = vmatprep.subr.bf16.mxu0 0
  %1136 = vmatpush1.bf16.xpose.msra.mxu0 0
  %1137 = vmatprep.subr.bf16.mxu0 0
  %1138 = vmatpush1.bf16.xpose.msra.mxu0 0
  %1139 = vmatprep.mubr.bf16.mxu0 0
  %1140 = vmatmul.mubr.bf16.gmra.mrb[0].mxu0 %v1097
  %v1141 = vpop.f32.mrb[0].mxu0
  %v1142 = vadd.f32 0.0, %v1141
  %v1143 = vpop.f32.mrb[0].mxu0
  %v1144 = vpop.f32.mrb[0].mxu0
  %v1145 = vadd.f32 0.0, %v1144
  %v1146 = vpop.f32.mrb[0].mxu0
  %1147 = vmatprep.mubr.bf16.mxu0 0
  %1148 = vmatmul.mubr.bf16.gmra.mrb[0].mxu0 %v1098
  %v1149 = vpop.f32.mrb[0].mxu0
  %v1150 = vadd.f32 0.0, %v1149
  %v1151 = vpop.f32.mrb[0].mxu0
  %v1152 = vpop.f32.mrb[0].mxu0
  %v1153 = vadd.f32 0.0, %v1152
  %v1154 = vpop.f32.mrb[0].mxu0
  %1155 = vdwg.mxu0
  %1156 = vxpose.xlu0.b32.start [1/16] %v663, 128
  %1157 = vxpose.xlu0.b32.cont [2/16] %v666, 128
  %1158 = vxpose.xlu0.b32.cont [3/16] %v671, 128
  %1159 = vxpose.xlu0.b32.cont [4/16] %v674, 128
  %1160 = vxpose.xlu0.b32.cont [5/16] 0.0, 128
  %1161 = vxpose.xlu0.b32.cont [6/16] 0.0, 128
  %1162 = vxpose.xlu0.b32.cont [7/16] 0.0, 128
  %1163 = vxpose.xlu0.b32.cont [8/16] 0.0, 128
  %1164 = vxpose.xlu0.b32.cont [9/16] 0.0, 128
  %1165 = vxpose.xlu0.b32.cont [10/16] 0.0, 128
  %1166 = vxpose.xlu0.b32.cont [11/16] 0.0, 128
  %1167 = vxpose.xlu0.b32.cont [12/16] 0.0, 128
  %1168 = vxpose.xlu0.b32.cont [13/16] 0.0, 128
  %1169 = vxpose.xlu0.b32.cont [14/16] 0.0, 128
  %1170 = vxpose.xlu0.b32.cont [15/16] 0.0, 128
  %1171 = vxpose.xlu0.b32.end [16/16] 0.0, 128
  %v1172 = vpop.trf.xlu0
  %v1173 = vpop.trf.xlu0
  %v1174 = vpop.trf.xlu0
  %v1175 = vpop.trf.xlu0
  %v1176 = vpop.trf.xlu0
  %v1177 = vpop.trf.xlu0
  %v1178 = vpop.trf.xlu0
  %v1179 = vpop.trf.xlu0
  %v1180 = vpop.trf.xlu0
  %v1181 = vpop.trf.xlu0
  %v1182 = vpop.trf.xlu0
  %v1183 = vpop.trf.xlu0
  %v1184 = vpop.trf.xlu0
  %v1185 = vpop.trf.xlu0
  %v1186 = vpop.trf.xlu0
  %v1187 = vpop.trf.xlu0
  %v1188 = vpack.c.bf16 %v1173, %v1172
  %v1189 = vpack.c.bf16 %v1175, %v1174
  %v1190 = vpack.c.bf16 %v1177, %v1176
  %v1191 = vpack.c.bf16 %v1179, %v1178
  %v1192 = vpack.c.bf16 %v1181, %v1180
  %v1193 = vpack.c.bf16 %v1183, %v1182
  %v1194 = vpack.c.bf16 %v1185, %v1184
  %v1195 = vpack.c.bf16 %v1187, %v1186
  %v1196 = vpack.c.bf16 %v698, %v695
  %v1197 = vpack.c.bf16 %v706, %v703
  %v1199 = vsel %vm799, %v1188, 0
  %v1202 = vsel %vm799, %v1189, 0
  %v1205 = vsel %vm799, %v1190, 0
  %v1208 = vsel %vm799, %v1191, 0
  %v1211 = vsel %vm799, %v1192, 0
  %v1214 = vsel %vm799, %v1193, 0
  %v1217 = vsel %vm799, %v1194, 0
  %v1220 = vsel %vm799, %v1195, 0
  %1222 = vmatprep.subr.bf16.mxu0 0
  %1223 = vmatpush1.bf16.msra.mxu0 %v1196
  %1224 = vmatprep.subr.bf16.mxu0 0
  %1225 = vmatpush1.bf16.msra.mxu0 %v1197
  %1226 = vmatprep.subr.bf16.mxu0 0
  %1227 = vmatpush1.bf16.msra.mxu0 0
  %1228 = vmatprep.subr.bf16.mxu0 0
  %1229 = vmatpush1.bf16.msra.mxu0 0
  %1230 = vmatprep.subr.bf16.mxu0 0
  %1231 = vmatpush1.bf16.msra.mxu0 0
  %1232 = vmatprep.subr.bf16.mxu0 0
  %1233 = vmatpush1.bf16.msra.mxu0 0
  %1234 = vmatprep.subr.bf16.mxu0 0
  %1235 = vmatpush1.bf16.msra.mxu0 0
  %1236 = vmatprep.subr.bf16.mxu0 0
  %1237 = vmatpush1.bf16.msra.mxu0 0
  %1238 = vmatprep.subr.bf16.mxu0 0
  %1239 = vmatpush1.bf16.msra.mxu0 0
  %1240 = vmatprep.subr.bf16.mxu0 0
  %1241 = vmatpush1.bf16.msra.mxu0 0
  %1242 = vmatprep.subr.bf16.mxu0 0
  %1243 = vmatpush1.bf16.msra.mxu0 0
  %1244 = vmatprep.subr.bf16.mxu0 0
  %1245 = vmatpush1.bf16.msra.mxu0 0
  %1246 = vmatprep.subr.bf16.mxu0 0
  %1247 = vmatpush1.bf16.msra.mxu0 0
  %1248 = vmatprep.subr.bf16.mxu0 0
  %1249 = vmatpush1.bf16.msra.mxu0 0
  %1250 = vmatprep.subr.bf16.mxu0 0
  %1251 = vmatpush1.bf16.msra.mxu0 0
  %1252 = vmatprep.subr.bf16.mxu0 0
  %1253 = vmatpush1.bf16.msra.mxu0 0
  %1254 = vmatprep.mubr.bf16.mxu0 0
  %1255 = vmatmul.mubr.bf16.gmra.mrb[0].mxu0 %v1199
  %v1256 = vpop.f32.mrb[0].mxu0
  %v1257 = vadd.f32 0.0, %v1256
  %v1258 = vpop.f32.mrb[0].mxu0
  %v1259 = vpop.f32.mrb[0].mxu0
  %v1260 = vadd.f32 0.0, %v1259
  %v1261 = vpop.f32.mrb[0].mxu0
  %1262 = vmatprep.mubr.bf16.mxu0 0
  %1263 = vmatmul.mubr.bf16.gmra.mrb[0].mxu0 %v1202
  %v1264 = vpop.f32.mrb[0].mxu0
  %v1265 = vadd.f32 0.0, %v1264
  %v1266 = vpop.f32.mrb[0].mxu0
  %v1267 = vpop.f32.mrb[0].mxu0
  %v1268 = vadd.f32 0.0, %v1267
  %v1269 = vpop.f32.mrb[0].mxu0
  %1270 = vmatprep.mubr.bf16.mxu0 0
  %1271 = vmatmul.mubr.bf16.gmra.mrb[0].mxu0 %v1205
  %v1272 = vpop.f32.mrb[0].mxu0
  %v1273 = vadd.f32 0.0, %v1272
  %v1274 = vpop.f32.mrb[0].mxu0
  %v1275 = vpop.f32.mrb[0].mxu0
  %v1276 = vadd.f32 0.0, %v1275
  %v1277 = vpop.f32.mrb[0].mxu0
  %1278 = vmatprep.mubr.bf16.mxu0 0
  %1279 = vmatmul.mubr.bf16.gmra.mrb[0].mxu0 %v1208
  %v1280 = vpop.f32.mrb[0].mxu0
  %v1281 = vadd.f32 0.0, %v1280
  %v1282 = vpop.f32.mrb[0].mxu0
  %v1283 = vpop.f32.mrb[0].mxu0
  %v1284 = vadd.f32 0.0, %v1283
  %v1285 = vpop.f32.mrb[0].mxu0
  %1286 = vmatprep.mubr.bf16.mxu0 0
  %1287 = vmatmul.mubr.bf16.gmra.mrb[0].mxu0 %v1211
  %v1288 = vpop.f32.mrb[0].mxu0
  %v1289 = vadd.f32 0.0, %v1288
  %v1290 = vpop.f32.mrb[0].mxu0
  %v1291 = vpop.f32.mrb[0].mxu0
  %v1292 = vadd.f32 0.0, %v1291
  %v1293 = vpop.f32.mrb[0].mxu0
  %1294 = vmatprep.mubr.bf16.mxu0 0
  %1295 = vmatmul.mubr.bf16.gmra.mrb[0].mxu0 %v1214
  %v1296 = vpop.f32.mrb[0].mxu0
  %v1297 = vadd.f32 0.0, %v1296
  %v1298 = vpop.f32.mrb[0].mxu0
  %v1299 = vpop.f32.mrb[0].mxu0
  %v1300 = vadd.f32 0.0, %v1299
  %v1301 = vpop.f32.mrb[0].mxu0
  %1302 = vmatprep.mubr.bf16.mxu0 0
  %1303 = vmatmul.mubr.bf16.gmra.mrb[0].mxu0 %v1217
  %v1304 = vpop.f32.mrb[0].mxu0
  %v1305 = vadd.f32 0.0, %v1304
  %v1306 = vpop.f32.mrb[0].mxu0
  %v1307 = vpop.f32.mrb[0].mxu0
  %v1308 = vadd.f32 0.0, %v1307
  %v1309 = vpop.f32.mrb[0].mxu0
  %1310 = vmatprep.mubr.bf16.mxu0 0
  %1311 = vmatmul.mubr.bf16.gmra.mrb[0].mxu0 %v1220
  %v1312 = vpop.f32.mrb[0].mxu0
  %v1313 = vadd.f32 0.0, %v1312
  %v1314 = vpop.f32.mrb[0].mxu0
  %v1315 = vpop.f32.mrb[0].mxu0
  %v1316 = vadd.f32 0.0, %v1315
  %v1317 = vpop.f32.mrb[0].mxu0
  %1318 = vdwg.mxu0
  %v1319 = vmul.f32 %v1257, 0.17677669
  %v1320 = vmul.f32 %v1260, 0.17677669
  %v1321 = vmul.f32 %v1265, 0.17677669
  %v1322 = vmul.f32 %v1268, 0.17677669
  %v1323 = vmul.f32 %v1273, 0.17677669
  %v1324 = vmul.f32 %v1276, 0.17677669
  %v1325 = vmul.f32 %v1281, 0.17677669
  %v1326 = vmul.f32 %v1284, 0.17677669
  %v1327 = vmul.f32 %v1289, 0.17677669
  %v1328 = vmul.f32 %v1292, 0.17677669
  %v1329 = vmul.f32 %v1297, 0.17677669
  %v1330 = vmul.f32 %v1300, 0.17677669
  %v1331 = vmul.f32 %v1305, 0.17677669
  %v1332 = vmul.f32 %v1308, 0.17677669
  %v1333 = vmul.f32 %v1313, 0.17677669
  %v1334 = vmul.f32 %v1316, 0.17677669
  %v1335 = vadd.f32 %v1319, %v741
  %v1336 = vadd.f32 %v1320, %v742
  %v1337 = vadd.f32 %v1321, %v743
  %v1338 = vadd.f32 %v1322, %v744
  %v1339 = vadd.f32 %v1323, %v745
  %v1340 = vadd.f32 %v1324, %v746
  %v1341 = vadd.f32 %v1325, %v747
  %v1342 = vadd.f32 %v1326, %v748
  %v1343 = vadd.f32 %v1327, %v749
  %v1344 = vadd.f32 %v1328, %v750
  %v1345 = vadd.f32 %v1329, %v751
  %v1346 = vadd.f32 %v1330, %v752
  %v1347 = vadd.f32 %v1331, %v753
  %v1348 = vadd.f32 %v1332, %v754
  %v1349 = vadd.f32 %v1333, %v755
  %v1350 = vadd.f32 %v1334, %v756
  %1351 = vmax.xlane.f32.xlu0 %v1335
  %v1352 = vpop.xlane.xlu0 %1351
  %1353 = vmax.xlane.f32.xlu0 %v1336
  %v1354 = vpop.xlane.xlu0 %1353
  %1355 = vmax.xlane.f32.xlu0 %v1337
  %v1356 = vpop.xlane.xlu0 %1355
  %1357 = vmax.xlane.f32.xlu0 %v1338
  %v1358 = vpop.xlane.xlu0 %1357
  %1359 = vmax.xlane.f32.xlu0 %v1339
  %v1360 = vpop.xlane.xlu0 %1359
  %1361 = vmax.xlane.f32.xlu0 %v1340
  %v1362 = vpop.xlane.xlu0 %1361
  %1363 = vmax.xlane.f32.xlu0 %v1341
  %v1364 = vpop.xlane.xlu0 %1363
  %1365 = vmax.xlane.f32.xlu0 %v1342
  %v1366 = vpop.xlane.xlu0 %1365
  %1367 = vmax.xlane.f32.xlu0 %v1343
  %v1368 = vpop.xlane.xlu0 %1367
  %1369 = vmax.xlane.f32.xlu0 %v1344
  %v1370 = vpop.xlane.xlu0 %1369
  %1371 = vmax.xlane.f32.xlu0 %v1345
  %v1372 = vpop.xlane.xlu0 %1371
  %1373 = vmax.xlane.f32.xlu0 %v1346
  %v1374 = vpop.xlane.xlu0 %1373
  %1375 = vmax.xlane.f32.xlu0 %v1347
  %v1376 = vpop.xlane.xlu0 %1375
  %1377 = vmax.xlane.f32.xlu0 %v1348
  %v1378 = vpop.xlane.xlu0 %1377
  %1379 = vmax.xlane.f32.xlu0 %v1349
  %v1380 = vpop.xlane.xlu0 %1379
  %1381 = vmax.xlane.f32.xlu0 %v1350
  %v1382 = vpop.xlane.xlu0 %1381
  %v1383 = vsub.f32 %v1335, %v1352
  %v1384 = vsub.f32 %v1336, %v1354
  %v1385 = vsub.f32 %v1337, %v1356
  %v1386 = vsub.f32 %v1338, %v1358
  %v1387 = vsub.f32 %v1339, %v1360
  %v1388 = vsub.f32 %v1340, %v1362
  %v1389 = vsub.f32 %v1341, %v1364
  %v1390 = vsub.f32 %v1342, %v1366
  %v1391 = vsub.f32 %v1343, %v1368
  %v1392 = vsub.f32 %v1344, %v1370
  %v1393 = vsub.f32 %v1345, %v1372
  %v1394 = vsub.f32 %v1346, %v1374
  %v1395 = vsub.f32 %v1347, %v1376
  %v1396 = vsub.f32 %v1348, %v1378
  %v1397 = vsub.f32 %v1349, %v1380
  %v1398 = vsub.f32 %v1350, %v1382
  %v1399 = vmul.f32 %v1383, 1.442695
  %v1400 = vpow.pop %v1399
  %v1401 = vmul.f32 %v1384, 1.442695
  %v1402 = vpow.pop %v1401
  %v1403 = vmul.f32 %v1385, 1.442695
  %v1404 = vpow.pop %v1403
  %v1405 = vmul.f32 %v1386, 1.442695
  %v1406 = vpow.pop %v1405
  %v1407 = vmul.f32 %v1387, 1.442695
  %v1408 = vpow.pop %v1407
  %v1409 = vmul.f32 %v1388, 1.442695
  %v1410 = vpow.pop %v1409
  %v1411 = vmul.f32 %v1389, 1.442695
  %v1412 = vpow.pop %v1411
  %v1413 = vmul.f32 %v1390, 1.442695
  %v1414 = vpow.pop %v1413
  %v1415 = vmul.f32 %v1391, 1.442695
  %v1416 = vpow.pop %v1415
  %v1417 = vmul.f32 %v1392, 1.442695
  %v1418 = vpow.pop %v1417
  %v1419 = vmul.f32 %v1393, 1.442695
  %v1420 = vpow.pop %v1419
  %v1421 = vmul.f32 %v1394, 1.442695
  %v1422 = vpow.pop %v1421
  %v1423 = vmul.f32 %v1395, 1.442695
  %v1424 = vpow.pop %v1423
  %v1425 = vmul.f32 %v1396, 1.442695
  %v1426 = vpow.pop %v1425
  %v1427 = vmul.f32 %v1397, 1.442695
  %v1428 = vpow.pop %v1427
  %v1429 = vmul.f32 %v1398, 1.442695
  %v1430 = vpow.pop %v1429
  %1431 = vadd.xlane.f32.xlu0 %v1400
  %v1432 = vpop.xlane.xlu0 %1431
  %1433 = vadd.xlane.f32.xlu0 %v1402
  %v1434 = vpop.xlane.xlu0 %1433
  %1435 = vadd.xlane.f32.xlu0 %v1404
  %v1436 = vpop.xlane.xlu0 %1435
  %1437 = vadd.xlane.f32.xlu0 %v1406
  %v1438 = vpop.xlane.xlu0 %1437
  %1439 = vadd.xlane.f32.xlu0 %v1408
  %v1440 = vpop.xlane.xlu0 %1439
  %1441 = vadd.xlane.f32.xlu0 %v1410
  %v1442 = vpop.xlane.xlu0 %1441
  %1443 = vadd.xlane.f32.xlu0 %v1412
  %v1444 = vpop.xlane.xlu0 %1443
  %1445 = vadd.xlane.f32.xlu0 %v1414
  %v1446 = vpop.xlane.xlu0 %1445
  %1447 = vadd.xlane.f32.xlu0 %v1416
  %v1448 = vpop.xlane.xlu0 %1447
  %1449 = vadd.xlane.f32.xlu0 %v1418
  %v1450 = vpop.xlane.xlu0 %1449
  %1451 = vadd.xlane.f32.xlu0 %v1420
  %v1452 = vpop.xlane.xlu0 %1451
  %1453 = vadd.xlane.f32.xlu0 %v1422
  %v1454 = vpop.xlane.xlu0 %1453
  %1455 = vadd.xlane.f32.xlu0 %v1424
  %v1456 = vpop.xlane.xlu0 %1455
  %1457 = vadd.xlane.f32.xlu0 %v1426
  %v1458 = vpop.xlane.xlu0 %1457
  %1459 = vadd.xlane.f32.xlu0 %v1428
  %v1460 = vpop.xlane.xlu0 %1459
  %1461 = vadd.xlane.f32.xlu0 %v1430
  %v1462 = vpop.xlane.xlu0 %1461
  %v1463 = vrcp.pop %v1432
  %v1464 = vrcp.pop %v1434
  %v1465 = vrcp.pop %v1436
  %v1466 = vrcp.pop %v1438
  %v1467 = vrcp.pop %v1440
  %v1468 = vrcp.pop %v1442
  %v1469 = vrcp.pop %v1444
  %v1470 = vrcp.pop %v1446
  %v1471 = vrcp.pop %v1448
  %v1472 = vrcp.pop %v1450
  %v1473 = vrcp.pop %v1452
  %v1474 = vrcp.pop %v1454
  %v1475 = vrcp.pop %v1456
  %v1476 = vrcp.pop %v1458
  %v1477 = vrcp.pop %v1460
  %v1478 = vrcp.pop %v1462
  %v1479 = vmul.f32 %v1400, %v1463
  %v1480 = vmul.f32 %v1402, %v1464
  %v1481 = vmul.f32 %v1404, %v1465
  %v1482 = vmul.f32 %v1406, %v1466
  %v1483 = vmul.f32 %v1408, %v1467
  %v1484 = vmul.f32 %v1410, %v1468
  %v1485 = vmul.f32 %v1412, %v1469
  %v1486 = vmul.f32 %v1414, %v1470
  %v1487 = vmul.f32 %v1416, %v1471
  %v1488 = vmul.f32 %v1418, %v1472
  %v1489 = vmul.f32 %v1420, %v1473
  %v1490 = vmul.f32 %v1422, %v1474
  %v1491 = vmul.f32 %v1424, %v1475
  %v1492 = vmul.f32 %v1426, %v1476
  %v1493 = vmul.f32 %v1428, %v1477
  %v1494 = vmul.f32 %v1430, %v1478
  %v1495 = vpack.c.bf16 %v730, %v727
  %v1496 = vpack.c.bf16 %v738, %v735
  %v1497 = vpack.c.bf16 %v1480, %v1479
  %v1498 = vpack.c.bf16 %v1482, %v1481
  %v1499 = vpack.c.bf16 %v1484, %v1483
  %v1500 = vpack.c.bf16 %v1486, %v1485
  %v1501 = vpack.c.bf16 %v1488, %v1487
  %v1502 = vpack.c.bf16 %v1490, %v1489
  %v1503 = vpack.c.bf16 %v1492, %v1491
  %v1504 = vpack.c.bf16 %v1494, %v1493
  %1505 = vmatprep.subr.bf16.mxu0 0
  %1506 = vmatpush1.bf16.xpose.msra.mxu0 %v1497
  %1507 = vmatprep.subr.bf16.mxu0 0
  %1508 = vmatpush1.bf16.xpose.msra.mxu0 %v1498
  %1509 = vmatprep.subr.bf16.mxu0 0
  %1510 = vmatpush1.bf16.xpose.msra.mxu0 %v1499
  %1511 = vmatprep.subr.bf16.mxu0 0
  %1512 = vmatpush1.bf16.xpose.msra.mxu0 %v1500
  %1513 = vmatprep.subr.bf16.mxu0 0
  %1514 = vmatpush1.bf16.xpose.msra.mxu0 %v1501
  %1515 = vmatprep.subr.bf16.mxu0 0
  %1516 = vmatpush1.bf16.xpose.msra.mxu0 %v1502
  %1517 = vmatprep.subr.bf16.mxu0 0
  %1518 = vmatpush1.bf16.xpose.msra.mxu0 %v1503
  %1519 = vmatprep.subr.bf16.mxu0 0
  %1520 = vmatpush1.bf16.xpose.msra.mxu0 %v1504
  %1521 = vmatprep.subr.bf16.mxu0 0
  %1522 = vmatpush1.bf16.xpose.msra.mxu0 0
  %1523 = vmatprep.subr.bf16.mxu0 0
  %1524 = vmatpush1.bf16.xpose.msra.mxu0 0
  %1525 = vmatprep.subr.bf16.mxu0 0
  %1526 = vmatpush1.bf16.xpose.msra.mxu0 0
  %1527 = vmatprep.subr.bf16.mxu0 0
  %1528 = vmatpush1.bf16.xpose.msra.mxu0 0
  %1529 = vmatprep.subr.bf16.mxu0 0
  %1530 = vmatpush1.bf16.xpose.msra.mxu0 0
  %1531 = vmatprep.subr.bf16.mxu0 0
  %1532 = vmatpush1.bf16.xpose.msra.mxu0 0
  %1533 = vmatprep.subr.bf16.mxu0 0
  %1534 = vmatpush1.bf16.xpose.msra.mxu0 0
  %1535 = vmatprep.subr.bf16.mxu0 0
  %1536 = vmatpush1.bf16.xpose.msra.mxu0 0
  %1537 = vmatprep.mubr.bf16.mxu0 0
  %1538 = vmatmul.mubr.bf16.gmra.mrb[0].mxu0 %v1495
  %v1539 = vpop.f32.mrb[0].mxu0
  %v1540 = vadd.f32 0.0, %v1539
  %v1541 = vpop.f32.mrb[0].mxu0
  %v1542 = vpop.f32.mrb[0].mxu0
  %v1543 = vadd.f32 0.0, %v1542
  %v1544 = vpop.f32.mrb[0].mxu0
  %1545 = vmatprep.mubr.bf16.mxu0 0
  %1546 = vmatmul.mubr.bf16.gmra.mrb[0].mxu0 %v1496
  %v1547 = vpop.f32.mrb[0].mxu0
  %v1548 = vadd.f32 0.0, %v1547
  %v1549 = vpop.f32.mrb[0].mxu0
  %v1550 = vpop.f32.mrb[0].mxu0
  %v1551 = vadd.f32 0.0, %v1550
  %v1552 = vpop.f32.mrb[0].mxu0
  %1553 = vdwg.mxu0
  %v1554 = vld [vmem:[%s6] sm:$0xf]
  %v1555 = vld [vmem:[%s6 + $0x4] sm:$0xf]
  %v1556 = vld [vmem:[%s6 + $0x8] sm:$0xf]
  %v1557 = vld [vmem:[%s6 + $0xc] sm:$0xf]
  %v1558 = vld [vmem:[%s6 + $0x10] sm:$0xf]
  %v1559 = vld [vmem:[%s6 + $0x14] sm:$0xf]
  %v1560 = vld [vmem:[%s6 + $0x18] sm:$0xf]
  %v1561 = vld [vmem:[%s6 + $0x1c] sm:$0xf]
  %v1562 = vpack.c.bf16 %v1145, %v1142
  %v1563 = vpack.c.bf16 %v1153, %v1150
  %v1564 = vpack.c.bf16 %v1543, %v1540
  %v1565 = vpack.c.bf16 %v1551, %v1548
  %v1566 = vld [vmem:[%s7] sm:$0xff]
  %v1567 = vld [vmem:[%s7 + $0x8] sm:$0xff]
  %v1568 = vld [vmem:[%s7 + $0x10] sm:$0xff]
  %v1569 = vld [vmem:[%s7 + $0x18] sm:$0xff]
  %v1570 = vld [vmem:[%s7 + $0x20] sm:$0xff]
  %v1571 = vld [vmem:[%s7 + $0x28] sm:$0xff]
  %v1572 = vld [vmem:[%s7 + $0x30] sm:$0xff]
  %v1573 = vld [vmem:[%s7 + $0x38] sm:$0xff]
  %1575 = vset.pattern.permute.xlu0 0
  %1576 = vperm.xlu0 %1575, %v1566
  %v1577 = vpop.permute.xlu0 %1576
  %1580 = vset.pattern.permute.xlu0 0
  %1581 = vperm.xlu0 %1580, %v1567
  %v1582 = vpop.permute.xlu0 %1581
  %1585 = vset.pattern.permute.xlu0 0
  %1586 = vperm.xlu0 %1585, %v1568
  %v1587 = vpop.permute.xlu0 %1586
  %1590 = vset.pattern.permute.xlu0 0
  %1591 = vperm.xlu0 %1590, %v1569
  %v1592 = vpop.permute.xlu0 %1591
  %1595 = vset.pattern.permute.xlu0 0
  %1596 = vperm.xlu0 %1595, %v1570
  %v1597 = vpop.permute.xlu0 %1596
  %1600 = vset.pattern.permute.xlu0 0
  %1601 = vperm.xlu0 %1600, %v1571
  %v1602 = vpop.permute.xlu0 %1601
  %1605 = vset.pattern.permute.xlu0 0
  %1606 = vperm.xlu0 %1605, %v1572
  %v1607 = vpop.permute.xlu0 %1606
  %1610 = vset.pattern.permute.xlu0 0
  %1611 = vperm.xlu0 %1610, %v1573
  %v1612 = vpop.permute.xlu0 %1611
  %v1622 = vunpack.c.l.b16 %v1554
  %v1623 = vunpack.c.l.b16 %v1555
  %v1624 = vunpack.c.l.b16 %v1556
  %v1625 = vunpack.c.l.b16 %v1557
  %v1626 = vunpack.c.l.b16 %v1558
  %v1627 = vunpack.c.l.b16 %v1559
  %v1628 = vunpack.c.l.b16 %v1560
  %v1629 = vunpack.c.l.b16 %v1561
  %v1630 = vpack.c.b16 %v1623, %v1622
  %v1631 = vpack.c.b16 %v1625, %v1624
  %v1632 = vpack.c.b16 %v1627, %v1626
  %v1633 = vpack.c.b16 %v1629, %v1628
  %v1635 = vsel %vm575, %v1630, 0
  %v1638 = vsel %vm575, %v1631, 0
  %v1641 = vsel %vm575, %v1632, 0
  %v1644 = vsel %vm575, %v1633, 0
  %1646 = vmatprep.subr.bf16.mxu0 0
  %1647 = vmatpush1.bf16.msra.mxu0 %v1562
  %1648 = vmatprep.subr.bf16.mxu0 0
  %1649 = vmatpush1.bf16.msra.mxu0 %v1563
  %1650 = vmatprep.subr.bf16.mxu0 0
  %1651 = vmatpush1.bf16.msra.mxu0 %v1564
  %1652 = vmatprep.subr.bf16.mxu0 0
  %1653 = vmatpush1.bf16.msra.mxu0 %v1565
  %1654 = vmatprep.subr.bf16.mxu0 0
  %1655 = vmatpush1.bf16.msra.mxu0 0
  %1656 = vmatprep.subr.bf16.mxu0 0
  %1657 = vmatpush1.bf16.msra.mxu0 0
  %1658 = vmatprep.subr.bf16.mxu0 0
  %1659 = vmatpush1.bf16.msra.mxu0 0
  %1660 = vmatprep.subr.bf16.mxu0 0
  %1661 = vmatpush1.bf16.msra.mxu0 0
  %1662 = vmatprep.subr.bf16.mxu0 0
  %1663 = vmatpush1.bf16.msra.mxu0 0
  %1664 = vmatprep.subr.bf16.mxu0 0
  %1665 = vmatpush1.bf16.msra.mxu0 0
  %1666 = vmatprep.subr.bf16.mxu0 0
  %1667 = vmatpush1.bf16.msra.mxu0 0
  %1668 = vmatprep.subr.bf16.mxu0 0
  %1669 = vmatpush1.bf16.msra.mxu0 0
  %1670 = vmatprep.subr.bf16.mxu0 0
  %1671 = vmatpush1.bf16.msra.mxu0 0
  %1672 = vmatprep.subr.bf16.mxu0 0
  %1673 = vmatpush1.bf16.msra.mxu0 0
  %1674 = vmatprep.subr.bf16.mxu0 0
  %1675 = vmatpush1.bf16.msra.mxu0 0
  %1676 = vmatprep.subr.bf16.mxu0 0
  %1677 = vmatpush1.bf16.msra.mxu0 0
  %1678 = vmatprep.mubr.bf16.mxu0 0
  %1679 = vmatmul.mubr.bf16.gmra.mrb[0].mxu0 %v1635
  %v1680 = vpop.f32.mrb[0].mxu0
  %v1681 = vadd.f32 %v1577, %v1680
  %v1682 = vpop.f32.mrb[0].mxu0
  %v1683 = vpop.f32.mrb[0].mxu0
  %v1684 = vadd.f32 %v1582, %v1683
  %v1685 = vpop.f32.mrb[0].mxu0
  %1686 = vmatprep.mubr.bf16.mxu0 0
  %1687 = vmatmul.mubr.bf16.gmra.mrb[0].mxu0 %v1638
  %v1688 = vpop.f32.mrb[0].mxu0
  %v1689 = vadd.f32 %v1587, %v1688
  %v1690 = vpop.f32.mrb[0].mxu0
  %v1691 = vpop.f32.mrb[0].mxu0
  %v1692 = vadd.f32 %v1592, %v1691
  %v1693 = vpop.f32.mrb[0].mxu0
  %1694 = vmatprep.mubr.bf16.mxu0 0
  %1695 = vmatmul.mubr.bf16.gmra.mrb[0].mxu0 %v1641
  %v1696 = vpop.f32.mrb[0].mxu0
  %v1697 = vadd.f32 %v1597, %v1696
  %v1698 = vpop.f32.mrb[0].mxu0
  %v1699 = vpop.f32.mrb[0].mxu0
  %v1700 = vadd.f32 %v1602, %v1699
  %v1701 = vpop.f32.mrb[0].mxu0
  %1702 = vmatprep.mubr.bf16.mxu0 0
  %1703 = vmatmul.mubr.bf16.gmra.mrb[0].mxu0 %v1644
  %v1704 = vpop.f32.mrb[0].mxu0
  %v1705 = vadd.f32 %v1607, %v1704
  %v1706 = vpop.f32.mrb[0].mxu0
  %v1707 = vpop.f32.mrb[0].mxu0
  %v1708 = vadd.f32 %v1612, %v1707
  %v1709 = vpop.f32.mrb[0].mxu0
  %1710 = vdwg.mxu0
  %1711 = vrot.lane.b32.xlu0 %v1681, 3
  %v1712 = vpop.permute.xlu0 %1711
  %1713 = vrot.lane.b32.xlu0 %v1684, 3
  %v1714 = vpop.permute.xlu0 %1713
  %1715 = vrot.lane.b32.xlu0 %v1689, 3
  %v1716 = vpop.permute.xlu0 %1715
  %1717 = vrot.lane.b32.xlu0 %v1692, 3
  %v1718 = vpop.permute.xlu0 %1717
  %1719 = vrot.lane.b32.xlu0 %v1697, 3
  %v1720 = vpop.permute.xlu0 %1719
  %1721 = vrot.lane.b32.xlu0 %v1700, 3
  %v1722 = vpop.permute.xlu0 %1721
  %1723 = vrot.lane.b32.xlu0 %v1705, 3
  %v1724 = vpop.permute.xlu0 %1723
  %1725 = vrot.lane.b32.xlu0 %v1708, 3
  %v1726 = vpop.permute.xlu0 %1725
  %v1727 = vld [vmem:[%s11] sm:$0x1]
  %v1729 = vlaneseq
  %v1730 = vshrl.u32 %v1729, 7
  %v1731 = vsub.s32 0, %v1730
  %v1732 = vrot.slane %v1727, %v1731
  %v1734 = vmul.f32 %v1712, %v1732
  %v1735 = vmul.f32 %v1714, %v1732
  %v1736 = vmul.f32 %v1716, %v1732
  %v1737 = vmul.f32 %v1718, %v1732
  %v1738 = vmul.f32 %v1720, %v1732
  %v1739 = vmul.f32 %v1722, %v1732
  %v1740 = vmul.f32 %v1724, %v1732
  %v1741 = vmul.f32 %v1726, %v1732
  %v1742 = vpack.c.bf16 %v1735, %v1734
  %v1743 = vpack.c.bf16 %v1737, %v1736
  %v1744 = vpack.c.bf16 %v1739, %v1738
  %v1745 = vpack.c.bf16 %v1741, %v1740
  %1746 = vst [vmem:[#allocation3] sm:$0xff] %v1742
  %1747 = vst [vmem:[#allocation3 + $0x8] sm:$0xff] %v1743
  %1748 = vst [vmem:[#allocation3 + $0x10] sm:$0xff] %v1744
  %1749 = vst [vmem:[#allocation3 + $0x18] sm:$0xff] %v1745
  %1750 = vrot.lane.b32.xlu0 %v1681, 2
  %v1751 = vpop.permute.xlu0 %1750
  %1752 = vrot.lane.b32.xlu0 %v1684, 2
  %v1753 = vpop.permute.xlu0 %1752
  %1754 = vrot.lane.b32.xlu0 %v1689, 2
  %v1755 = vpop.permute.xlu0 %1754
  %1756 = vrot.lane.b32.xlu0 %v1692, 2
  %v1757 = vpop.permute.xlu0 %1756
  %1758 = vrot.lane.b32.xlu0 %v1697, 2
  %v1759 = vpop.permute.xlu0 %1758
  %1760 = vrot.lane.b32.xlu0 %v1700, 2
  %v1761 = vpop.permute.xlu0 %1760
  %1762 = vrot.lane.b32.xlu0 %v1705, 2
  %v1763 = vpop.permute.xlu0 %1762
  %1764 = vrot.lane.b32.xlu0 %v1708, 2
  %v1765 = vpop.permute.xlu0 %1764
  %s1766 = scalar_lea.vmem %s11, 1
  %v1767 = vld [vmem:[%s1766] sm:$0x1]
  %v1769 = vlaneseq
  %v1770 = vshrl.u32 %v1769, 7
  %v1771 = vsub.s32 0, %v1770
  %v1772 = vrot.slane %v1767, %v1771
  %v1774 = vmul.f32 %v1751, %v1772
  %v1775 = vmul.f32 %v1753, %v1772
  %v1776 = vmul.f32 %v1755, %v1772
  %v1777 = vmul.f32 %v1757, %v1772
  %v1778 = vmul.f32 %v1759, %v1772
  %v1779 = vmul.f32 %v1761, %v1772
  %v1780 = vmul.f32 %v1763, %v1772
  %v1781 = vmul.f32 %v1765, %v1772
  %v1782 = vpack.c.bf16 %v1775, %v1774
  %v1783 = vpack.c.bf16 %v1777, %v1776
  %v1784 = vpack.c.bf16 %v1779, %v1778
  %v1785 = vpack.c.bf16 %v1781, %v1780
  %1786 = vst [vmem:[#allocation3 + $0x20] sm:$0xff] %v1782
  %1787 = vst [vmem:[#allocation3 + $0x28] sm:$0xff] %v1783
  %1788 = vst [vmem:[#allocation3 + $0x30] sm:$0xff] %v1784
  %1789 = vst [vmem:[#allocation3 + $0x38] sm:$0xff] %v1785
  %1790 = vrot.lane.b32.xlu0 %v1681, 1
  %v1791 = vpop.permute.xlu0 %1790
  %1792 = vrot.lane.b32.xlu0 %v1684, 1
  %v1793 = vpop.permute.xlu0 %1792
  %1794 = vrot.lane.b32.xlu0 %v1689, 1
  %v1795 = vpop.permute.xlu0 %1794
  %1796 = vrot.lane.b32.xlu0 %v1692, 1
  %v1797 = vpop.permute.xlu0 %1796
  %1798 = vrot.lane.b32.xlu0 %v1697, 1
  %v1799 = vpop.permute.xlu0 %1798
  %1800 = vrot.lane.b32.xlu0 %v1700, 1
  %v1801 = vpop.permute.xlu0 %1800
  %1802 = vrot.lane.b32.xlu0 %v1705, 1
  %v1803 = vpop.permute.xlu0 %1802
  %1804 = vrot.lane.b32.xlu0 %v1708, 1
  %v1805 = vpop.permute.xlu0 %1804
  %v1806 = vld [vmem:[%s103] sm:$0x1]
  %v1808 = vlaneseq
  %v1809 = vshrl.u32 %v1808, 7
  %v1810 = vsub.s32 0, %v1809
  %v1811 = vrot.slane %v1806, %v1810
  %v1813 = vmul.f32 %v1791, %v1811
  %v1814 = vmul.f32 %v1793, %v1811
  %v1815 = vmul.f32 %v1795, %v1811
  %v1816 = vmul.f32 %v1797, %v1811
  %v1817 = vmul.f32 %v1799, %v1811
  %v1818 = vmul.f32 %v1801, %v1811
  %v1819 = vmul.f32 %v1803, %v1811
  %v1820 = vmul.f32 %v1805, %v1811
  %v1821 = vpack.c.bf16 %v1814, %v1813
  %v1822 = vpack.c.bf16 %v1816, %v1815
  %v1823 = vpack.c.bf16 %v1818, %v1817
  %v1824 = vpack.c.bf16 %v1820, %v1819
  %1825 = vst [vmem:[#allocation3 + $0x40] sm:$0xff] %v1821
  %1826 = vst [vmem:[#allocation3 + $0x48] sm:$0xff] %v1822
  %1827 = vst [vmem:[#allocation3 + $0x50] sm:$0xff] %v1823
  %1828 = vst [vmem:[#allocation3 + $0x58] sm:$0xff] %v1824
  %v1829 = vld [vmem:[%s119] sm:$0x1]
  %v1831 = vlaneseq
  %v1832 = vshrl.u32 %v1831, 7
  %v1833 = vsub.s32 0, %v1832
  %v1834 = vrot.slane %v1829, %v1833
  %v1836 = vmul.f32 %v1681, %v1834
  %v1837 = vmul.f32 %v1684, %v1834
  %v1838 = vmul.f32 %v1689, %v1834
  %v1839 = vmul.f32 %v1692, %v1834
  %v1840 = vmul.f32 %v1697, %v1834
  %v1841 = vmul.f32 %v1700, %v1834
  %v1842 = vmul.f32 %v1705, %v1834
  %v1843 = vmul.f32 %v1708, %v1834
  %v1844 = vpack.c.bf16 %v1837, %v1836
  %v1845 = vpack.c.bf16 %v1839, %v1838
  %v1846 = vpack.c.bf16 %v1841, %v1840
  %v1847 = vpack.c.bf16 %v1843, %v1842
  %1848 = vst [vmem:[#allocation3 + $0x60] sm:$0xff] %v1844
  %1849 = vst [vmem:[#allocation3 + $0x68] sm:$0xff] %v1845
  %1850 = vst [vmem:[#allocation3 + $0x70] sm:$0xff] %v1846
  %1851 = vst [vmem:[#allocation3 + $0x78] sm:$0xff] %v1847
  %1852 = vrot.lane.b32.xlu0 %v1681, 127
  %v1853 = vpop.permute.xlu0 %1852
  %1854 = vrot.lane.b32.xlu0 %v1684, 127
  %v1855 = vpop.permute.xlu0 %1854
  %1856 = vrot.lane.b32.xlu0 %v1689, 127
  %v1857 = vpop.permute.xlu0 %1856
  %1858 = vrot.lane.b32.xlu0 %v1692, 127
  %v1859 = vpop.permute.xlu0 %1858
  %1860 = vrot.lane.b32.xlu0 %v1697, 127
  %v1861 = vpop.permute.xlu0 %1860
  %1862 = vrot.lane.b32.xlu0 %v1700, 127
  %v1863 = vpop.permute.xlu0 %1862
  %1864 = vrot.lane.b32.xlu0 %v1705, 127
  %v1865 = vpop.permute.xlu0 %1864
  %1866 = vrot.lane.b32.xlu0 %v1708, 127
  %v1867 = vpop.permute.xlu0 %1866
  %v1868 = vld [vmem:[%s143] sm:$0x1]
  %v1870 = vlaneseq
  %v1871 = vshrl.u32 %v1870, 7
  %v1872 = vsub.s32 0, %v1871
  %v1873 = vrot.slane %v1868, %v1872
  %v1875 = vmul.f32 %v1853, %v1873
  %v1876 = vmul.f32 %v1855, %v1873
  %v1877 = vmul.f32 %v1857, %v1873
  %v1878 = vmul.f32 %v1859, %v1873
  %v1879 = vmul.f32 %v1861, %v1873
  %v1880 = vmul.f32 %v1863, %v1873
  %v1881 = vmul.f32 %v1865, %v1873
  %v1882 = vmul.f32 %v1867, %v1873
  %v1883 = vpack.c.bf16 %v1876, %v1875
  %v1884 = vpack.c.bf16 %v1878, %v1877
  %v1885 = vpack.c.bf16 %v1880, %v1879
  %v1886 = vpack.c.bf16 %v1882, %v1881
  %1887 = vst [vmem:[#allocation3 + $0x80] sm:$0xff] %v1883
  %1888 = vst [vmem:[#allocation3 + $0x88] sm:$0xff] %v1884
  %1889 = vst [vmem:[#allocation3 + $0x90] sm:$0xff] %v1885
  %1890 = vst [vmem:[#allocation3 + $0x98] sm:$0xff] %v1886
  %1891 = vrot.lane.b32.xlu0 %v1681, 126
  %v1892 = vpop.permute.xlu0 %1891
  %1893 = vrot.lane.b32.xlu0 %v1684, 126
  %v1894 = vpop.permute.xlu0 %1893
  %1895 = vrot.lane.b32.xlu0 %v1689, 126
  %v1896 = vpop.permute.xlu0 %1895
  %1897 = vrot.lane.b32.xlu0 %v1692, 126
  %v1898 = vpop.permute.xlu0 %1897
  %1899 = vrot.lane.b32.xlu0 %v1697, 126
  %v1900 = vpop.permute.xlu0 %1899
  %1901 = vrot.lane.b32.xlu0 %v1700, 126
  %v1902 = vpop.permute.xlu0 %1901
  %1903 = vrot.lane.b32.xlu0 %v1705, 126
  %v1904 = vpop.permute.xlu0 %1903
  %1905 = vrot.lane.b32.xlu0 %v1708, 126
  %v1906 = vpop.permute.xlu0 %1905
  %s1907 = scalar_lea.vmem %s11, 5
  %v1908 = vld [vmem:[%s1907] sm:$0x1]
  %v1910 = vlaneseq
  %v1911 = vshrl.u32 %v1910, 7
  %v1912 = vsub.s32 0, %v1911
  %v1913 = vrot.slane %v1908, %v1912
  %v1915 = vmul.f32 %v1892, %v1913
  %v1916 = vmul.f32 %v1894, %v1913
  %v1917 = vmul.f32 %v1896, %v1913
  %v1918 = vmul.f32 %v1898, %v1913
  %v1919 = vmul.f32 %v1900, %v1913
  %v1920 = vmul.f32 %v1902, %v1913
  %v1921 = vmul.f32 %v1904, %v1913
  %v1922 = vmul.f32 %v1906, %v1913
  %v1923 = vpack.c.bf16 %v1916, %v1915
  %v1924 = vpack.c.bf16 %v1918, %v1917
  %v1925 = vpack.c.bf16 %v1920, %v1919
  %v1926 = vpack.c.bf16 %v1922, %v1921
  %1927 = vst [vmem:[#allocation3 + $0xa0] sm:$0xff] %v1923
  %1928 = vst [vmem:[#allocation3 + $0xa8] sm:$0xff] %v1924
  %1929 = vst [vmem:[#allocation3 + $0xb0] sm:$0xff] %v1925
  %1930 = vst [vmem:[#allocation3 + $0xb8] sm:$0xff] %v1926
  %1931 = vrot.lane.b32.xlu0 %v1681, 125
  %v1932 = vpop.permute.xlu0 %1931
  %1933 = vrot.lane.b32.xlu0 %v1684, 125
  %v1934 = vpop.permute.xlu0 %1933
  %1935 = vrot.lane.b32.xlu0 %v1689, 125
  %v1936 = vpop.permute.xlu0 %1935
  %1937 = vrot.lane.b32.xlu0 %v1692, 125
  %v1938 = vpop.permute.xlu0 %1937
  %1939 = vrot.lane.b32.xlu0 %v1697, 125
  %v1940 = vpop.permute.xlu0 %1939
  %1941 = vrot.lane.b32.xlu0 %v1700, 125
  %v1942 = vpop.permute.xlu0 %1941
  %1943 = vrot.lane.b32.xlu0 %v1705, 125
  %v1944 = vpop.permute.xlu0 %1943
  %1945 = vrot.lane.b32.xlu0 %v1708, 125
  %v1946 = vpop.permute.xlu0 %1945
  %s1947 = scalar_lea.vmem %s11, 6
  %v1948 = vld [vmem:[%s1947] sm:$0x1]
  %v1950 = vlaneseq
  %v1951 = vshrl.u32 %v1950, 7
  %v1952 = vsub.s32 0, %v1951
  %v1953 = vrot.slane %v1948, %v1952
  %v1955 = vmul.f32 %v1932, %v1953
  %v1956 = vmul.f32 %v1934, %v1953
  %v1957 = vmul.f32 %v1936, %v1953
  %v1958 = vmul.f32 %v1938, %v1953
  %v1959 = vmul.f32 %v1940, %v1953
  %v1960 = vmul.f32 %v1942, %v1953
  %v1961 = vmul.f32 %v1944, %v1953
  %v1962 = vmul.f32 %v1946, %v1953
  %v1963 = vpack.c.bf16 %v1956, %v1955
  %v1964 = vpack.c.bf16 %v1958, %v1957
  %v1965 = vpack.c.bf16 %v1960, %v1959
  %v1966 = vpack.c.bf16 %v1962, %v1961
  %1967 = vst [vmem:[#allocation3 + $0xc0] sm:$0xff] %v1963
  %1968 = vst [vmem:[#allocation3 + $0xc8] sm:$0xff] %v1964
  %1969 = vst [vmem:[#allocation3 + $0xd0] sm:$0xff] %v1965
  %1970 = vst [vmem:[#allocation3 + $0xd8] sm:$0xff] %v1966
  %v1971 = vld [vmem:[%s9] sm:$0xff]
  %v1972 = vld [vmem:[%s9 + $0x8] sm:$0xff]
  %v1973 = vld [vmem:[%s9 + $0x10] sm:$0xff]
  %v1974 = vld [vmem:[%s9 + $0x18] sm:$0xff]
  %v1975 = vld [vmem:[%s9 + $0x20] sm:$0xff]
  %v1976 = vld [vmem:[%s9 + $0x28] sm:$0xff]
  %v1977 = vld [vmem:[%s9 + $0x30] sm:$0xff]
  %v1978 = vld [vmem:[%s9 + $0x38] sm:$0xff]
  %v1979 = vld [vmem:[%s9 + $0x40] sm:$0xff]
  %v1980 = vld [vmem:[%s9 + $0x48] sm:$0xff]
  %v1981 = vld [vmem:[%s9 + $0x50] sm:$0xff]
  %v1982 = vld [vmem:[%s9 + $0x58] sm:$0xff]
  %v1983 = vld [vmem:[%s9 + $0x60] sm:$0xff]
  %v1984 = vld [vmem:[%s9 + $0x68] sm:$0xff]
  %v1985 = vld [vmem:[%s9 + $0x70] sm:$0xff]
  %v1986 = vld [vmem:[%s9 + $0x78] sm:$0xff]
  %v1987 = vld [vmem:[%s9 + $0x80] sm:$0xff]
  %v1988 = vld [vmem:[%s9 + $0x88] sm:$0xff]
  %v1989 = vld [vmem:[%s9 + $0x90] sm:$0xff]
  %v1990 = vld [vmem:[%s9 + $0x98] sm:$0xff]
  %v1991 = vld [vmem:[%s9 + $0xa0] sm:$0xff]
  %v1992 = vld [vmem:[%s9 + $0xa8] sm:$0xff]
  %v1993 = vld [vmem:[%s9 + $0xb0] sm:$0xff]
  %v1994 = vld [vmem:[%s9 + $0xb8] sm:$0xff]
  %v1995 = vld [vmem:[%s9 + $0xc0] sm:$0xff]
  %v1996 = vld [vmem:[%s9 + $0xc8] sm:$0xff]
  %v1997 = vld [vmem:[%s9 + $0xd0] sm:$0xff]
  %v1998 = vld [vmem:[%s9 + $0xd8] sm:$0xff]
  %v1999 = vld [vmem:[%s9 + $0xe0] sm:$0xff]
  %v2000 = vld [vmem:[%s9 + $0xe8] sm:$0xff]
  %v2001 = vld [vmem:[%s9 + $0xf0] sm:$0xff]
  %v2002 = vld [vmem:[%s9 + $0xf8] sm:$0xff]
  %v2003 = vld [vmem:[#allocation3] sm:$0xff]
  %v2004 = vld [vmem:[#allocation3 + $0x8] sm:$0xff]
  %v2005 = vld [vmem:[#allocation3 + $0x10] sm:$0xff]
  %v2006 = vld [vmem:[#allocation3 + $0x18] sm:$0xff]
  %v2007 = vld [vmem:[#allocation3 + $0x20] sm:$0xff]
  %v2008 = vld [vmem:[#allocation3 + $0x28] sm:$0xff]
  %v2009 = vld [vmem:[#allocation3 + $0x30] sm:$0xff]
  %v2010 = vld [vmem:[#allocation3 + $0x38] sm:$0xff]
  %v2011 = vld [vmem:[#allocation3 + $0x40] sm:$0xff]
  %v2012 = vld [vmem:[#allocation3 + $0x48] sm:$0xff]
  %v2013 = vld [vmem:[#allocation3 + $0x50] sm:$0xff]
  %v2014 = vld [vmem:[#allocation3 + $0x58] sm:$0xff]
  %v2015 = vld [vmem:[#allocation3 + $0x60] sm:$0xff]
  %v2016 = vld [vmem:[#allocation3 + $0x68] sm:$0xff]
  %v2017 = vld [vmem:[#allocation3 + $0x70] sm:$0xff]
  %v2018 = vld [vmem:[#allocation3 + $0x78] sm:$0xff]
  %v2019 = vld [vmem:[#allocation3 + $0x80] sm:$0xff]
  %v2020 = vld [vmem:[#allocation3 + $0x88] sm:$0xff]
  %v2021 = vld [vmem:[#allocation3 + $0x90] sm:$0xff]
  %v2022 = vld [vmem:[#allocation3 + $0x98] sm:$0xff]
  %v2023 = vld [vmem:[#allocation3 + $0xa0] sm:$0xff]
  %v2024 = vld [vmem:[#allocation3 + $0xa8] sm:$0xff]
  %v2025 = vld [vmem:[#allocation3 + $0xb0] sm:$0xff]
  %v2026 = vld [vmem:[#allocation3 + $0xb8] sm:$0xff]
  %v2027 = vld [vmem:[#allocation3 + $0xc0] sm:$0xff]
  %v2028 = vld [vmem:[#allocation3 + $0xc8] sm:$0xff]
  %v2029 = vld [vmem:[#allocation3 + $0xd0] sm:$0xff]
  %v2030 = vld [vmem:[#allocation3 + $0xd8] sm:$0xff]
  %v2031 = vld [vmem:[%s10] sm:$0xff]
  %v2032 = vld [vmem:[%s10 + $0x8] sm:$0xff]
  %v2033 = vld [vmem:[%s10 + $0x10] sm:$0xff]
  %v2034 = vld [vmem:[%s10 + $0x18] sm:$0xff]
  %v2035 = vld [vmem:[%s10 + $0x20] sm:$0xff]
  %v2036 = vld [vmem:[%s10 + $0x28] sm:$0xff]
  %v2037 = vld [vmem:[%s10 + $0x30] sm:$0xff]
  %v2038 = vld [vmem:[%s10 + $0x38] sm:$0xff]
  %v2039 = vld [vmem:[%s10 + $0x40] sm:$0xff]
  %v2040 = vld [vmem:[%s10 + $0x48] sm:$0xff]
  %v2041 = vld [vmem:[%s10 + $0x50] sm:$0xff]
  %v2042 = vld [vmem:[%s10 + $0x58] sm:$0xff]
  %v2043 = vld [vmem:[%s10 + $0x60] sm:$0xff]
  %v2044 = vld [vmem:[%s10 + $0x68] sm:$0xff]
  %v2045 = vld [vmem:[%s10 + $0x70] sm:$0xff]
  %v2046 = vld [vmem:[%s10 + $0x78] sm:$0xff]
  %2048 = vset.pattern.permute.xlu0 0
  %2049 = vperm.xlu0 %2048, %v2031
  %v2050 = vpop.permute.xlu0 %2049
  %2053 = vset.pattern.permute.xlu0 0
  %2054 = vperm.xlu0 %2053, %v2032
  %v2055 = vpop.permute.xlu0 %2054
  %2058 = vset.pattern.permute.xlu0 0
  %2059 = vperm.xlu0 %2058, %v2033
  %v2060 = vpop.permute.xlu0 %2059
  %2063 = vset.pattern.permute.xlu0 0
  %2064 = vperm.xlu0 %2063, %v2034
  %v2065 = vpop.permute.xlu0 %2064
  %2068 = vset.pattern.permute.xlu0 0
  %2069 = vperm.xlu0 %2068, %v2035
  %v2070 = vpop.permute.xlu0 %2069
  %2073 = vset.pattern.permute.xlu0 0
  %2074 = vperm.xlu0 %2073, %v2036
  %v2075 = vpop.permute.xlu0 %2074
  %2078 = vset.pattern.permute.xlu0 0
  %2079 = vperm.xlu0 %2078, %v2037
  %v2080 = vpop.permute.xlu0 %2079
  %2083 = vset.pattern.permute.xlu0 0
  %2084 = vperm.xlu0 %2083, %v2038
  %v2085 = vpop.permute.xlu0 %2084
  %2088 = vset.pattern.permute.xlu0 0
  %2089 = vperm.xlu0 %2088, %v2039
  %v2090 = vpop.permute.xlu0 %2089
  %2093 = vset.pattern.permute.xlu0 0
  %2094 = vperm.xlu0 %2093, %v2040
  %v2095 = vpop.permute.xlu0 %2094
  %2098 = vset.pattern.permute.xlu0 0
  %2099 = vperm.xlu0 %2098, %v2041
  %v2100 = vpop.permute.xlu0 %2099
  %2103 = vset.pattern.permute.xlu0 0
  %2104 = vperm.xlu0 %2103, %v2042
  %v2105 = vpop.permute.xlu0 %2104
  %2108 = vset.pattern.permute.xlu0 0
  %2109 = vperm.xlu0 %2108, %v2043
  %v2110 = vpop.permute.xlu0 %2109
  %2113 = vset.pattern.permute.xlu0 0
  %2114 = vperm.xlu0 %2113, %v2044
  %v2115 = vpop.permute.xlu0 %2114
  %2118 = vset.pattern.permute.xlu0 0
  %2119 = vperm.xlu0 %2118, %v2045
  %v2120 = vpop.permute.xlu0 %2119
  %2123 = vset.pattern.permute.xlu0 0
  %2124 = vperm.xlu0 %2123, %v2046
  %v2125 = vpop.permute.xlu0 %2124
  %v2159 = vunpack.c.l.b16 %v1971
  %v2160 = vunpack.c.h.b16 %v1971
  %v2161 = vunpack.c.l.b16 %v1972
  %v2162 = vunpack.c.h.b16 %v1972
  %v2163 = vunpack.c.l.b16 %v1973
  %v2164 = vunpack.c.h.b16 %v1973
  %v2165 = vunpack.c.l.b16 %v1974
  %v2166 = vunpack.c.h.b16 %v1974
  %v2167 = vunpack.c.l.b16 %v1975
  %v2168 = vunpack.c.h.b16 %v1975
  %v2169 = vunpack.c.l.b16 %v1976
  %v2170 = vunpack.c.h.b16 %v1976
  %v2171 = vunpack.c.l.b16 %v1977
  %v2172 = vunpack.c.h.b16 %v1977
  %v2173 = vunpack.c.l.b16 %v1978
  %v2174 = vunpack.c.h.b16 %v1978
  %v2175 = vunpack.c.l.b16 %v1979
  %v2176 = vunpack.c.h.b16 %v1979
  %v2177 = vunpack.c.l.b16 %v1980
  %v2178 = vunpack.c.h.b16 %v1980
  %v2179 = vunpack.c.l.b16 %v1981
  %v2180 = vunpack.c.h.b16 %v1981
  %v2181 = vunpack.c.l.b16 %v1982
  %v2182 = vunpack.c.h.b16 %v1982
  %v2183 = vunpack.c.l.b16 %v1983
  %v2184 = vunpack.c.h.b16 %v1983
  %v2185 = vunpack.c.l.b16 %v1984
  %v2186 = vunpack.c.h.b16 %v1984
  %v2187 = vunpack.c.l.b16 %v1985
  %v2188 = vunpack.c.h.b16 %v1985
  %v2189 = vunpack.c.l.b16 %v1986
  %v2190 = vunpack.c.h.b16 %v1986
  %v2191 = vunpack.c.l.b16 %v1987
  %v2192 = vunpack.c.h.b16 %v1987
  %v2193 = vunpack.c.l.b16 %v1988
  %v2194 = vunpack.c.h.b16 %v1988
  %v2195 = vunpack.c.l.b16 %v1989
  %v2196 = vunpack.c.h.b16 %v1989
  %v2197 = vunpack.c.l.b16 %v1990
  %v2198 = vunpack.c.h.b16 %v1990
  %v2199 = vunpack.c.l.b16 %v1991
  %v2200 = vunpack.c.h.b16 %v1991
  %v2201 = vunpack.c.l.b16 %v1992
  %v2202 = vunpack.c.h.b16 %v1992
  %v2203 = vunpack.c.l.b16 %v1993
  %v2204 = vunpack.c.h.b16 %v1993
  %v2205 = vunpack.c.l.b16 %v1994
  %v2206 = vunpack.c.h.b16 %v1994
  %v2207 = vunpack.c.l.b16 %v1995
  %v2208 = vunpack.c.h.b16 %v1995
  %v2209 = vunpack.c.l.b16 %v1996
  %v2210 = vunpack.c.h.b16 %v1996
  %v2211 = vunpack.c.l.b16 %v1997
  %v2212 = vunpack.c.h.b16 %v1997
  %v2213 = vunpack.c.l.b16 %v1998
  %v2214 = vunpack.c.h.b16 %v1998
  %v2215 = vunpack.c.l.b16 %v1999
  %v2216 = vunpack.c.h.b16 %v1999
  %v2217 = vunpack.c.l.b16 %v2000
  %v2218 = vunpack.c.h.b16 %v2000
  %v2219 = vunpack.c.l.b16 %v2001
  %v2220 = vunpack.c.h.b16 %v2001
  %v2221 = vunpack.c.l.b16 %v2002
  %v2222 = vunpack.c.h.b16 %v2002
  %v2223 = vpack.c.b16 %v2163, %v2159
  %v2224 = vpack.c.b16 %v2164, %v2160
  %v2225 = vpack.c.b16 %v2165, %v2161
  %v2226 = vpack.c.b16 %v2166, %v2162
  %v2227 = vpack.c.b16 %v2171, %v2167
  %v2228 = vpack.c.b16 %v2172, %v2168
  %v2229 = vpack.c.b16 %v2173, %v2169
  %v2230 = vpack.c.b16 %v2174, %v2170
  %v2231 = vpack.c.b16 %v2179, %v2175
  %v2232 = vpack.c.b16 %v2180, %v2176
  %v2233 = vpack.c.b16 %v2181, %v2177
  %v2234 = vpack.c.b16 %v2182, %v2178
  %v2235 = vpack.c.b16 %v2187, %v2183
  %v2236 = vpack.c.b16 %v2188, %v2184
  %v2237 = vpack.c.b16 %v2189, %v2185
  %v2238 = vpack.c.b16 %v2190, %v2186
  %v2239 = vpack.c.b16 %v2195, %v2191
  %v2240 = vpack.c.b16 %v2196, %v2192
  %v2241 = vpack.c.b16 %v2197, %v2193
  %v2242 = vpack.c.b16 %v2198, %v2194
  %v2243 = vpack.c.b16 %v2203, %v2199
  %v2244 = vpack.c.b16 %v2204, %v2200
  %v2245 = vpack.c.b16 %v2205, %v2201
  %v2246 = vpack.c.b16 %v2206, %v2202
  %v2247 = vpack.c.b16 %v2211, %v2207
  %v2248 = vpack.c.b16 %v2212, %v2208
  %v2249 = vpack.c.b16 %v2213, %v2209
  %v2250 = vpack.c.b16 %v2214, %v2210
  %v2251 = vpack.c.b16 %v2219, %v2215
  %v2252 = vpack.c.b16 %v2220, %v2216
  %v2253 = vpack.c.b16 %v2221, %v2217
  %v2254 = vpack.c.b16 %v2222, %v2218
  %v2280 = vsel %vm575, %v2226, 0
  %v2283 = vsel %vm575, %v2230, 0
  %v2286 = vsel %vm575, %v2234, 0
  %v2289 = vsel %vm575, %v2238, 0
  %v2292 = vsel %vm575, %v2242, 0
  %v2295 = vsel %vm575, %v2246, 0
  %v2298 = vsel %vm575, %v2250, 0
  %v2301 = vsel %vm575, %v2254, 0
  %2303 = vmatprep.subr.bf16.mxu0 0
  %2304 = vmatpush1.bf16.msra.mxu0 %v2003
  %2305 = vmatprep.subr.bf16.mxu0 0
  %2306 = vmatpush1.bf16.msra.mxu0 %v2004
  %2307 = vmatprep.subr.bf16.mxu0 0
  %2308 = vmatpush1.bf16.msra.mxu0 %v2005
  %2309 = vmatprep.subr.bf16.mxu0 0
  %2310 = vmatpush1.bf16.msra.mxu0 %v2006
  %2311 = vmatprep.subr.bf16.mxu0 0
  %2312 = vmatpush1.bf16.msra.mxu0 %v2007
  %2313 = vmatprep.subr.bf16.mxu0 0
  %2314 = vmatpush1.bf16.msra.mxu0 %v2008
  %2315 = vmatprep.subr.bf16.mxu0 0
  %2316 = vmatpush1.bf16.msra.mxu0 %v2009
  %2317 = vmatprep.subr.bf16.mxu0 0
  %2318 = vmatpush1.bf16.msra.mxu0 %v2010
  %2319 = vmatprep.subr.bf16.mxu0 0
  %2320 = vmatpush1.bf16.msra.mxu0 %v2011
  %2321 = vmatprep.subr.bf16.mxu0 0
  %2322 = vmatpush1.bf16.msra.mxu0 %v2012
  %2323 = vmatprep.subr.bf16.mxu0 0
  %2324 = vmatpush1.bf16.msra.mxu0 %v2013
  %2325 = vmatprep.subr.bf16.mxu0 0
  %2326 = vmatpush1.bf16.msra.mxu0 %v2014
  %2327 = vmatprep.subr.bf16.mxu0 0
  %2328 = vmatpush1.bf16.msra.mxu0 %v2015
  %2329 = vmatprep.subr.bf16.mxu0 0
  %2330 = vmatpush1.bf16.msra.mxu0 %v2016
  %2331 = vmatprep.subr.bf16.mxu0 0
  %2332 = vmatpush1.bf16.msra.mxu0 %v2017
  %2333 = vmatprep.subr.bf16.mxu0 0
  %2334 = vmatpush1.bf16.msra.mxu0 %v2018
  %2335 = vmatprep.mubr.bf16.mxu0 %v2224
  %2336 = vmatmul.mubr.bf16.gmra.mrb[0].mxu0 %v2223
  %v2337 = vpop.f32.mrb[0].mxu0
  %v2338 = vadd.f32 %v2050, %v2337
  %v2339 = vpop.f32.mrb[0].mxu0
  %v2340 = vpop.f32.mrb[0].mxu0
  %v2341 = vadd.f32 %v2055, %v2340
  %v2342 = vpop.f32.mrb[0].mxu0
  %2343 = vmatprep.mubr.bf16.mxu0 %v2228
  %2344 = vmatmul.mubr.bf16.gmra.mrb[0].mxu0 %v2227
  %v2345 = vpop.f32.mrb[0].mxu0
  %v2346 = vadd.f32 %v2060, %v2345
  %v2347 = vpop.f32.mrb[0].mxu0
  %v2348 = vpop.f32.mrb[0].mxu0
  %v2349 = vadd.f32 %v2065, %v2348
  %v2350 = vpop.f32.mrb[0].mxu0
  %2351 = vmatprep.mubr.bf16.mxu0 %v2232
  %2352 = vmatmul.mubr.bf16.gmra.mrb[0].mxu0 %v2231
  %v2353 = vpop.f32.mrb[0].mxu0
  %v2354 = vadd.f32 %v2070, %v2353
  %v2355 = vpop.f32.mrb[0].mxu0
  %v2356 = vpop.f32.mrb[0].mxu0
  %v2357 = vadd.f32 %v2075, %v2356
  %v2358 = vpop.f32.mrb[0].mxu0
  %2359 = vmatprep.mubr.bf16.mxu0 %v2236
  %2360 = vmatmul.mubr.bf16.gmra.mrb[0].mxu0 %v2235
  %v2361 = vpop.f32.mrb[0].mxu0
  %v2362 = vadd.f32 %v2080, %v2361
  %v2363 = vpop.f32.mrb[0].mxu0
  %v2364 = vpop.f32.mrb[0].mxu0
  %v2365 = vadd.f32 %v2085, %v2364
  %v2366 = vpop.f32.mrb[0].mxu0
  %2367 = vmatprep.mubr.bf16.mxu0 %v2240
  %2368 = vmatmul.mubr.bf16.gmra.mrb[0].mxu0 %v2239
  %v2369 = vpop.f32.mrb[0].mxu0
  %v2370 = vadd.f32 %v2090, %v2369
  %v2371 = vpop.f32.mrb[0].mxu0
  %v2372 = vpop.f32.mrb[0].mxu0
  %v2373 = vadd.f32 %v2095, %v2372
  %v2374 = vpop.f32.mrb[0].mxu0
  %2375 = vmatprep.mubr.bf16.mxu0 %v2244
  %2376 = vmatmul.mubr.bf16.gmra.mrb[0].mxu0 %v2243
  %v2377 = vpop.f32.mrb[0].mxu0
  %v2378 = vadd.f32 %v2100, %v2377
  %v2379 = vpop.f32.mrb[0].mxu0
  %v2380 = vpop.f32.mrb[0].mxu0
  %v2381 = vadd.f32 %v2105, %v2380
  %v2382 = vpop.f32.mrb[0].mxu0
  %2383 = vmatprep.mubr.bf16.mxu0 %v2248
  %2384 = vmatmul.mubr.bf16.gmra.mrb[0].mxu0 %v2247
  %v2385 = vpop.f32.mrb[0].mxu0
  %v2386 = vadd.f32 %v2110, %v2385
  %v2387 = vpop.f32.mrb[0].mxu0
  %v2388 = vpop.f32.mrb[0].mxu0
  %v2389 = vadd.f32 %v2115, %v2388
  %v2390 = vpop.f32.mrb[0].mxu0
  %2391 = vmatprep.mubr.bf16.mxu0 %v2252
  %2392 = vmatmul.mubr.bf16.gmra.mrb[0].mxu0 %v2251
  %v2393 = vpop.f32.mrb[0].mxu0
  %v2394 = vadd.f32 %v2120, %v2393
  %v2395 = vpop.f32.mrb[0].mxu0
  %v2396 = vpop.f32.mrb[0].mxu0
  %v2397 = vadd.f32 %v2125, %v2396
  %v2398 = vpop.f32.mrb[0].mxu0
  %2399 = vdwg.mxu0
  %2400 = vmatprep.subr.bf16.mxu0 0
  %2401 = vmatpush1.bf16.msra.mxu0 %v2019
  %2402 = vmatprep.subr.bf16.mxu0 0
  %2403 = vmatpush1.bf16.msra.mxu0 %v2020
  %2404 = vmatprep.subr.bf16.mxu0 0
  %2405 = vmatpush1.bf16.msra.mxu0 %v2021
  %2406 = vmatprep.subr.bf16.mxu0 0
  %2407 = vmatpush1.bf16.msra.mxu0 %v2022
  %2408 = vmatprep.subr.bf16.mxu0 0
  %2409 = vmatpush1.bf16.msra.mxu0 %v2023
  %2410 = vmatprep.subr.bf16.mxu0 0
  %2411 = vmatpush1.bf16.msra.mxu0 %v2024
  %2412 = vmatprep.subr.bf16.mxu0 0
  %2413 = vmatpush1.bf16.msra.mxu0 %v2025
  %2414 = vmatprep.subr.bf16.mxu0 0
  %2415 = vmatpush1.bf16.msra.mxu0 %v2026
  %2416 = vmatprep.subr.bf16.mxu0 0
  %2417 = vmatpush1.bf16.msra.mxu0 %v2027
  %2418 = vmatprep.subr.bf16.mxu0 0
  %2419 = vmatpush1.bf16.msra.mxu0 %v2028
  %2420 = vmatprep.subr.bf16.mxu0 0
  %2421 = vmatpush1.bf16.msra.mxu0 %v2029
  %2422 = vmatprep.subr.bf16.mxu0 0
  %2423 = vmatpush1.bf16.msra.mxu0 %v2030
  %2424 = vmatprep.subr.bf16.mxu0 0
  %2425 = vmatpush1.bf16.msra.mxu0 0
  %2426 = vmatprep.subr.bf16.mxu0 0
  %2427 = vmatpush1.bf16.msra.mxu0 0
  %2428 = vmatprep.subr.bf16.mxu0 0
  %2429 = vmatpush1.bf16.msra.mxu0 0
  %2430 = vmatprep.subr.bf16.mxu0 0
  %2431 = vmatpush1.bf16.msra.mxu0 0
  %2432 = vmatprep.mubr.bf16.mxu0 %v2280
  %2433 = vmatmul.mubr.bf16.gmra.mrb[0].mxu0 %v2225
  %v2434 = vpop.f32.mrb[0].mxu0
  %v2435 = vadd.f32 %v2338, %v2434
  %v2436 = vpop.f32.mrb[0].mxu0
  %v2437 = vpop.f32.mrb[0].mxu0
  %v2438 = vadd.f32 %v2341, %v2437
  %v2439 = vpop.f32.mrb[0].mxu0
  %2440 = vmatprep.mubr.bf16.mxu0 %v2283
  %2441 = vmatmul.mubr.bf16.gmra.mrb[0].mxu0 %v2229
  %v2442 = vpop.f32.mrb[0].mxu0
  %v2443 = vadd.f32 %v2346, %v2442
  %v2444 = vpop.f32.mrb[0].mxu0
  %v2445 = vpop.f32.mrb[0].mxu0
  %v2446 = vadd.f32 %v2349, %v2445
  %v2447 = vpop.f32.mrb[0].mxu0
  %2448 = vmatprep.mubr.bf16.mxu0 %v2286
  %2449 = vmatmul.mubr.bf16.gmra.mrb[0].mxu0 %v2233
  %v2450 = vpop.f32.mrb[0].mxu0
  %v2451 = vadd.f32 %v2354, %v2450
  %v2452 = vpop.f32.mrb[0].mxu0
  %v2453 = vpop.f32.mrb[0].mxu0
  %v2454 = vadd.f32 %v2357, %v2453
  %v2455 = vpop.f32.mrb[0].mxu0
  %2456 = vmatprep.mubr.bf16.mxu0 %v2289
  %2457 = vmatmul.mubr.bf16.gmra.mrb[0].mxu0 %v2237
  %v2458 = vpop.f32.mrb[0].mxu0
  %v2459 = vadd.f32 %v2362, %v2458
  %v2460 = vpop.f32.mrb[0].mxu0
  %v2461 = vpop.f32.mrb[0].mxu0
  %v2462 = vadd.f32 %v2365, %v2461
  %v2463 = vpop.f32.mrb[0].mxu0
  %2464 = vmatprep.mubr.bf16.mxu0 %v2292
  %2465 = vmatmul.mubr.bf16.gmra.mrb[0].mxu0 %v2241
  %v2466 = vpop.f32.mrb[0].mxu0
  %v2467 = vadd.f32 %v2370, %v2466
  %v2468 = vpop.f32.mrb[0].mxu0
  %v2469 = vpop.f32.mrb[0].mxu0
  %v2470 = vadd.f32 %v2373, %v2469
  %v2471 = vpop.f32.mrb[0].mxu0
  %2472 = vmatprep.mubr.bf16.mxu0 %v2295
  %2473 = vmatmul.mubr.bf16.gmra.mrb[0].mxu0 %v2245
  %v2474 = vpop.f32.mrb[0].mxu0
  %v2475 = vadd.f32 %v2378, %v2474
  %v2476 = vpop.f32.mrb[0].mxu0
  %v2477 = vpop.f32.mrb[0].mxu0
  %v2478 = vadd.f32 %v2381, %v2477
  %v2479 = vpop.f32.mrb[0].mxu0
  %2480 = vmatprep.mubr.bf16.mxu0 %v2298
  %2481 = vmatmul.mubr.bf16.gmra.mrb[0].mxu0 %v2249
  %v2482 = vpop.f32.mrb[0].mxu0
  %v2483 = vadd.f32 %v2386, %v2482
  %v2484 = vpop.f32.mrb[0].mxu0
  %v2485 = vpop.f32.mrb[0].mxu0
  %v2486 = vadd.f32 %v2389, %v2485
  %v2487 = vpop.f32.mrb[0].mxu0
  %2488 = vmatprep.mubr.bf16.mxu0 %v2301
  %2489 = vmatmul.mubr.bf16.gmra.mrb[0].mxu0 %v2253
  %v2490 = vpop.f32.mrb[0].mxu0
  %v2491 = vadd.f32 %v2394, %v2490
  %v2492 = vpop.f32.mrb[0].mxu0
  %v2493 = vpop.f32.mrb[0].mxu0
  %v2494 = vadd.f32 %v2397, %v2493
  %v2495 = vpop.f32.mrb[0].mxu0
  %2496 = vdwg.mxu0
  %v2497 = vmax.f32 %v2435, 0.0
  %v2498 = vmax.f32 %v2438, 0.0
  %v2499 = vmax.f32 %v2443, 0.0
  %v2500 = vmax.f32 %v2446, 0.0
  %v2501 = vmax.f32 %v2451, 0.0
  %v2502 = vmax.f32 %v2454, 0.0
  %v2503 = vmax.f32 %v2459, 0.0
  %v2504 = vmax.f32 %v2462, 0.0
  %v2505 = vmax.f32 %v2467, 0.0
  %v2506 = vmax.f32 %v2470, 0.0
  %v2507 = vmax.f32 %v2475, 0.0
  %v2508 = vmax.f32 %v2478, 0.0
  %v2509 = vmax.f32 %v2483, 0.0
  %v2510 = vmax.f32 %v2486, 0.0
  %v2511 = vmax.f32 %v2491, 0.0
  %v2512 = vmax.f32 %v2494, 0.0
  %2513 = vrot.lane.b32.xlu0 %v2509, 1
  %v2514 = vpop.permute.xlu0 %2513
  %2515 = vrot.lane.b32.xlu0 %v2510, 1
  %v2516 = vpop.permute.xlu0 %2515
  %2517 = vrot.lane.b32.xlu0 %v2511, 1
  %v2518 = vpop.permute.xlu0 %2517
  %2519 = vrot.lane.b32.xlu0 %v2512, 1
  %v2520 = vpop.permute.xlu0 %2519
  %v2521 = vld [vmem:[%s12] sm:$0x1]
  %v2522 = vld [vmem:[%s13] sm:$0x1]
  %v2523 = vsub.f32 %v2509, %v2514
  %v2524 = vsub.f32 %v2510, %v2516
  %v2525 = vsub.f32 %v2511, %v2518
  %v2526 = vsub.f32 %v2512, %v2520
  %v2528 = vlaneseq
  %v2529 = vshrl.u32 %v2528, 7
  %v2530 = vsub.s32 0, %v2529
  %v2531 = vrot.slane %v2521, %v2530
  %v2533 = vmul.f32 %v2523, %v2531
  %v2534 = vmul.f32 %v2524, %v2531
  %v2535 = vmul.f32 %v2525, %v2531
  %v2536 = vmul.f32 %v2526, %v2531
  %v2537 = vadd.f32 %v2514, %v2533
  %v2538 = vadd.f32 %v2516, %v2534
  %v2539 = vadd.f32 %v2518, %v2535
  %v2540 = vadd.f32 %v2520, %v2536
  %v2541 = vsub.f32 %v2514, %v2509
  %v2542 = vsub.f32 %v2516, %v2510
  %v2543 = vsub.f32 %v2518, %v2511
  %v2544 = vsub.f32 %v2520, %v2512
  %v2546 = vlaneseq
  %v2547 = vshrl.u32 %v2546, 7
  %v2548 = vsub.s32 0, %v2547
  %v2549 = vrot.slane %v2522, %v2548
  %v2551 = vmul.f32 %v2541, %v2549
  %v2552 = vmul.f32 %v2542, %v2549
  %v2553 = vmul.f32 %v2543, %v2549
  %v2554 = vmul.f32 %v2544, %v2549
  %v2555 = vadd.f32 %v2509, %v2551
  %v2556 = vadd.f32 %v2510, %v2552
  %v2557 = vadd.f32 %v2511, %v2553
  %v2558 = vadd.f32 %v2512, %v2554
  %2559 = vst [vmem:[#allocation4] sm:$0xff] %v2497
  %2560 = vst [vmem:[#allocation4 + $0x8] sm:$0xff] %v2498
  %2561 = vst [vmem:[#allocation4 + $0x10] sm:$0xff] %v2499
  %2562 = vst [vmem:[#allocation4 + $0x18] sm:$0xff] %v2500
  %2563 = vst [vmem:[#allocation4 + $0x20] sm:$0xff] %v2501
  %2564 = vst [vmem:[#allocation4 + $0x28] sm:$0xff] %v2502
  %2565 = vst [vmem:[#allocation4 + $0x30] sm:$0xff] %v2503
  %2566 = vst [vmem:[#allocation4 + $0x38] sm:$0xff] %v2504
  %2567 = vst [vmem:[#allocation4 + $0x40] sm:$0xff] %v2505
  %2568 = vst [vmem:[#allocation4 + $0x48] sm:$0xff] %v2506
  %2569 = vst [vmem:[#allocation4 + $0x50] sm:$0xff] %v2507
  %2570 = vst [vmem:[#allocation4 + $0x58] sm:$0xff] %v2508
  %v2571 = vmax.f32 %v2537, %v2555
  %v2572 = vmax.f32 %v2538, %v2556
  %v2573 = vmax.f32 %v2539, %v2557
  %v2574 = vmax.f32 %v2540, %v2558
  %2575 = vst [vmem:[#allocation4 + $0x60] sm:$0xff] %v2571
  %2576 = vst [vmem:[#allocation4 + $0x68] sm:$0xff] %v2572
  %2577 = vst [vmem:[#allocation4 + $0x70] sm:$0xff] %v2573
  %2578 = vst [vmem:[#allocation4 + $0x78] sm:$0xff] %v2574
  %v2579 = vld [vmem:[%s15] sm:$0xff]
  %v2580 = vld [vmem:[%s15 + $0x8] sm:$0xff]
  %v2581 = vld [vmem:[%s15 + $0x10] sm:$0xff]
  %v2582 = vld [vmem:[%s15 + $0x18] sm:$0xff]
  %v2583 = vld [vmem:[%s15 + $0x20] sm:$0xff]
  %v2584 = vld [vmem:[%s15 + $0x28] sm:$0xff]
  %v2585 = vld [vmem:[%s15 + $0x30] sm:$0xff]
  %v2586 = vld [vmem:[%s15 + $0x38] sm:$0xff]
  %v2587 = vld [vmem:[%s15 + $0x40] sm:$0xff]
  %v2588 = vld [vmem:[%s15 + $0x48] sm:$0xff]
  %v2589 = vld [vmem:[%s15 + $0x50] sm:$0xff]
  %v2590 = vld [vmem:[%s15 + $0x58] sm:$0xff]
  %v2591 = vld [vmem:[%s15 + $0x60] sm:$0xff]
  %v2592 = vld [vmem:[%s15 + $0x68] sm:$0xff]
  %v2593 = vld [vmem:[%s15 + $0x70] sm:$0xff]
  %v2594 = vld [vmem:[%s15 + $0x78] sm:$0xff]
  %v2595 = vld [vmem:[#allocation4] sm:$0xff]
  %v2596 = vld [vmem:[#allocation4 + $0x8] sm:$0xff]
  %v2597 = vld [vmem:[#allocation4 + $0x10] sm:$0xff]
  %v2598 = vld [vmem:[#allocation4 + $0x18] sm:$0xff]
  %v2599 = vld [vmem:[#allocation4 + $0x20] sm:$0xff]
  %v2600 = vld [vmem:[#allocation4 + $0x28] sm:$0xff]
  %v2601 = vld [vmem:[#allocation4 + $0x30] sm:$0xff]
  %v2602 = vld [vmem:[#allocation4 + $0x38] sm:$0xff]
  %v2603 = vld [vmem:[#allocation4 + $0x40] sm:$0xff]
  %v2604 = vld [vmem:[#allocation4 + $0x48] sm:$0xff]
  %v2605 = vld [vmem:[#allocation4 + $0x50] sm:$0xff]
  %v2606 = vld [vmem:[#allocation4 + $0x58] sm:$0xff]
  %v2607 = vld [vmem:[#allocation4 + $0x60] sm:$0xff]
  %v2608 = vld [vmem:[#allocation4 + $0x68] sm:$0xff]
  %v2609 = vld [vmem:[#allocation4 + $0x70] sm:$0xff]
  %v2610 = vld [vmem:[#allocation4 + $0x78] sm:$0xff]
  %2611 = vmatprep.subr.mxu0 0.0
  %2612 = vmatpush1.msra.mxu0 %v2579
  %2613 = vmatprep.subr.mxu0 0.0
  %2614 = vmatpush1.msra.mxu0 %v2580
  %2615 = vmatprep.subr.mxu0 0.0
  %2616 = vmatpush1.msra.mxu0 %v2581
  %2617 = vmatprep.subr.mxu0 0.0
  %2618 = vmatpush1.msra.mxu0 %v2582
  %2619 = vmatprep.subr.mxu0 0.0
  %2620 = vmatpush1.msra.mxu0 %v2583
  %2621 = vmatprep.subr.mxu0 0.0
  %2622 = vmatpush1.msra.mxu0 %v2584
  %2623 = vmatprep.subr.mxu0 0.0
  %2624 = vmatpush1.msra.mxu0 %v2585
  %2625 = vmatprep.subr.mxu0 0.0
  %2626 = vmatpush1.msra.mxu0 %v2586
  %2627 = vmatprep.subr.mxu0 0.0
  %2628 = vmatpush1.msra.mxu0 %v2587
  %2629 = vmatprep.subr.mxu0 0.0
  %2630 = vmatpush1.msra.mxu0 %v2588
  %2631 = vmatprep.subr.mxu0 0.0
  %2632 = vmatpush1.msra.mxu0 %v2589
  %2633 = vmatprep.subr.mxu0 0.0
  %2634 = vmatpush1.msra.mxu0 %v2590
  %2635 = vmatprep.subr.mxu0 0.0
  %2636 = vmatpush1.msra.mxu0 %v2591
  %2637 = vmatprep.subr.mxu0 0.0
  %2638 = vmatpush1.msra.mxu0 %v2592
  %2639 = vmatprep.subr.mxu0 0.0
  %2640 = vmatpush1.msra.mxu0 %v2593
  %2641 = vmatprep.subr.mxu0 0.0
  %2642 = vmatpush1.msra.mxu0 %v2594
  %2643 = vmatprep.subr.mxu0 0.0
  %2644 = vmatpush1.msra.mxu0 0.0
  %2645 = vmatprep.subr.mxu0 0.0
  %2646 = vmatpush1.msra.mxu0 0.0
  %2647 = vmatprep.subr.mxu0 0.0
  %2648 = vmatpush1.msra.mxu0 0.0
  %2649 = vmatprep.subr.mxu0 0.0
  %2650 = vmatpush1.msra.mxu0 0.0
  %2651 = vmatprep.subr.mxu0 0.0
  %2652 = vmatpush1.msra.mxu0 0.0
  %2653 = vmatprep.subr.mxu0 0.0
  %2654 = vmatpush1.msra.mxu0 0.0
  %2655 = vmatprep.subr.mxu0 0.0
  %2656 = vmatpush1.msra.mxu0 0.0
  %2657 = vmatprep.subr.mxu0 0.0
  %2658 = vmatpush1.msra.mxu0 0.0
  %2659 = vmatprep.subr.mxu0 0.0
  %2660 = vmatpush1.msra.mxu0 0.0
  %2661 = vmatprep.subr.mxu0 0.0
  %2662 = vmatpush1.msra.mxu0 0.0
  %2663 = vmatprep.subr.mxu0 0.0
  %2664 = vmatpush1.msra.mxu0 0.0
  %2665 = vmatprep.subr.mxu0 0.0
  %2666 = vmatpush1.msra.mxu0 0.0
  %2667 = vmatprep.subr.mxu0 0.0
  %2668 = vmatpush1.msra.mxu0 0.0
  %2669 = vmatprep.subr.mxu0 0.0
  %2670 = vmatpush1.msra.mxu0 0.0
  %2671 = vmatprep.subr.mxu0 0.0
  %2672 = vmatpush1.msra.mxu0 0.0
  %2673 = vmatprep.subr.mxu0 0.0
  %2674 = vmatpush1.msra.mxu0 0.0
  %2675 = vmatprep.mubr.f32.mxu0 0.0
  %2676 = vmatmul.mubr.f32.gmra.mrb[0].mxu0 %v2595
  %v2677 = vpop.f32.mrb[0].mxu0
  %v2678 = vadd.f32 0.0, %v2677
  %v2679 = vpop.f32.mrb[0].mxu0
  %2680 = vmatprep.mubr.f32.mxu0 0.0
  %2681 = vmatmul.mubr.f32.gmra.mrb[0].mxu0 %v2596
  %v2682 = vpop.f32.mrb[0].mxu0
  %v2683 = vadd.f32 0.0, %v2682
  %v2684 = vpop.f32.mrb[0].mxu0
  %2685 = vmatprep.mubr.f32.mxu0 0.0
  %2686 = vmatmul.mubr.f32.gmra.mrb[0].mxu0 %v2597
  %v2687 = vpop.f32.mrb[0].mxu0
  %v2688 = vadd.f32 0.0, %v2687
  %v2689 = vpop.f32.mrb[0].mxu0
  %2690 = vmatprep.mubr.f32.mxu0 0.0
  %2691 = vmatmul.mubr.f32.gmra.mrb[0].mxu0 %v2598
  %v2692 = vpop.f32.mrb[0].mxu0
  %v2693 = vadd.f32 0.0, %v2692
  %v2694 = vpop.f32.mrb[0].mxu0
  %2695 = vmatprep.mubr.f32.mxu0 0.0
  %2696 = vmatmul.mubr.f32.gmra.mrb[0].mxu0 %v2599
  %v2697 = vpop.f32.mrb[0].mxu0
  %v2698 = vadd.f32 0.0, %v2697
  %v2699 = vpop.f32.mrb[0].mxu0
  %2700 = vmatprep.mubr.f32.mxu0 0.0
  %2701 = vmatmul.mubr.f32.gmra.mrb[0].mxu0 %v2600
  %v2702 = vpop.f32.mrb[0].mxu0
  %v2703 = vadd.f32 0.0, %v2702
  %v2704 = vpop.f32.mrb[0].mxu0
  %2705 = vmatprep.mubr.f32.mxu0 0.0
  %2706 = vmatmul.mubr.f32.gmra.mrb[0].mxu0 %v2601
  %v2707 = vpop.f32.mrb[0].mxu0
  %v2708 = vadd.f32 0.0, %v2707
  %v2709 = vpop.f32.mrb[0].mxu0
  %2710 = vmatprep.mubr.f32.mxu0 0.0
  %2711 = vmatmul.mubr.f32.gmra.mrb[0].mxu0 %v2602
  %v2712 = vpop.f32.mrb[0].mxu0
  %v2713 = vadd.f32 0.0, %v2712
  %v2714 = vpop.f32.mrb[0].mxu0
  %2715 = vmatprep.mubr.f32.mxu0 0.0
  %2716 = vmatmul.mubr.f32.gmra.mrb[0].mxu0 %v2603
  %v2717 = vpop.f32.mrb[0].mxu0
  %v2718 = vadd.f32 0.0, %v2717
  %v2719 = vpop.f32.mrb[0].mxu0
  %2720 = vmatprep.mubr.f32.mxu0 0.0
  %2721 = vmatmul.mubr.f32.gmra.mrb[0].mxu0 %v2604
  %v2722 = vpop.f32.mrb[0].mxu0
  %v2723 = vadd.f32 0.0, %v2722
  %v2724 = vpop.f32.mrb[0].mxu0
  %2725 = vmatprep.mubr.f32.mxu0 0.0
  %2726 = vmatmul.mubr.f32.gmra.mrb[0].mxu0 %v2605
  %v2727 = vpop.f32.mrb[0].mxu0
  %v2728 = vadd.f32 0.0, %v2727
  %v2729 = vpop.f32.mrb[0].mxu0
  %2730 = vmatprep.mubr.f32.mxu0 0.0
  %2731 = vmatmul.mubr.f32.gmra.mrb[0].mxu0 %v2606
  %v2732 = vpop.f32.mrb[0].mxu0
  %v2733 = vadd.f32 0.0, %v2732
  %v2734 = vpop.f32.mrb[0].mxu0
  %2735 = vmatprep.mubr.f32.mxu0 0.0
  %2736 = vmatmul.mubr.f32.gmra.mrb[0].mxu0 %v2607
  %v2737 = vpop.f32.mrb[0].mxu0
  %v2738 = vadd.f32 0.0, %v2737
  %v2739 = vpop.f32.mrb[0].mxu0
  %2740 = vmatprep.mubr.f32.mxu0 0.0
  %2741 = vmatmul.mubr.f32.gmra.mrb[0].mxu0 %v2608
  %v2742 = vpop.f32.mrb[0].mxu0
  %v2743 = vadd.f32 0.0, %v2742
  %v2744 = vpop.f32.mrb[0].mxu0
  %2745 = vmatprep.mubr.f32.mxu0 0.0
  %2746 = vmatmul.mubr.f32.gmra.mrb[0].mxu0 %v2609
  %v2747 = vpop.f32.mrb[0].mxu0
  %v2748 = vadd.f32 0.0, %v2747
  %v2749 = vpop.f32.mrb[0].mxu0
  %2750 = vmatprep.mubr.f32.mxu0 0.0
  %2751 = vmatmul.mubr.f32.gmra.mrb[0].mxu0 %v2610
  %v2752 = vpop.f32.mrb[0].mxu0
  %v2753 = vadd.f32 0.0, %v2752
  %v2754 = vpop.f32.mrb[0].mxu0
  %2755 = vdwg.mxu0
  %v2756 = vmul.f32 %v2678, 0.0625
  %v2757 = vmul.f32 %v2683, 0.0625
  %v2758 = vmul.f32 %v2688, 0.0625
  %v2759 = vmul.f32 %v2693, 0.0625
  %v2760 = vmul.f32 %v2698, 0.0625
  %v2761 = vmul.f32 %v2703, 0.0625
  %v2762 = vmul.f32 %v2708, 0.0625
  %v2763 = vmul.f32 %v2713, 0.0625
  %v2764 = vmul.f32 %v2718, 0.0625
  %v2765 = vmul.f32 %v2723, 0.0625
  %v2766 = vmul.f32 %v2728, 0.0625
  %v2767 = vmul.f32 %v2733, 0.0625
  %v2768 = vmul.f32 %v2738, 0.0625
  %v2769 = vmul.f32 %v2743, 0.0625
  %v2770 = vmul.f32 %v2748, 0.0625
  %v2771 = vmul.f32 %v2753, 0.0625
  %v2772 = vld [vmem:[%s17] sm:$0xf]
  %v2773 = vld [vmem:[%s17 + $0x4] sm:$0xf]
  %v2774 = vld [vmem:[%s17 + $0x8] sm:$0xf]
  %v2775 = vld [vmem:[%s17 + $0xc] sm:$0xf]
  %v2776 = vld [vmem:[%s17 + $0x10] sm:$0xf]
  %v2777 = vld [vmem:[%s17 + $0x14] sm:$0xf]
  %v2778 = vld [vmem:[%s17 + $0x18] sm:$0xf]
  %v2779 = vld [vmem:[%s17 + $0x1c] sm:$0xf]
  %v2780 = vpack.c.bf16 %v2596, %v2595
  %v2781 = vpack.c.bf16 %v2598, %v2597
  %v2782 = vpack.c.bf16 %v2600, %v2599
  %v2783 = vpack.c.bf16 %v2602, %v2601
  %v2784 = vpack.c.bf16 %v2604, %v2603
  %v2785 = vpack.c.bf16 %v2606, %v2605
  %v2786 = vpack.c.bf16 %v2608, %v2607
  %v2787 = vpack.c.bf16 %v2610, %v2609
  %v2788 = vld [vmem:[%s18] sm:$0xff]
  %v2789 = vld [vmem:[%s18 + $0x8] sm:$0xff]
  %v2790 = vld [vmem:[%s18 + $0x10] sm:$0xff]
  %v2791 = vld [vmem:[%s18 + $0x18] sm:$0xff]
  %v2792 = vld [vmem:[%s18 + $0x20] sm:$0xff]
  %v2793 = vld [vmem:[%s18 + $0x28] sm:$0xff]
  %v2794 = vld [vmem:[%s18 + $0x30] sm:$0xff]
  %v2795 = vld [vmem:[%s18 + $0x38] sm:$0xff]
  %2797 = vset.pattern.permute.xlu0 0
  %2798 = vperm.xlu0 %2797, %v2788
  %v2799 = vpop.permute.xlu0 %2798
  %2802 = vset.pattern.permute.xlu0 0
  %2803 = vperm.xlu0 %2802, %v2789
  %v2804 = vpop.permute.xlu0 %2803
  %2807 = vset.pattern.permute.xlu0 0
  %2808 = vperm.xlu0 %2807, %v2790
  %v2809 = vpop.permute.xlu0 %2808
  %2812 = vset.pattern.permute.xlu0 0
  %2813 = vperm.xlu0 %2812, %v2791
  %v2814 = vpop.permute.xlu0 %2813
  %2817 = vset.pattern.permute.xlu0 0
  %2818 = vperm.xlu0 %2817, %v2792
  %v2819 = vpop.permute.xlu0 %2818
  %2822 = vset.pattern.permute.xlu0 0
  %2823 = vperm.xlu0 %2822, %v2793
  %v2824 = vpop.permute.xlu0 %2823
  %2827 = vset.pattern.permute.xlu0 0
  %2828 = vperm.xlu0 %2827, %v2794
  %v2829 = vpop.permute.xlu0 %2828
  %2832 = vset.pattern.permute.xlu0 0
  %2833 = vperm.xlu0 %2832, %v2795
  %v2834 = vpop.permute.xlu0 %2833
  %v2844 = vunpack.c.l.b16 %v2772
  %v2845 = vunpack.c.l.b16 %v2773
  %v2846 = vunpack.c.l.b16 %v2774
  %v2847 = vunpack.c.l.b16 %v2775
  %v2848 = vunpack.c.l.b16 %v2776
  %v2849 = vunpack.c.l.b16 %v2777
  %v2850 = vunpack.c.l.b16 %v2778
  %v2851 = vunpack.c.l.b16 %v2779
  %v2852 = vpack.c.b16 %v2845, %v2844
  %v2853 = vpack.c.b16 %v2847, %v2846
  %v2854 = vpack.c.b16 %v2849, %v2848
  %v2855 = vpack.c.b16 %v2851, %v2850
  %2860 = vmatprep.subr.bf16.mxu0 0
  %2861 = vmatpush1.bf16.msra.mxu0 %v2780
  %2862 = vmatprep.subr.bf16.mxu0 0
  %2863 = vmatpush1.bf16.msra.mxu0 %v2781
  %2864 = vmatprep.subr.bf16.mxu0 0
  %2865 = vmatpush1.bf16.msra.mxu0 %v2782
  %2866 = vmatprep.subr.bf16.mxu0 0
  %2867 = vmatpush1.bf16.msra.mxu0 %v2783
  %2868 = vmatprep.subr.bf16.mxu0 0
  %2869 = vmatpush1.bf16.msra.mxu0 %v2784
  %2870 = vmatprep.subr.bf16.mxu0 0
  %2871 = vmatpush1.bf16.msra.mxu0 %v2785
  %2872 = vmatprep.subr.bf16.mxu0 0
  %2873 = vmatpush1.bf16.msra.mxu0 %v2786
  %2874 = vmatprep.subr.bf16.mxu0 0
  %2875 = vmatpush1.bf16.msra.mxu0 %v2787
  %2876 = vmatprep.subr.bf16.mxu0 0
  %2877 = vmatpush1.bf16.msra.mxu0 0
  %2878 = vmatprep.subr.bf16.mxu0 0
  %2879 = vmatpush1.bf16.msra.mxu0 0
  %2880 = vmatprep.subr.bf16.mxu0 0
  %2881 = vmatpush1.bf16.msra.mxu0 0
  %2882 = vmatprep.subr.bf16.mxu0 0
  %2883 = vmatpush1.bf16.msra.mxu0 0
  %2884 = vmatprep.subr.bf16.mxu0 0
  %2885 = vmatpush1.bf16.msra.mxu0 0
  %2886 = vmatprep.subr.bf16.mxu0 0
  %2887 = vmatpush1.bf16.msra.mxu0 0
  %2888 = vmatprep.subr.bf16.mxu0 0
  %2889 = vmatpush1.bf16.msra.mxu0 0
  %2890 = vmatprep.subr.bf16.mxu0 0
  %2891 = vmatpush1.bf16.msra.mxu0 0
  %2892 = vmatprep.mubr.bf16.mxu0 0
  %2893 = vmatmul.mubr.bf16.gmra.mrb[0].mxu0 %v2852
  %v2894 = vpop.f32.mrb[0].mxu0
  %v2895 = vadd.f32 %v2799, %v2894
  %v2896 = vpop.f32.mrb[0].mxu0
  %v2897 = vpop.f32.mrb[0].mxu0
  %v2898 = vadd.f32 %v2804, %v2897
  %v2899 = vpop.f32.mrb[0].mxu0
  %2900 = vmatprep.mubr.bf16.mxu0 0
  %2901 = vmatmul.mubr.bf16.gmra.mrb[0].mxu0 %v2853
  %v2902 = vpop.f32.mrb[0].mxu0
  %v2903 = vadd.f32 %v2809, %v2902
  %v2904 = vpop.f32.mrb[0].mxu0
  %v2905 = vpop.f32.mrb[0].mxu0
  %v2906 = vadd.f32 %v2814, %v2905
  %v2907 = vpop.f32.mrb[0].mxu0
  %2908 = vmatprep.mubr.bf16.mxu0 0
  %2909 = vmatmul.mubr.bf16.gmra.mrb[0].mxu0 %v2854
  %v2910 = vpop.f32.mrb[0].mxu0
  %v2911 = vadd.f32 %v2819, %v2910
  %v2912 = vpop.f32.mrb[0].mxu0
  %v2913 = vpop.f32.mrb[0].mxu0
  %v2914 = vadd.f32 %v2824, %v2913
  %v2915 = vpop.f32.mrb[0].mxu0
  %2916 = vmatprep.mubr.bf16.mxu0 0
  %2917 = vmatmul.mubr.bf16.gmra.mrb[0].mxu0 %v2855
  %v2918 = vpop.f32.mrb[0].mxu0
  %v2919 = vadd.f32 %v2829, %v2918
  %v2920 = vpop.f32.mrb[0].mxu0
  %v2921 = vpop.f32.mrb[0].mxu0
  %v2922 = vadd.f32 %v2834, %v2921
  %v2923 = vpop.f32.mrb[0].mxu0
  %2924 = vdwg.mxu0
  %v2925 = vmax.f32 %v2895, 0.0
  %v2926 = vmax.f32 %v2898, 0.0
  %v2927 = vmax.f32 %v2903, 0.0
  %v2928 = vmax.f32 %v2906, 0.0
  %v2929 = vmax.f32 %v2911, 0.0
  %v2930 = vmax.f32 %v2914, 0.0
  %v2931 = vmax.f32 %v2919, 0.0
  %v2932 = vmax.f32 %v2922, 0.0
  %v2933 = vld [vmem:[%s19] sm:$0x1]
  %v2934 = vpack.c.bf16 %v2926, %v2925
  %v2935 = vpack.c.bf16 %v2928, %v2927
  %v2936 = vpack.c.bf16 %v2930, %v2929
  %v2937 = vpack.c.bf16 %v2932, %v2931
  %v2938 = vld [vmem:[#allocation5] sm:$0x1]
  %2940 = vset.pattern.permute.xlu0 0
  %2941 = vperm.xlu0 %2940, %v2938
  %v2942 = vpop.permute.xlu0 %2941
  %v2944 = vlaneseq
  %v2945 = vshrl.u32 %v2944, 7
  %v2946 = vsub.s32 0, %v2945
  %v2947 = vrot.slane %v2942, %v2946
  %v2949 = vsel %vm575, %v2933, 0
  %2951 = vmatprep.subr.bf16.mxu0 0
  %2952 = vmatpush1.bf16.msra.mxu0 %v2934
  %2953 = vmatprep.subr.bf16.mxu0 0
  %2954 = vmatpush1.bf16.msra.mxu0 %v2935
  %2955 = vmatprep.subr.bf16.mxu0 0
  %2956 = vmatpush1.bf16.msra.mxu0 %v2936
  %2957 = vmatprep.subr.bf16.mxu0 0
  %2958 = vmatpush1.bf16.msra.mxu0 %v2937
  %2959 = vmatprep.subr.bf16.mxu0 0
  %2960 = vmatpush1.bf16.msra.mxu0 0
  %2961 = vmatprep.subr.bf16.mxu0 0
  %2962 = vmatpush1.bf16.msra.mxu0 0
  %2963 = vmatprep.subr.bf16.mxu0 0
  %2964 = vmatpush1.bf16.msra.mxu0 0
  %2965 = vmatprep.subr.bf16.mxu0 0
  %2966 = vmatpush1.bf16.msra.mxu0 0
  %2967 = vmatprep.subr.bf16.mxu0 0
  %2968 = vmatpush1.bf16.msra.mxu0 0
  %2969 = vmatprep.subr.bf16.mxu0 0
  %2970 = vmatpush1.bf16.msra.mxu0 0
  %2971 = vmatprep.subr.bf16.mxu0 0
  %2972 = vmatpush1.bf16.msra.mxu0 0
  %2973 = vmatprep.subr.bf16.mxu0 0
  %2974 = vmatpush1.bf16.msra.mxu0 0
  %2975 = vmatprep.subr.bf16.mxu0 0
  %2976 = vmatpush1.bf16.msra.mxu0 0
  %2977 = vmatprep.subr.bf16.mxu0 0
  %2978 = vmatpush1.bf16.msra.mxu0 0
  %2979 = vmatprep.subr.bf16.mxu0 0
  %2980 = vmatpush1.bf16.msra.mxu0 0
  %2981 = vmatprep.subr.bf16.mxu0 0
  %2982 = vmatpush1.bf16.msra.mxu0 0
  %2983 = vmatprep.mubr.bf16.mxu0 0
  %2984 = vmatmul.mubr.bf16.gmra.mrb[0].mxu0 %v2949
  %v2985 = vpop.f32.mrb[0].mxu0
  %v2986 = vadd.f32 %v2947, %v2985
  %v2987 = vpop.f32.mrb[0].mxu0
  %v2988 = vpop.f32.mrb[0].mxu0
  %v2989 = vpop.f32.mrb[0].mxu0
  %2990 = vdwg.mxu0
  %v2991 = vxor.u32 %v2986, 2147483648
  %v2992 = vmul.f32 %v2991, 1.442695
  %v2993 = vpow.pop %v2992
  %v2994 = vadd.f32 %v2993, 1.0
  %v2995 = vrcp.pop %v2994
  %v2996 = vmul.f32 1.0, %v2995
  %v2997 = vlaneseq
  %v2998 = vshrl.u32 %v2997, 7
  %v2999 = vsub.s32 0, %v2998
  %v3000 = vrot.slane %v2996, %v2999
  %v3001 = vmul.f32 %v2595, %v3000
  %v3002 = vmul.f32 %v2596, %v3000
  %v3003 = vmul.f32 %v2597, %v3000
  %v3004 = vmul.f32 %v2598, %v3000
  %v3005 = vmul.f32 %v2599, %v3000
  %v3006 = vmul.f32 %v2600, %v3000
  %v3007 = vmul.f32 %v2601, %v3000
  %v3008 = vmul.f32 %v2602, %v3000
  %v3009 = vmul.f32 %v2603, %v3000
  %v3010 = vmul.f32 %v2604, %v3000
  %v3011 = vmul.f32 %v2605, %v3000
  %v3012 = vmul.f32 %v2606, %v3000
  %v3013 = vmul.f32 %v2607, %v3000
  %v3014 = vmul.f32 %v2608, %v3000
  %v3015 = vmul.f32 %v2609, %v3000
  %v3016 = vmul.f32 %v2610, %v3000
  %3017 = vmatprep.subr.mxu0 0.0
  %3018 = vmatpush1.msra.mxu0 %v2579
  %3019 = vmatprep.subr.mxu0 0.0
  %3020 = vmatpush1.msra.mxu0 %v2580
  %3021 = vmatprep.subr.mxu0 0.0
  %3022 = vmatpush1.msra.mxu0 %v2581
  %3023 = vmatprep.subr.mxu0 0.0
  %3024 = vmatpush1.msra.mxu0 %v2582
  %3025 = vmatprep.subr.mxu0 0.0
  %3026 = vmatpush1.msra.mxu0 %v2583
  %3027 = vmatprep.subr.mxu0 0.0
  %3028 = vmatpush1.msra.mxu0 %v2584
  %3029 = vmatprep.subr.mxu0 0.0
  %3030 = vmatpush1.msra.mxu0 %v2585
  %3031 = vmatprep.subr.mxu0 0.0
  %3032 = vmatpush1.msra.mxu0 %v2586
  %3033 = vmatprep.subr.mxu0 0.0
  %3034 = vmatpush1.msra.mxu0 %v2587
  %3035 = vmatprep.subr.mxu0 0.0
  %3036 = vmatpush1.msra.mxu0 %v2588
  %3037 = vmatprep.subr.mxu0 0.0
  %3038 = vmatpush1.msra.mxu0 %v2589
  %3039 = vmatprep.subr.mxu0 0.0
  %3040 = vmatpush1.msra.mxu0 %v2590
  %3041 = vmatprep.subr.mxu0 0.0
  %3042 = vmatpush1.msra.mxu0 %v2591
  %3043 = vmatprep.subr.mxu0 0.0
  %3044 = vmatpush1.msra.mxu0 %v2592
  %3045 = vmatprep.subr.mxu0 0.0
  %3046 = vmatpush1.msra.mxu0 %v2593
  %3047 = vmatprep.subr.mxu0 0.0
  %3048 = vmatpush1.msra.mxu0 %v2594
  %3049 = vmatprep.subr.mxu0 0.0
  %3050 = vmatpush1.msra.mxu0 0.0
  %3051 = vmatprep.subr.mxu0 0.0
  %3052 = vmatpush1.msra.mxu0 0.0
  %3053 = vmatprep.subr.mxu0 0.0
  %3054 = vmatpush1.msra.mxu0 0.0
  %3055 = vmatprep.subr.mxu0 0.0
  %3056 = vmatpush1.msra.mxu0 0.0
  %3057 = vmatprep.subr.mxu0 0.0
  %3058 = vmatpush1.msra.mxu0 0.0
  %3059 = vmatprep.subr.mxu0 0.0
  %3060 = vmatpush1.msra.mxu0 0.0
  %3061 = vmatprep.subr.mxu0 0.0
  %3062 = vmatpush1.msra.mxu0 0.0
  %3063 = vmatprep.subr.mxu0 0.0
  %3064 = vmatpush1.msra.mxu0 0.0
  %3065 = vmatprep.subr.mxu0 0.0
  %3066 = vmatpush1.msra.mxu0 0.0
  %3067 = vmatprep.subr.mxu0 0.0
  %3068 = vmatpush1.msra.mxu0 0.0
  %3069 = vmatprep.subr.mxu0 0.0
  %3070 = vmatpush1.msra.mxu0 0.0
  %3071 = vmatprep.subr.mxu0 0.0
  %3072 = vmatpush1.msra.mxu0 0.0
  %3073 = vmatprep.subr.mxu0 0.0
  %3074 = vmatpush1.msra.mxu0 0.0
  %3075 = vmatprep.subr.mxu0 0.0
  %3076 = vmatpush1.msra.mxu0 0.0
  %3077 = vmatprep.subr.mxu0 0.0
  %3078 = vmatpush1.msra.mxu0 0.0
  %3079 = vmatprep.subr.mxu0 0.0
  %3080 = vmatpush1.msra.mxu0 0.0
  %3081 = vmatprep.mubr.f32.mxu0 0.0
  %3082 = vmatmul.mubr.f32.gmra.mrb[0].mxu0 %v3001
  %v3083 = vpop.f32.mrb[0].mxu0
  %v3084 = vadd.f32 0.0, %v3083
  %v3085 = vpop.f32.mrb[0].mxu0
  %3086 = vmatprep.mubr.f32.mxu0 0.0
  %3087 = vmatmul.mubr.f32.gmra.mrb[0].mxu0 %v3002
  %v3088 = vpop.f32.mrb[0].mxu0
  %v3089 = vadd.f32 0.0, %v3088
  %v3090 = vpop.f32.mrb[0].mxu0
  %3091 = vmatprep.mubr.f32.mxu0 0.0
  %3092 = vmatmul.mubr.f32.gmra.mrb[0].mxu0 %v3003
  %v3093 = vpop.f32.mrb[0].mxu0
  %v3094 = vadd.f32 0.0, %v3093
  %v3095 = vpop.f32.mrb[0].mxu0
  %3096 = vmatprep.mubr.f32.mxu0 0.0
  %3097 = vmatmul.mubr.f32.gmra.mrb[0].mxu0 %v3004
  %v3098 = vpop.f32.mrb[0].mxu0
  %v3099 = vadd.f32 0.0, %v3098
  %v3100 = vpop.f32.mrb[0].mxu0
  %3101 = vmatprep.mubr.f32.mxu0 0.0
  %3102 = vmatmul.mubr.f32.gmra.mrb[0].mxu0 %v3005
  %v3103 = vpop.f32.mrb[0].mxu0
  %v3104 = vadd.f32 0.0, %v3103
  %v3105 = vpop.f32.mrb[0].mxu0
  %3106 = vmatprep.mubr.f32.mxu0 0.0
  %3107 = vmatmul.mubr.f32.gmra.mrb[0].mxu0 %v3006
  %v3108 = vpop.f32.mrb[0].mxu0
  %v3109 = vadd.f32 0.0, %v3108
  %v3110 = vpop.f32.mrb[0].mxu0
  %3111 = vmatprep.mubr.f32.mxu0 0.0
  %3112 = vmatmul.mubr.f32.gmra.mrb[0].mxu0 %v3007
  %v3113 = vpop.f32.mrb[0].mxu0
  %v3114 = vadd.f32 0.0, %v3113
  %v3115 = vpop.f32.mrb[0].mxu0
  %3116 = vmatprep.mubr.f32.mxu0 0.0
  %3117 = vmatmul.mubr.f32.gmra.mrb[0].mxu0 %v3008
  %v3118 = vpop.f32.mrb[0].mxu0
  %v3119 = vadd.f32 0.0, %v3118
  %v3120 = vpop.f32.mrb[0].mxu0
  %3121 = vmatprep.mubr.f32.mxu0 0.0
  %3122 = vmatmul.mubr.f32.gmra.mrb[0].mxu0 %v3009
  %v3123 = vpop.f32.mrb[0].mxu0
  %v3124 = vadd.f32 0.0, %v3123
  %v3125 = vpop.f32.mrb[0].mxu0
  %3126 = vmatprep.mubr.f32.mxu0 0.0
  %3127 = vmatmul.mubr.f32.gmra.mrb[0].mxu0 %v3010
  %v3128 = vpop.f32.mrb[0].mxu0
  %v3129 = vadd.f32 0.0, %v3128
  %v3130 = vpop.f32.mrb[0].mxu0
  %3131 = vmatprep.mubr.f32.mxu0 0.0
  %3132 = vmatmul.mubr.f32.gmra.mrb[0].mxu0 %v3011
  %v3133 = vpop.f32.mrb[0].mxu0
  %v3134 = vadd.f32 0.0, %v3133
  %v3135 = vpop.f32.mrb[0].mxu0
  %3136 = vmatprep.mubr.f32.mxu0 0.0
  %3137 = vmatmul.mubr.f32.gmra.mrb[0].mxu0 %v3012
  %v3138 = vpop.f32.mrb[0].mxu0
  %v3139 = vadd.f32 0.0, %v3138
  %v3140 = vpop.f32.mrb[0].mxu0
  %3141 = vmatprep.mubr.f32.mxu0 0.0
  %3142 = vmatmul.mubr.f32.gmra.mrb[0].mxu0 %v3013
  %v3143 = vpop.f32.mrb[0].mxu0
  %v3144 = vadd.f32 0.0, %v3143
  %v3145 = vpop.f32.mrb[0].mxu0
  %3146 = vmatprep.mubr.f32.mxu0 0.0
  %3147 = vmatmul.mubr.f32.gmra.mrb[0].mxu0 %v3014
  %v3148 = vpop.f32.mrb[0].mxu0
  %v3149 = vadd.f32 0.0, %v3148
  %v3150 = vpop.f32.mrb[0].mxu0
  %3151 = vmatprep.mubr.f32.mxu0 0.0
  %3152 = vmatmul.mubr.f32.gmra.mrb[0].mxu0 %v3015
  %v3153 = vpop.f32.mrb[0].mxu0
  %v3154 = vadd.f32 0.0, %v3153
  %v3155 = vpop.f32.mrb[0].mxu0
  %3156 = vmatprep.mubr.f32.mxu0 0.0
  %3157 = vmatmul.mubr.f32.gmra.mrb[0].mxu0 %v3016
  %v3158 = vpop.f32.mrb[0].mxu0
  %v3159 = vadd.f32 0.0, %v3158
  %v3160 = vpop.f32.mrb[0].mxu0
  %3161 = vdwg.mxu0
  %3162 = vrot.lane.b32.xlu0 %v2595, 127
  %v3163 = vpop.permute.xlu0 %3162
  %3164 = vrot.lane.b32.xlu0 %v2596, 127
  %v3165 = vpop.permute.xlu0 %3164
  %3166 = vrot.lane.b32.xlu0 %v2597, 127
  %v3167 = vpop.permute.xlu0 %3166
  %3168 = vrot.lane.b32.xlu0 %v2598, 127
  %v3169 = vpop.permute.xlu0 %3168
  %3170 = vrot.lane.b32.xlu0 %v2599, 127
  %v3171 = vpop.permute.xlu0 %3170
  %3172 = vrot.lane.b32.xlu0 %v2600, 127
  %v3173 = vpop.permute.xlu0 %3172
  %3174 = vrot.lane.b32.xlu0 %v2601, 127
  %v3175 = vpop.permute.xlu0 %3174
  %3176 = vrot.lane.b32.xlu0 %v2602, 127
  %v3177 = vpop.permute.xlu0 %3176
  %3178 = vrot.lane.b32.xlu0 %v2603, 127
  %v3179 = vpop.permute.xlu0 %3178
  %3180 = vrot.lane.b32.xlu0 %v2604, 127
  %v3181 = vpop.permute.xlu0 %3180
  %3182 = vrot.lane.b32.xlu0 %v2605, 127
  %v3183 = vpop.permute.xlu0 %3182
  %3184 = vrot.lane.b32.xlu0 %v2606, 127
  %v3185 = vpop.permute.xlu0 %3184
  %3186 = vrot.lane.b32.xlu0 %v2607, 127
  %v3187 = vpop.permute.xlu0 %3186
  %3188 = vrot.lane.b32.xlu0 %v2608, 127
  %v3189 = vpop.permute.xlu0 %3188
  %3190 = vrot.lane.b32.xlu0 %v2609, 127
  %v3191 = vpop.permute.xlu0 %3190
  %3192 = vrot.lane.b32.xlu0 %v2610, 127
  %v3193 = vpop.permute.xlu0 %3192
  %v3194 = vld [vmem:[%s14] sm:$0x1]
  %v3196 = vlaneseq
  %v3197 = vshrl.u32 %v3196, 7
  %v3198 = vsub.s32 0, %v3197
  %v3199 = vrot.slane %v3194, %v3198
  %v3201 = vadd.f32 %v3163, %v3199
  %v3202 = vadd.f32 %v3165, %v3199
  %v3203 = vadd.f32 %v3167, %v3199
  %v3204 = vadd.f32 %v3169, %v3199
  %v3205 = vadd.f32 %v3171, %v3199
  %v3206 = vadd.f32 %v3173, %v3199
  %v3207 = vadd.f32 %v3175, %v3199
  %v3208 = vadd.f32 %v3177, %v3199
  %v3209 = vadd.f32 %v3179, %v3199
  %v3210 = vadd.f32 %v3181, %v3199
  %v3211 = vadd.f32 %v3183, %v3199
  %v3212 = vadd.f32 %v3185, %v3199
  %v3213 = vadd.f32 %v3187, %v3199
  %v3214 = vadd.f32 %v3189, %v3199
  %v3215 = vadd.f32 %v3191, %v3199
  %v3216 = vadd.f32 %v3193, %v3199
  %v3217 = vmax.f32 %v2595, %v3201
  %v3218 = vmax.f32 %v2596, %v3202
  %v3219 = vmax.f32 %v2597, %v3203
  %v3220 = vmax.f32 %v2598, %v3204
  %v3221 = vmax.f32 %v2599, %v3205
  %v3222 = vmax.f32 %v2600, %v3206
  %v3223 = vmax.f32 %v2601, %v3207
  %v3224 = vmax.f32 %v2602, %v3208
  %v3225 = vmax.f32 %v2603, %v3209
  %v3226 = vmax.f32 %v2604, %v3210
  %v3227 = vmax.f32 %v2605, %v3211
  %v3228 = vmax.f32 %v2606, %v3212
  %v3229 = vmax.f32 %v2607, %v3213
  %v3230 = vmax.f32 %v2608, %v3214
  %v3231 = vmax.f32 %v2609, %v3215
  %v3232 = vmax.f32 %v2610, %v3216
  %3233 = vrot.lane.b32.xlu0 %v3217, 126
  %v3234 = vpop.permute.xlu0 %3233
  %3235 = vrot.lane.b32.xlu0 %v3218, 126
  %v3236 = vpop.permute.xlu0 %3235
  %3237 = vrot.lane.b32.xlu0 %v3219, 126
  %v3238 = vpop.permute.xlu0 %3237
  %3239 = vrot.lane.b32.xlu0 %v3220, 126
  %v3240 = vpop.permute.xlu0 %3239
  %3241 = vrot.lane.b32.xlu0 %v3221, 126
  %v3242 = vpop.permute.xlu0 %3241
  %3243 = vrot.lane.b32.xlu0 %v3222, 126
  %v3244 = vpop.permute.xlu0 %3243
  %3245 = vrot.lane.b32.xlu0 %v3223, 126
  %v3246 = vpop.permute.xlu0 %3245
  %3247 = vrot.lane.b32.xlu0 %v3224, 126
  %v3248 = vpop.permute.xlu0 %3247
  %3249 = vrot.lane.b32.xlu0 %v3225, 126
  %v3250 = vpop.permute.xlu0 %3249
  %3251 = vrot.lane.b32.xlu0 %v3226, 126
  %v3252 = vpop.permute.xlu0 %3251
  %3253 = vrot.lane.b32.xlu0 %v3227, 126
  %v3254 = vpop.permute.xlu0 %3253
  %3255 = vrot.lane.b32.xlu0 %v3228, 126
  %v3256 = vpop.permute.xlu0 %3255
  %3257 = vrot.lane.b32.xlu0 %v3229, 126
  %v3258 = vpop.permute.xlu0 %3257
  %3259 = vrot.lane.b32.xlu0 %v3230, 126
  %v3260 = vpop.permute.xlu0 %3259
  %3261 = vrot.lane.b32.xlu0 %v3231, 126
  %v3262 = vpop.permute.xlu0 %3261
  %3263 = vrot.lane.b32.xlu0 %v3232, 126
  %v3264 = vpop.permute.xlu0 %3263
  %s3265 = scalar_lea.vmem %s14, 1
  %v3266 = vld [vmem:[%s3265] sm:$0x1]
  %v3268 = vlaneseq
  %v3269 = vshrl.u32 %v3268, 7
  %v3270 = vsub.s32 0, %v3269
  %v3271 = vrot.slane %v3266, %v3270
  %v3273 = vadd.f32 %v3234, %v3271
  %v3274 = vadd.f32 %v3236, %v3271
  %v3275 = vadd.f32 %v3238, %v3271
  %v3276 = vadd.f32 %v3240, %v3271
  %v3277 = vadd.f32 %v3242, %v3271
  %v3278 = vadd.f32 %v3244, %v3271
  %v3279 = vadd.f32 %v3246, %v3271
  %v3280 = vadd.f32 %v3248, %v3271
  %v3281 = vadd.f32 %v3250, %v3271
  %v3282 = vadd.f32 %v3252, %v3271
  %v3283 = vadd.f32 %v3254, %v3271
  %v3284 = vadd.f32 %v3256, %v3271
  %v3285 = vadd.f32 %v3258, %v3271
  %v3286 = vadd.f32 %v3260, %v3271
  %v3287 = vadd.f32 %v3262, %v3271
  %v3288 = vadd.f32 %v3264, %v3271
  %v3289 = vmax.f32 %v3217, %v3273
  %v3290 = vmax.f32 %v3218, %v3274
  %v3291 = vmax.f32 %v3219, %v3275
  %v3292 = vmax.f32 %v3220, %v3276
  %v3293 = vmax.f32 %v3221, %v3277
  %v3294 = vmax.f32 %v3222, %v3278
  %v3295 = vmax.f32 %v3223, %v3279
  %v3296 = vmax.f32 %v3224, %v3280
  %v3297 = vmax.f32 %v3225, %v3281
  %v3298 = vmax.f32 %v3226, %v3282
  %v3299 = vmax.f32 %v3227, %v3283
  %v3300 = vmax.f32 %v3228, %v3284
  %v3301 = vmax.f32 %v3229, %v3285
  %v3302 = vmax.f32 %v3230, %v3286
  %v3303 = vmax.f32 %v3231, %v3287
  %v3304 = vmax.f32 %v3232, %v3288
  %3305 = vrot.lane.b32.xlu0 %v3289, 124
  %v3306 = vpop.permute.xlu0 %3305
  %3307 = vrot.lane.b32.xlu0 %v3290, 124
  %v3308 = vpop.permute.xlu0 %3307
  %3309 = vrot.lane.b32.xlu0 %v3291, 124
  %v3310 = vpop.permute.xlu0 %3309
  %3311 = vrot.lane.b32.xlu0 %v3292, 124
  %v3312 = vpop.permute.xlu0 %3311
  %3313 = vrot.lane.b32.xlu0 %v3293, 124
  %v3314 = vpop.permute.xlu0 %3313
  %3315 = vrot.lane.b32.xlu0 %v3294, 124
  %v3316 = vpop.permute.xlu0 %3315
  %3317 = vrot.lane.b32.xlu0 %v3295, 124
  %v3318 = vpop.permute.xlu0 %3317
  %3319 = vrot.lane.b32.xlu0 %v3296, 124
  %v3320 = vpop.permute.xlu0 %3319
  %3321 = vrot.lane.b32.xlu0 %v3297, 124
  %v3322 = vpop.permute.xlu0 %3321
  %3323 = vrot.lane.b32.xlu0 %v3298, 124
  %v3324 = vpop.permute.xlu0 %3323
  %3325 = vrot.lane.b32.xlu0 %v3299, 124
  %v3326 = vpop.permute.xlu0 %3325
  %3327 = vrot.lane.b32.xlu0 %v3300, 124
  %v3328 = vpop.permute.xlu0 %3327
  %3329 = vrot.lane.b32.xlu0 %v3301, 124
  %v3330 = vpop.permute.xlu0 %3329
  %3331 = vrot.lane.b32.xlu0 %v3302, 124
  %v3332 = vpop.permute.xlu0 %3331
  %3333 = vrot.lane.b32.xlu0 %v3303, 124
  %v3334 = vpop.permute.xlu0 %3333
  %3335 = vrot.lane.b32.xlu0 %v3304, 124
  %v3336 = vpop.permute.xlu0 %3335
  %s3337 = scalar_lea.vmem %s14, 2
  %v3338 = vld [vmem:[%s3337] sm:$0x1]
  %v3340 = vlaneseq
  %v3341 = vshrl.u32 %v3340, 7
  %v3342 = vsub.s32 0, %v3341
  %v3343 = vrot.slane %v3338, %v3342
  %v3345 = vadd.f32 %v3306, %v3343
  %v3346 = vadd.f32 %v3308, %v3343
  %v3347 = vadd.f32 %v3310, %v3343
  %v3348 = vadd.f32 %v3312, %v3343
  %v3349 = vadd.f32 %v3314, %v3343
  %v3350 = vadd.f32 %v3316, %v3343
  %v3351 = vadd.f32 %v3318, %v3343
  %v3352 = vadd.f32 %v3320, %v3343
  %v3353 = vadd.f32 %v3322, %v3343
  %v3354 = vadd.f32 %v3324, %v3343
  %v3355 = vadd.f32 %v3326, %v3343
  %v3356 = vadd.f32 %v3328, %v3343
  %v3357 = vadd.f32 %v3330, %v3343
  %v3358 = vadd.f32 %v3332, %v3343
  %v3359 = vadd.f32 %v3334, %v3343
  %v3360 = vadd.f32 %v3336, %v3343
  %v3361 = vmax.f32 %v3289, %v3345
  %v3362 = vmax.f32 %v3290, %v3346
  %v3363 = vmax.f32 %v3291, %v3347
  %v3364 = vmax.f32 %v3292, %v3348
  %v3365 = vmax.f32 %v3293, %v3349
  %v3366 = vmax.f32 %v3294, %v3350
  %v3367 = vmax.f32 %v3295, %v3351
  %v3368 = vmax.f32 %v3296, %v3352
  %v3369 = vmax.f32 %v3297, %v3353
  %v3370 = vmax.f32 %v3298, %v3354
  %v3371 = vmax.f32 %v3299, %v3355
  %v3372 = vmax.f32 %v3300, %v3356
  %v3373 = vmax.f32 %v3301, %v3357
  %v3374 = vmax.f32 %v3302, %v3358
  %v3375 = vmax.f32 %v3303, %v3359
  %v3376 = vmax.f32 %v3304, %v3360
  %3377 = vrot.lane.b32.xlu0 %v3361, 120
  %v3378 = vpop.permute.xlu0 %3377
  %3379 = vrot.lane.b32.xlu0 %v3362, 120
  %v3380 = vpop.permute.xlu0 %3379
  %3381 = vrot.lane.b32.xlu0 %v3363, 120
  %v3382 = vpop.permute.xlu0 %3381
  %3383 = vrot.lane.b32.xlu0 %v3364, 120
  %v3384 = vpop.permute.xlu0 %3383
  %3385 = vrot.lane.b32.xlu0 %v3365, 120
  %v3386 = vpop.permute.xlu0 %3385
  %3387 = vrot.lane.b32.xlu0 %v3366, 120
  %v3388 = vpop.permute.xlu0 %3387
  %3389 = vrot.lane.b32.xlu0 %v3367, 120
  %v3390 = vpop.permute.xlu0 %3389
  %3391 = vrot.lane.b32.xlu0 %v3368, 120
  %v3392 = vpop.permute.xlu0 %3391
  %3393 = vrot.lane.b32.xlu0 %v3369, 120
  %v3394 = vpop.permute.xlu0 %3393
  %3395 = vrot.lane.b32.xlu0 %v3370, 120
  %v3396 = vpop.permute.xlu0 %3395
  %3397 = vrot.lane.b32.xlu0 %v3371, 120
  %v3398 = vpop.permute.xlu0 %3397
  %3399 = vrot.lane.b32.xlu0 %v3372, 120
  %v3400 = vpop.permute.xlu0 %3399
  %3401 = vrot.lane.b32.xlu0 %v3373, 120
  %v3402 = vpop.permute.xlu0 %3401
  %3403 = vrot.lane.b32.xlu0 %v3374, 120
  %v3404 = vpop.permute.xlu0 %3403
  %3405 = vrot.lane.b32.xlu0 %v3375, 120
  %v3406 = vpop.permute.xlu0 %3405
  %3407 = vrot.lane.b32.xlu0 %v3376, 120
  %v3408 = vpop.permute.xlu0 %3407
  %s3409 = scalar_lea.vmem %s14, 3
  %v3410 = vld [vmem:[%s3409] sm:$0x1]
  %v3412 = vlaneseq
  %v3413 = vshrl.u32 %v3412, 7
  %v3414 = vsub.s32 0, %v3413
  %v3415 = vrot.slane %v3410, %v3414
  %v3417 = vadd.f32 %v3378, %v3415
  %v3418 = vadd.f32 %v3380, %v3415
  %v3419 = vadd.f32 %v3382, %v3415
  %v3420 = vadd.f32 %v3384, %v3415
  %v3421 = vadd.f32 %v3386, %v3415
  %v3422 = vadd.f32 %v3388, %v3415
  %v3423 = vadd.f32 %v3390, %v3415
  %v3424 = vadd.f32 %v3392, %v3415
  %v3425 = vadd.f32 %v3394, %v3415
  %v3426 = vadd.f32 %v3396, %v3415
  %v3427 = vadd.f32 %v3398, %v3415
  %v3428 = vadd.f32 %v3400, %v3415
  %v3429 = vadd.f32 %v3402, %v3415
  %v3430 = vadd.f32 %v3404, %v3415
  %v3431 = vadd.f32 %v3406, %v3415
  %v3432 = vadd.f32 %v3408, %v3415
  %v3433 = vmax.f32 %v3361, %v3417
  %v3434 = vmax.f32 %v3362, %v3418
  %v3435 = vmax.f32 %v3363, %v3419
  %v3436 = vmax.f32 %v3364, %v3420
  %v3437 = vmax.f32 %v3365, %v3421
  %v3438 = vmax.f32 %v3366, %v3422
  %v3439 = vmax.f32 %v3367, %v3423
  %v3440 = vmax.f32 %v3368, %v3424
  %v3441 = vmax.f32 %v3369, %v3425
  %v3442 = vmax.f32 %v3370, %v3426
  %v3443 = vmax.f32 %v3371, %v3427
  %v3444 = vmax.f32 %v3372, %v3428
  %v3445 = vmax.f32 %v3373, %v3429
  %v3446 = vmax.f32 %v3374, %v3430
  %v3447 = vmax.f32 %v3375, %v3431
  %v3448 = vmax.f32 %v3376, %v3432
  %v3449 = vld [vmem:[%s16] sm:$0xff]
  %v3450 = vld [vmem:[%s16 + $0x8] sm:$0xff]
  %v3451 = vld [vmem:[%s16 + $0x10] sm:$0xff]
  %v3452 = vld [vmem:[%s16 + $0x18] sm:$0xff]
  %v3453 = vld [vmem:[%s16 + $0x20] sm:$0xff]
  %v3454 = vld [vmem:[%s16 + $0x28] sm:$0xff]
  %v3455 = vld [vmem:[%s16 + $0x30] sm:$0xff]
  %v3456 = vld [vmem:[%s16 + $0x38] sm:$0xff]
  %v3457 = vld [vmem:[%s16 + $0x40] sm:$0xff]
  %v3458 = vld [vmem:[%s16 + $0x48] sm:$0xff]
  %v3459 = vld [vmem:[%s16 + $0x50] sm:$0xff]
  %v3460 = vld [vmem:[%s16 + $0x58] sm:$0xff]
  %v3461 = vld [vmem:[%s16 + $0x60] sm:$0xff]
  %v3462 = vld [vmem:[%s16 + $0x68] sm:$0xff]
  %v3463 = vld [vmem:[%s16 + $0x70] sm:$0xff]
  %v3464 = vld [vmem:[%s16 + $0x78] sm:$0xff]
  %3465 = vmatprep.subr.mxu0 0.0
  %3466 = vmatpush1.msra.mxu0 %v3449
  %3467 = vmatprep.subr.mxu0 0.0
  %3468 = vmatpush1.msra.mxu0 %v3450
  %3469 = vmatprep.subr.mxu0 0.0
  %3470 = vmatpush1.msra.mxu0 %v3451
  %3471 = vmatprep.subr.mxu0 0.0
  %3472 = vmatpush1.msra.mxu0 %v3452
  %3473 = vmatprep.subr.mxu0 0.0
  %3474 = vmatpush1.msra.mxu0 %v3453
  %3475 = vmatprep.subr.mxu0 0.0
  %3476 = vmatpush1.msra.mxu0 %v3454
  %3477 = vmatprep.subr.mxu0 0.0
  %3478 = vmatpush1.msra.mxu0 %v3455
  %3479 = vmatprep.subr.mxu0 0.0
  %3480 = vmatpush1.msra.mxu0 %v3456
  %3481 = vmatprep.subr.mxu0 0.0
  %3482 = vmatpush1.msra.mxu0 %v3457
  %3483 = vmatprep.subr.mxu0 0.0
  %3484 = vmatpush1.msra.mxu0 %v3458
  %3485 = vmatprep.subr.mxu0 0.0
  %3486 = vmatpush1.msra.mxu0 %v3459
  %3487 = vmatprep.subr.mxu0 0.0
  %3488 = vmatpush1.msra.mxu0 %v3460
  %3489 = vmatprep.subr.mxu0 0.0
  %3490 = vmatpush1.msra.mxu0 %v3461
  %3491 = vmatprep.subr.mxu0 0.0
  %3492 = vmatpush1.msra.mxu0 %v3462
  %3493 = vmatprep.subr.mxu0 0.0
  %3494 = vmatpush1.msra.mxu0 %v3463
  %3495 = vmatprep.subr.mxu0 0.0
  %3496 = vmatpush1.msra.mxu0 %v3464
  %3497 = vmatprep.subr.mxu0 0.0
  %3498 = vmatpush1.msra.mxu0 0.0
  %3499 = vmatprep.subr.mxu0 0.0
  %3500 = vmatpush1.msra.mxu0 0.0
  %3501 = vmatprep.subr.mxu0 0.0
  %3502 = vmatpush1.msra.mxu0 0.0
  %3503 = vmatprep.subr.mxu0 0.0
  %3504 = vmatpush1.msra.mxu0 0.0
  %3505 = vmatprep.subr.mxu0 0.0
  %3506 = vmatpush1.msra.mxu0 0.0
  %3507 = vmatprep.subr.mxu0 0.0
  %3508 = vmatpush1.msra.mxu0 0.0
  %3509 = vmatprep.subr.mxu0 0.0
  %3510 = vmatpush1.msra.mxu0 0.0
  %3511 = vmatprep.subr.mxu0 0.0
  %3512 = vmatpush1.msra.mxu0 0.0
  %3513 = vmatprep.subr.mxu0 0.0
  %3514 = vmatpush1.msra.mxu0 0.0
  %3515 = vmatprep.subr.mxu0 0.0
  %3516 = vmatpush1.msra.mxu0 0.0
  %3517 = vmatprep.subr.mxu0 0.0
  %3518 = vmatpush1.msra.mxu0 0.0
  %3519 = vmatprep.subr.mxu0 0.0
  %3520 = vmatpush1.msra.mxu0 0.0
  %3521 = vmatprep.subr.mxu0 0.0
  %3522 = vmatpush1.msra.mxu0 0.0
  %3523 = vmatprep.subr.mxu0 0.0
  %3524 = vmatpush1.msra.mxu0 0.0
  %3525 = vmatprep.subr.mxu0 0.0
  %3526 = vmatpush1.msra.mxu0 0.0
  %3527 = vmatprep.subr.mxu0 0.0
  %3528 = vmatpush1.msra.mxu0 0.0
  %3529 = vmatprep.mubr.f32.mxu0 0.0
  %3530 = vmatmul.mubr.f32.gmra.mrb[0].mxu0 %v3433
  %v3531 = vpop.f32.mrb[0].mxu0
  %v3532 = vadd.f32 0.0, %v3531
  %v3533 = vpop.f32.mrb[0].mxu0
  %3534 = vmatprep.mubr.f32.mxu0 0.0
  %3535 = vmatmul.mubr.f32.gmra.mrb[0].mxu0 %v3434
  %v3536 = vpop.f32.mrb[0].mxu0
  %v3537 = vadd.f32 0.0, %v3536
  %v3538 = vpop.f32.mrb[0].mxu0
  %3539 = vmatprep.mubr.f32.mxu0 0.0
  %3540 = vmatmul.mubr.f32.gmra.mrb[0].mxu0 %v3435
  %v3541 = vpop.f32.mrb[0].mxu0
  %v3542 = vadd.f32 0.0, %v3541
  %v3543 = vpop.f32.mrb[0].mxu0
  %3544 = vmatprep.mubr.f32.mxu0 0.0
  %3545 = vmatmul.mubr.f32.gmra.mrb[0].mxu0 %v3436
  %v3546 = vpop.f32.mrb[0].mxu0
  %v3547 = vadd.f32 0.0, %v3546
  %v3548 = vpop.f32.mrb[0].mxu0
  %3549 = vmatprep.mubr.f32.mxu0 0.0
  %3550 = vmatmul.mubr.f32.gmra.mrb[0].mxu0 %v3437
  %v3551 = vpop.f32.mrb[0].mxu0
  %v3552 = vadd.f32 0.0, %v3551
  %v3553 = vpop.f32.mrb[0].mxu0
  %3554 = vmatprep.mubr.f32.mxu0 0.0
  %3555 = vmatmul.mubr.f32.gmra.mrb[0].mxu0 %v3438
  %v3556 = vpop.f32.mrb[0].mxu0
  %v3557 = vadd.f32 0.0, %v3556
  %v3558 = vpop.f32.mrb[0].mxu0
  %3559 = vmatprep.mubr.f32.mxu0 0.0
  %3560 = vmatmul.mubr.f32.gmra.mrb[0].mxu0 %v3439
  %v3561 = vpop.f32.mrb[0].mxu0
  %v3562 = vadd.f32 0.0, %v3561
  %v3563 = vpop.f32.mrb[0].mxu0
  %3564 = vmatprep.mubr.f32.mxu0 0.0
  %3565 = vmatmul.mubr.f32.gmra.mrb[0].mxu0 %v3440
  %v3566 = vpop.f32.mrb[0].mxu0
  %v3567 = vadd.f32 0.0, %v3566
  %v3568 = vpop.f32.mrb[0].mxu0
  %3569 = vmatprep.mubr.f32.mxu0 0.0
  %3570 = vmatmul.mubr.f32.gmra.mrb[0].mxu0 %v3441
  %v3571 = vpop.f32.mrb[0].mxu0
  %v3572 = vadd.f32 0.0, %v3571
  %v3573 = vpop.f32.mrb[0].mxu0
  %3574 = vmatprep.mubr.f32.mxu0 0.0
  %3575 = vmatmul.mubr.f32.gmra.mrb[0].mxu0 %v3442
  %v3576 = vpop.f32.mrb[0].mxu0
  %v3577 = vadd.f32 0.0, %v3576
  %v3578 = vpop.f32.mrb[0].mxu0
  %3579 = vmatprep.mubr.f32.mxu0 0.0
  %3580 = vmatmul.mubr.f32.gmra.mrb[0].mxu0 %v3443
  %v3581 = vpop.f32.mrb[0].mxu0
  %v3582 = vadd.f32 0.0, %v3581
  %v3583 = vpop.f32.mrb[0].mxu0
  %3584 = vmatprep.mubr.f32.mxu0 0.0
  %3585 = vmatmul.mubr.f32.gmra.mrb[0].mxu0 %v3444
  %v3586 = vpop.f32.mrb[0].mxu0
  %v3587 = vadd.f32 0.0, %v3586
  %v3588 = vpop.f32.mrb[0].mxu0
  %3589 = vmatprep.mubr.f32.mxu0 0.0
  %3590 = vmatmul.mubr.f32.gmra.mrb[0].mxu0 %v3445
  %v3591 = vpop.f32.mrb[0].mxu0
  %v3592 = vadd.f32 0.0, %v3591
  %v3593 = vpop.f32.mrb[0].mxu0
  %3594 = vmatprep.mubr.f32.mxu0 0.0
  %3595 = vmatmul.mubr.f32.gmra.mrb[0].mxu0 %v3446
  %v3596 = vpop.f32.mrb[0].mxu0
  %v3597 = vadd.f32 0.0, %v3596
  %v3598 = vpop.f32.mrb[0].mxu0
  %3599 = vmatprep.mubr.f32.mxu0 0.0
  %3600 = vmatmul.mubr.f32.gmra.mrb[0].mxu0 %v3447
  %v3601 = vpop.f32.mrb[0].mxu0
  %v3602 = vadd.f32 0.0, %v3601
  %v3603 = vpop.f32.mrb[0].mxu0
  %3604 = vmatprep.mubr.f32.mxu0 0.0
  %3605 = vmatmul.mubr.f32.gmra.mrb[0].mxu0 %v3448
  %v3606 = vpop.f32.mrb[0].mxu0
  %v3607 = vadd.f32 0.0, %v3606
  %v3608 = vpop.f32.mrb[0].mxu0
  %3609 = vdwg.mxu0
  %v3610 = vld [vmem:[%s21] sm:$0xff]
  %v3611 = vld [vmem:[%s21 + $0x8] sm:$0xff]
  %v3612 = vld [vmem:[%s21 + $0x10] sm:$0xff]
  %v3613 = vld [vmem:[%s21 + $0x18] sm:$0xff]
  %v3614 = vld [vmem:[%s21 + $0x20] sm:$0xff]
  %v3615 = vld [vmem:[%s21 + $0x28] sm:$0xff]
  %v3616 = vld [vmem:[%s21 + $0x30] sm:$0xff]
  %v3617 = vld [vmem:[%s21 + $0x38] sm:$0xff]
  %v3618 = vld [vmem:[%s21 + $0x40] sm:$0xff]
  %v3619 = vld [vmem:[%s21 + $0x48] sm:$0xff]
  %v3620 = vld [vmem:[%s21 + $0x50] sm:$0xff]
  %v3621 = vld [vmem:[%s21 + $0x58] sm:$0xff]
  %v3622 = vld [vmem:[%s21 + $0x60] sm:$0xff]
  %v3623 = vld [vmem:[%s21 + $0x68] sm:$0xff]
  %v3624 = vld [vmem:[%s21 + $0x70] sm:$0xff]
  %v3625 = vld [vmem:[%s21 + $0x78] sm:$0xff]
  %v3626 = vld [vmem:[%s21 + $0x80] sm:$0xff]
  %v3627 = vld [vmem:[%s21 + $0x88] sm:$0xff]
  %v3628 = vld [vmem:[%s21 + $0x90] sm:$0xff]
  %v3629 = vld [vmem:[%s21 + $0x98] sm:$0xff]
  %v3630 = vld [vmem:[%s21 + $0xa0] sm:$0xff]
  %v3631 = vld [vmem:[%s21 + $0xa8] sm:$0xff]
  %v3632 = vld [vmem:[%s21 + $0xb0] sm:$0xff]
  %v3633 = vld [vmem:[%s21 + $0xb8] sm:$0xff]
  %v3634 = vld [vmem:[%s22] sm:$0xff]
  %v3635 = vld [vmem:[%s22 + $0x8] sm:$0xff]
  %v3636 = vld [vmem:[%s22 + $0x10] sm:$0xff]
  %v3637 = vld [vmem:[%s22 + $0x18] sm:$0xff]
  %v3638 = vld [vmem:[%s22 + $0x20] sm:$0xff]
  %v3639 = vld [vmem:[%s22 + $0x28] sm:$0xff]
  %v3640 = vld [vmem:[%s22 + $0x30] sm:$0xff]
  %v3641 = vld [vmem:[%s22 + $0x38] sm:$0xff]
  %3643 = vset.pattern.permute.xlu0 0
  %3644 = vperm.xlu0 %3643, %v3634
  %v3645 = vpop.permute.xlu0 %3644
  %3648 = vset.pattern.permute.xlu0 0
  %3649 = vperm.xlu0 %3648, %v3635
  %v3650 = vpop.permute.xlu0 %3649
  %3653 = vset.pattern.permute.xlu0 0
  %3654 = vperm.xlu0 %3653, %v3636
  %v3655 = vpop.permute.xlu0 %3654
  %3658 = vset.pattern.permute.xlu0 0
  %3659 = vperm.xlu0 %3658, %v3637
  %v3660 = vpop.permute.xlu0 %3659
  %3663 = vset.pattern.permute.xlu0 0
  %3664 = vperm.xlu0 %3663, %v3638
  %v3665 = vpop.permute.xlu0 %3664
  %3668 = vset.pattern.permute.xlu0 0
  %3669 = vperm.xlu0 %3668, %v3639
  %v3670 = vpop.permute.xlu0 %3669
  %3673 = vset.pattern.permute.xlu0 0
  %3674 = vperm.xlu0 %3673, %v3640
  %v3675 = vpop.permute.xlu0 %3674
  %3678 = vset.pattern.permute.xlu0 0
  %3679 = vperm.xlu0 %3678, %v3641
  %v3680 = vpop.permute.xlu0 %3679
  %3682 = vmatprep.subr.mxu0 0.0
  %3683 = vmatpush1.msra.mxu0 %v3532
  %3684 = vmatprep.subr.mxu0 0.0
  %3685 = vmatpush1.msra.mxu0 %v3537
  %3686 = vmatprep.subr.mxu0 0.0
  %3687 = vmatpush1.msra.mxu0 %v3542
  %3688 = vmatprep.subr.mxu0 0.0
  %3689 = vmatpush1.msra.mxu0 %v3547
  %3690 = vmatprep.subr.mxu0 0.0
  %3691 = vmatpush1.msra.mxu0 %v3552
  %3692 = vmatprep.subr.mxu0 0.0
  %3693 = vmatpush1.msra.mxu0 %v3557
  %3694 = vmatprep.subr.mxu0 0.0
  %3695 = vmatpush1.msra.mxu0 %v3562
  %3696 = vmatprep.subr.mxu0 0.0
  %3697 = vmatpush1.msra.mxu0 %v3567
  %3698 = vmatprep.subr.mxu0 0.0
  %3699 = vmatpush1.msra.mxu0 %v3572
  %3700 = vmatprep.subr.mxu0 0.0
  %3701 = vmatpush1.msra.mxu0 %v3577
  %3702 = vmatprep.subr.mxu0 0.0
  %3703 = vmatpush1.msra.mxu0 %v3582
  %3704 = vmatprep.subr.mxu0 0.0
  %3705 = vmatpush1.msra.mxu0 %v3587
  %3706 = vmatprep.subr.mxu0 0.0
  %3707 = vmatpush1.msra.mxu0 %v3592
  %3708 = vmatprep.subr.mxu0 0.0
  %3709 = vmatpush1.msra.mxu0 %v3597
  %3710 = vmatprep.subr.mxu0 0.0
  %3711 = vmatpush1.msra.mxu0 %v3602
  %3712 = vmatprep.subr.mxu0 0.0
  %3713 = vmatpush1.msra.mxu0 %v3607
  %3714 = vmatprep.subr.mxu0 0.0
  %3715 = vmatpush1.msra.mxu0 %v2756
  %3716 = vmatprep.subr.mxu0 0.0
  %3717 = vmatpush1.msra.mxu0 %v2757
  %3718 = vmatprep.subr.mxu0 0.0
  %3719 = vmatpush1.msra.mxu0 %v2758
  %3720 = vmatprep.subr.mxu0 0.0
  %3721 = vmatpush1.msra.mxu0 %v2759
  %3722 = vmatprep.subr.mxu0 0.0
  %3723 = vmatpush1.msra.mxu0 %v2760
  %3724 = vmatprep.subr.mxu0 0.0
  %3725 = vmatpush1.msra.mxu0 %v2761
  %3726 = vmatprep.subr.mxu0 0.0
  %3727 = vmatpush1.msra.mxu0 %v2762
  %3728 = vmatprep.subr.mxu0 0.0
  %3729 = vmatpush1.msra.mxu0 %v2763
  %3730 = vmatprep.subr.mxu0 0.0
  %3731 = vmatpush1.msra.mxu0 %v2764
  %3732 = vmatprep.subr.mxu0 0.0
  %3733 = vmatpush1.msra.mxu0 %v2765
  %3734 = vmatprep.subr.mxu0 0.0
  %3735 = vmatpush1.msra.mxu0 %v2766
  %3736 = vmatprep.subr.mxu0 0.0
  %3737 = vmatpush1.msra.mxu0 %v2767
  %3738 = vmatprep.subr.mxu0 0.0
  %3739 = vmatpush1.msra.mxu0 %v2768
  %3740 = vmatprep.subr.mxu0 0.0
  %3741 = vmatpush1.msra.mxu0 %v2769
  %3742 = vmatprep.subr.mxu0 0.0
  %3743 = vmatpush1.msra.mxu0 %v2770
  %3744 = vmatprep.subr.mxu0 0.0
  %3745 = vmatpush1.msra.mxu0 %v2771
  %3746 = vmatprep.mubr.f32.mxu0 %v3611
  %3747 = vmatmul.mubr.f32.gmra.mrb[0].mxu0 %v3610
  %v3748 = vpop.f32.mrb[0].mxu0
  %v3749 = vadd.f32 %v3645, %v3748
  %v3750 = vpop.f32.mrb[0].mxu0
  %3751 = vmatprep.mubr.f32.mxu0 %v3614
  %3752 = vmatmul.mubr.f32.gmra.mrb[0].mxu0 %v3613
  %v3753 = vpop.f32.mrb[0].mxu0
  %v3754 = vadd.f32 %v3650, %v3753
  %v3755 = vpop.f32.mrb[0].mxu0
  %3756 = vmatprep.mubr.f32.mxu0 %v3617
  %3757 = vmatmul.mubr.f32.gmra.mrb[0].mxu0 %v3616
  %v3758 = vpop.f32.mrb[0].mxu0
  %v3759 = vadd.f32 %v3655, %v3758
  %v3760 = vpop.f32.mrb[0].mxu0
  %3761 = vmatprep.mubr.f32.mxu0 %v3620
  %3762 = vmatmul.mubr.f32.gmra.mrb[0].mxu0 %v3619
  %v3763 = vpop.f32.mrb[0].mxu0
  %v3764 = vadd.f32 %v3660, %v3763
  %v3765 = vpop.f32.mrb[0].mxu0
  %3766 = vmatprep.mubr.f32.mxu0 %v3623
  %3767 = vmatmul.mubr.f32.gmra.mrb[0].mxu0 %v3622
  %v3768 = vpop.f32.mrb[0].mxu0
  %v3769 = vadd.f32 %v3665, %v3768
  %v3770 = vpop.f32.mrb[0].mxu0
  %3771 = vmatprep.mubr.f32.mxu0 %v3626
  %3772 = vmatmul.mubr.f32.gmra.mrb[0].mxu0 %v3625
  %v3773 = vpop.f32.mrb[0].mxu0
  %v3774 = vadd.f32 %v3670, %v3773
  %v3775 = vpop.f32.mrb[0].mxu0
  %3776 = vmatprep.mubr.f32.mxu0 %v3629
  %3777 = vmatmul.mubr.f32.gmra.mrb[0].mxu0 %v3628
  %v3778 = vpop.f32.mrb[0].mxu0
  %v3779 = vadd.f32 %v3675, %v3778
  %v3780 = vpop.f32.mrb[0].mxu0
  %3781 = vmatprep.mubr.f32.mxu0 %v3632
  %3782 = vmatmul.mubr.f32.gmra.mrb[0].mxu0 %v3631
  %v3783 = vpop.f32.mrb[0].mxu0
  %v3784 = vadd.f32 %v3680, %v3783
  %v3785 = vpop.f32.mrb[0].mxu0
  %3786 = vdwg.mxu0
  %3787 = vmatprep.subr.mxu0 0.0
  %3788 = vmatpush1.msra.mxu0 %v3084
  %3789 = vmatprep.subr.mxu0 0.0
  %3790 = vmatpush1.msra.mxu0 %v3089
  %3791 = vmatprep.subr.mxu0 0.0
  %3792 = vmatpush1.msra.mxu0 %v3094
  %3793 = vmatprep.subr.mxu0 0.0
  %3794 = vmatpush1.msra.mxu0 %v3099
  %3795 = vmatprep.subr.mxu0 0.0
  %3796 = vmatpush1.msra.mxu0 %v3104
  %3797 = vmatprep.subr.mxu0 0.0
  %3798 = vmatpush1.msra.mxu0 %v3109
  %3799 = vmatprep.subr.mxu0 0.0
  %3800 = vmatpush1.msra.mxu0 %v3114
  %3801 = vmatprep.subr.mxu0 0.0
  %3802 = vmatpush1.msra.mxu0 %v3119
  %3803 = vmatprep.subr.mxu0 0.0
  %3804 = vmatpush1.msra.mxu0 %v3124
  %3805 = vmatprep.subr.mxu0 0.0
  %3806 = vmatpush1.msra.mxu0 %v3129
  %3807 = vmatprep.subr.mxu0 0.0
  %3808 = vmatpush1.msra.mxu0 %v3134
  %3809 = vmatprep.subr.mxu0 0.0
  %3810 = vmatpush1.msra.mxu0 %v3139
  %3811 = vmatprep.subr.mxu0 0.0
  %3812 = vmatpush1.msra.mxu0 %v3144
  %3813 = vmatprep.subr.mxu0 0.0
  %3814 = vmatpush1.msra.mxu0 %v3149
  %3815 = vmatprep.subr.mxu0 0.0
  %3816 = vmatpush1.msra.mxu0 %v3154
  %3817 = vmatprep.subr.mxu0 0.0
  %3818 = vmatpush1.msra.mxu0 %v3159
  %3819 = vmatprep.subr.mxu0 0.0
  %3820 = vmatpush1.msra.mxu0 0.0
  %3821 = vmatprep.subr.mxu0 0.0
  %3822 = vmatpush1.msra.mxu0 0.0
  %3823 = vmatprep.subr.mxu0 0.0
  %3824 = vmatpush1.msra.mxu0 0.0
  %3825 = vmatprep.subr.mxu0 0.0
  %3826 = vmatpush1.msra.mxu0 0.0
  %3827 = vmatprep.subr.mxu0 0.0
  %3828 = vmatpush1.msra.mxu0 0.0
  %3829 = vmatprep.subr.mxu0 0.0
  %3830 = vmatpush1.msra.mxu0 0.0
  %3831 = vmatprep.subr.mxu0 0.0
  %3832 = vmatpush1.msra.mxu0 0.0
  %3833 = vmatprep.subr.mxu0 0.0
  %3834 = vmatpush1.msra.mxu0 0.0
  %3835 = vmatprep.subr.mxu0 0.0
  %3836 = vmatpush1.msra.mxu0 0.0
  %3837 = vmatprep.subr.mxu0 0.0
  %3838 = vmatpush1.msra.mxu0 0.0
  %3839 = vmatprep.subr.mxu0 0.0
  %3840 = vmatpush1.msra.mxu0 0.0
  %3841 = vmatprep.subr.mxu0 0.0
  %3842 = vmatpush1.msra.mxu0 0.0
  %3843 = vmatprep.subr.mxu0 0.0
  %3844 = vmatpush1.msra.mxu0 0.0
  %3845 = vmatprep.subr.mxu0 0.0
  %3846 = vmatpush1.msra.mxu0 0.0
  %3847 = vmatprep.subr.mxu0 0.0
  %3848 = vmatpush1.msra.mxu0 0.0
  %3849 = vmatprep.subr.mxu0 0.0
  %3850 = vmatpush1.msra.mxu0 0.0
  %3851 = vmatprep.mubr.f32.mxu0 0.0
  %3852 = vmatmul.mubr.f32.gmra.mrb[0].mxu0 %v3612
  %v3853 = vpop.f32.mrb[0].mxu0
  %v3854 = vadd.f32 %v3749, %v3853
  %v3855 = vpop.f32.mrb[0].mxu0
  %3856 = vmatprep.mubr.f32.mxu0 0.0
  %3857 = vmatmul.mubr.f32.gmra.mrb[0].mxu0 %v3615
  %v3858 = vpop.f32.mrb[0].mxu0
  %v3859 = vadd.f32 %v3754, %v3858
  %v3860 = vpop.f32.mrb[0].mxu0
  %3861 = vmatprep.mubr.f32.mxu0 0.0
  %3862 = vmatmul.mubr.f32.gmra.mrb[0].mxu0 %v3618
  %v3863 = vpop.f32.mrb[0].mxu0
  %v3864 = vadd.f32 %v3759, %v3863
  %v3865 = vpop.f32.mrb[0].mxu0
  %3866 = vmatprep.mubr.f32.mxu0 0.0
  %3867 = vmatmul.mubr.f32.gmra.mrb[0].mxu0 %v3621
  %v3868 = vpop.f32.mrb[0].mxu0
  %v3869 = vadd.f32 %v3764, %v3868
  %v3870 = vpop.f32.mrb[0].mxu0
  %3871 = vmatprep.mubr.f32.mxu0 0.0
  %3872 = vmatmul.mubr.f32.gmra.mrb[0].mxu0 %v3624
  %v3873 = vpop.f32.mrb[0].mxu0
  %v3874 = vadd.f32 %v3769, %v3873
  %v3875 = vpop.f32.mrb[0].mxu0
  %3876 = vmatprep.mubr.f32.mxu0 0.0
  %3877 = vmatmul.mubr.f32.gmra.mrb[0].mxu0 %v3627
  %v3878 = vpop.f32.mrb[0].mxu0
  %v3879 = vadd.f32 %v3774, %v3878
  %v3880 = vpop.f32.mrb[0].mxu0
  %3881 = vmatprep.mubr.f32.mxu0 0.0
  %3882 = vmatmul.mubr.f32.gmra.mrb[0].mxu0 %v3630
  %v3883 = vpop.f32.mrb[0].mxu0
  %v3884 = vadd.f32 %v3779, %v3883
  %v3885 = vpop.f32.mrb[0].mxu0
  %3886 = vmatprep.mubr.f32.mxu0 0.0
  %3887 = vmatmul.mubr.f32.gmra.mrb[0].mxu0 %v3633
  %v3888 = vpop.f32.mrb[0].mxu0
  %v3889 = vadd.f32 %v3784, %v3888
  %v3890 = vpop.f32.mrb[0].mxu0
  %3891 = vdwg.mxu0
  %v3892 = vmax.f32 %v3854, 0.0
  %v3893 = vmax.f32 %v3859, 0.0
  %v3894 = vmax.f32 %v3864, 0.0
  %v3895 = vmax.f32 %v3869, 0.0
  %v3896 = vmax.f32 %v3874, 0.0
  %v3897 = vmax.f32 %v3879, 0.0
  %v3898 = vmax.f32 %v3884, 0.0
  %v3899 = vmax.f32 %v3889, 0.0
  %v3900 = vld [vmem:[%s23] sm:$0xff]
  %v3901 = vld [vmem:[%s23 + $0x8] sm:$0xff]
  %v3902 = vld [vmem:[%s23 + $0x10] sm:$0xff]
  %v3903 = vld [vmem:[%s23 + $0x18] sm:$0xff]
  %v3904 = vld [vmem:[%s24] sm:$0xff]
  %v3905 = vld [vmem:[%s24 + $0x8] sm:$0xff]
  %v3906 = vld [vmem:[%s24 + $0x10] sm:$0xff]
  %v3907 = vld [vmem:[%s24 + $0x18] sm:$0xff]
  %3909 = vset.pattern.permute.xlu0 0
  %3910 = vperm.xlu0 %3909, %v3904
  %v3911 = vpop.permute.xlu0 %3910
  %3914 = vset.pattern.permute.xlu0 0
  %3915 = vperm.xlu0 %3914, %v3905
  %v3916 = vpop.permute.xlu0 %3915
  %3919 = vset.pattern.permute.xlu0 0
  %3920 = vperm.xlu0 %3919, %v3906
  %v3921 = vpop.permute.xlu0 %3920
  %3924 = vset.pattern.permute.xlu0 0
  %3925 = vperm.xlu0 %3924, %v3907
  %v3926 = vpop.permute.xlu0 %3925
  %v3929 = vsel %vm575, %v3900, 0
  %v3932 = vsel %vm575, %v3901, 0
  %v3935 = vsel %vm575, %v3902, 0
  %v3938 = vsel %vm575, %v3903, 0
  %3940 = vmatprep.subr.mxu0 0.0
  %3941 = vmatpush1.msra.mxu0 %v3892
  %3942 = vmatprep.subr.mxu0 0.0
  %3943 = vmatpush1.msra.mxu0 %v3893
  %3944 = vmatprep.subr.mxu0 0.0
  %3945 = vmatpush1.msra.mxu0 %v3894
  %3946 = vmatprep.subr.mxu0 0.0
  %3947 = vmatpush1.msra.mxu0 %v3895
  %3948 = vmatprep.subr.mxu0 0.0
  %3949 = vmatpush1.msra.mxu0 %v3896
  %3950 = vmatprep.subr.mxu0 0.0
  %3951 = vmatpush1.msra.mxu0 %v3897
  %3952 = vmatprep.subr.mxu0 0.0
  %3953 = vmatpush1.msra.mxu0 %v3898
  %3954 = vmatprep.subr.mxu0 0.0
  %3955 = vmatpush1.msra.mxu0 %v3899
  %3956 = vmatprep.subr.mxu0 0.0
  %3957 = vmatpush1.msra.mxu0 0.0
  %3958 = vmatprep.subr.mxu0 0.0
  %3959 = vmatpush1.msra.mxu0 0.0
  %3960 = vmatprep.subr.mxu0 0.0
  %3961 = vmatpush1.msra.mxu0 0.0
  %3962 = vmatprep.subr.mxu0 0.0
  %3963 = vmatpush1.msra.mxu0 0.0
  %3964 = vmatprep.subr.mxu0 0.0
  %3965 = vmatpush1.msra.mxu0 0.0
  %3966 = vmatprep.subr.mxu0 0.0
  %3967 = vmatpush1.msra.mxu0 0.0
  %3968 = vmatprep.subr.mxu0 0.0
  %3969 = vmatpush1.msra.mxu0 0.0
  %3970 = vmatprep.subr.mxu0 0.0
  %3971 = vmatpush1.msra.mxu0 0.0
  %3972 = vmatprep.subr.mxu0 0.0
  %3973 = vmatpush1.msra.mxu0 0.0
  %3974 = vmatprep.subr.mxu0 0.0
  %3975 = vmatpush1.msra.mxu0 0.0
  %3976 = vmatprep.subr.mxu0 0.0
  %3977 = vmatpush1.msra.mxu0 0.0
  %3978 = vmatprep.subr.mxu0 0.0
  %3979 = vmatpush1.msra.mxu0 0.0
  %3980 = vmatprep.subr.mxu0 0.0
  %3981 = vmatpush1.msra.mxu0 0.0
  %3982 = vmatprep.subr.mxu0 0.0
  %3983 = vmatpush1.msra.mxu0 0.0
  %3984 = vmatprep.subr.mxu0 0.0
  %3985 = vmatpush1.msra.mxu0 0.0
  %3986 = vmatprep.subr.mxu0 0.0
  %3987 = vmatpush1.msra.mxu0 0.0
  %3988 = vmatprep.subr.mxu0 0.0
  %3989 = vmatpush1.msra.mxu0 0.0
  %3990 = vmatprep.subr.mxu0 0.0
  %3991 = vmatpush1.msra.mxu0 0.0
  %3992 = vmatprep.subr.mxu0 0.0
  %3993 = vmatpush1.msra.mxu0 0.0
  %3994 = vmatprep.subr.mxu0 0.0
  %3995 = vmatpush1.msra.mxu0 0.0
  %3996 = vmatprep.subr.mxu0 0.0
  %3997 = vmatpush1.msra.mxu0 0.0
  %3998 = vmatprep.subr.mxu0 0.0
  %3999 = vmatpush1.msra.mxu0 0.0
  %4000 = vmatprep.subr.mxu0 0.0
  %4001 = vmatpush1.msra.mxu0 0.0
  %4002 = vmatprep.subr.mxu0 0.0
  %4003 = vmatpush1.msra.mxu0 0.0
  %4004 = vmatprep.mubr.f32.mxu0 0.0
  %4005 = vmatmul.mubr.f32.gmra.mrb[0].mxu0 %v3929
  %v4006 = vpop.f32.mrb[0].mxu0
  %v4007 = vadd.f32 %v3911, %v4006
  %v4008 = vpop.f32.mrb[0].mxu0
  %4009 = vmatprep.mubr.f32.mxu0 0.0
  %4010 = vmatmul.mubr.f32.gmra.mrb[0].mxu0 %v3932
  %v4011 = vpop.f32.mrb[0].mxu0
  %v4012 = vadd.f32 %v3916, %v4011
  %v4013 = vpop.f32.mrb[0].mxu0
  %4014 = vmatprep.mubr.f32.mxu0 0.0
  %4015 = vmatmul.mubr.f32.gmra.mrb[0].mxu0 %v3935
  %v4016 = vpop.f32.mrb[0].mxu0
  %v4017 = vadd.f32 %v3921, %v4016
  %v4018 = vpop.f32.mrb[0].mxu0
  %4019 = vmatprep.mubr.f32.mxu0 0.0
  %4020 = vmatmul.mubr.f32.gmra.mrb[0].mxu0 %v3938
  %v4021 = vpop.f32.mrb[0].mxu0
  %v4022 = vadd.f32 %v3926, %v4021
  %v4023 = vpop.f32.mrb[0].mxu0
  %4024 = vdwg.mxu0
  %v4025 = vmax.f32 %v4007, 0.0
  %v4026 = vmax.f32 %v4012, 0.0
  %v4027 = vmax.f32 %v4017, 0.0
  %v4028 = vmax.f32 %v4022, 0.0
  %v4029 = vld [vmem:[%s25] sm:$0x1]
  %v4030 = vld [vmem:[#allocation6] sm:$0x1]
  %4032 = vset.pattern.permute.xlu0 0
  %4033 = vperm.xlu0 %4032, %v4030
  %v4034 = vpop.permute.xlu0 %4033
  %v4036 = vlaneseq
  %v4037 = vshrl.u32 %v4036, 7
  %v4038 = vsub.s32 0, %v4037
  %v4039 = vrot.slane %v4034, %v4038
  %v4041 = vsel %vm799, %v4029, 0
  %4043 = vmatprep.subr.mxu0 0.0
  %4044 = vmatpush1.msra.mxu0 %v4025
  %4045 = vmatprep.subr.mxu0 0.0
  %4046 = vmatpush1.msra.mxu0 %v4026
  %4047 = vmatprep.subr.mxu0 0.0
  %4048 = vmatpush1.msra.mxu0 %v4027
  %4049 = vmatprep.subr.mxu0 0.0
  %4050 = vmatpush1.msra.mxu0 %v4028
  %4051 = vmatprep.subr.mxu0 0.0
  %4052 = vmatpush1.msra.mxu0 0.0
  %4053 = vmatprep.subr.mxu0 0.0
  %4054 = vmatpush1.msra.mxu0 0.0
  %4055 = vmatprep.subr.mxu0 0.0
  %4056 = vmatpush1.msra.mxu0 0.0
  %4057 = vmatprep.subr.mxu0 0.0
  %4058 = vmatpush1.msra.mxu0 0.0
  %4059 = vmatprep.subr.mxu0 0.0
  %4060 = vmatpush1.msra.mxu0 0.0
  %4061 = vmatprep.subr.mxu0 0.0
  %4062 = vmatpush1.msra.mxu0 0.0
  %4063 = vmatprep.subr.mxu0 0.0
  %4064 = vmatpush1.msra.mxu0 0.0
  %4065 = vmatprep.subr.mxu0 0.0
  %4066 = vmatpush1.msra.mxu0 0.0
  %4067 = vmatprep.subr.mxu0 0.0
  %4068 = vmatpush1.msra.mxu0 0.0
  %4069 = vmatprep.subr.mxu0 0.0
  %4070 = vmatpush1.msra.mxu0 0.0
  %4071 = vmatprep.subr.mxu0 0.0
  %4072 = vmatpush1.msra.mxu0 0.0
  %4073 = vmatprep.subr.mxu0 0.0
  %4074 = vmatpush1.msra.mxu0 0.0
  %4075 = vmatprep.subr.mxu0 0.0
  %4076 = vmatpush1.msra.mxu0 0.0
  %4077 = vmatprep.subr.mxu0 0.0
  %4078 = vmatpush1.msra.mxu0 0.0
  %4079 = vmatprep.subr.mxu0 0.0
  %4080 = vmatpush1.msra.mxu0 0.0
  %4081 = vmatprep.subr.mxu0 0.0
  %4082 = vmatpush1.msra.mxu0 0.0
  %4083 = vmatprep.subr.mxu0 0.0
  %4084 = vmatpush1.msra.mxu0 0.0
  %4085 = vmatprep.subr.mxu0 0.0
  %4086 = vmatpush1.msra.mxu0 0.0
  %4087 = vmatprep.subr.mxu0 0.0
  %4088 = vmatpush1.msra.mxu0 0.0
  %4089 = vmatprep.subr.mxu0 0.0
  %4090 = vmatpush1.msra.mxu0 0.0
  %4091 = vmatprep.subr.mxu0 0.0
  %4092 = vmatpush1.msra.mxu0 0.0
  %4093 = vmatprep.subr.mxu0 0.0
  %4094 = vmatpush1.msra.mxu0 0.0
  %4095 = vmatprep.subr.mxu0 0.0
  %4096 = vmatpush1.msra.mxu0 0.0
  %4097 = vmatprep.subr.mxu0 0.0
  %4098 = vmatpush1.msra.mxu0 0.0
  %4099 = vmatprep.subr.mxu0 0.0
  %4100 = vmatpush1.msra.mxu0 0.0
  %4101 = vmatprep.subr.mxu0 0.0
  %4102 = vmatpush1.msra.mxu0 0.0
  %4103 = vmatprep.subr.mxu0 0.0
  %4104 = vmatpush1.msra.mxu0 0.0
  %4105 = vmatprep.subr.mxu0 0.0
  %4106 = vmatpush1.msra.mxu0 0.0
  %4107 = vmatprep.mubr.f32.mxu0 0.0
  %4108 = vmatmul.mubr.f32.gmra.mrb[0].mxu0 %v4041
  %v4109 = vpop.f32.mrb[0].mxu0
  %v4110 = vadd.f32 %v4039, %v4109
  %v4111 = vpop.f32.mrb[0].mxu0
  %4112 = vdwg.mxu0
  %v4113 = vxor.u32 %v4110, 2147483648
  %v4114 = vmul.f32 %v4113, 1.442695
  %v4115 = vpow.pop %v4114
  %v4116 = vadd.f32 %v4115, 1.0
  %v4117 = vrcp.pop %v4116
  %v4118 = vmul.f32 1.0, %v4117
  %vm4119 = vcmask 57344
  %4120 = vst.msk [vmem:[%s27] sm:$0x1] %vm4119, %v4118
  // Predicated region
  $region110: #{promoter_forward.1} parent=0 // pred_check
    _
  $region111: #{promoter_forward.1} parent=0 // pred_check_branch
    %4122 = sbr.rel (0) target = $region113
  $region112: #{promoter_forward.1} parent=0 // pred_region
    _
  $region113: #{promoter_forward.1} parent=0 // pred_fallthru
    _
  // Predicated region
  $region114: #{promoter_forward.1} parent=0 // pred_check
    _
  $region115: #{promoter_forward.1} parent=0 // pred_check_branch
    %4124 = sbr.rel (0) target = $region117
  $region116: #{promoter_forward.1} parent=0 // pred_region
    _
  $region117: #{promoter_forward.1} parent=0 // pred_fallthru
    _

</llo_original>
